<compile_context>
chip_gen: v6e
topology: v6e:2x2x1
jax: 0.10.0
libtpu: 0.0.40
codegen_flags: <defaults>
</compile_context>

<pallas_src>
import jax
import jax.numpy as jnp
import numpy as np
from jax.experimental import pallas as pl
from jax.experimental.pallas import tpu as pltpu

_BN_EPS = 1e-5
_LANE = 128  # channel padding quantum (lane width; also matches v5e MXU tiles)
# TODO(synk): on v6e/v7x with Cout >= 256, pad channels to 256-multiples to fill
# the 2x256^2 MXU (no-op for real ResNet widths, which already are).


def _round_up(x, m):
    return ((x + m - 1) // m) * m


def _vmem_limit_bytes():
    # Generation-aware scoped-VMEM limit: half of physical, capped at 96 MiB
    # (v5e/v6e: 64 MiB of 128 MiB physical; v7x: 32 MiB of 64 MiB physical).
    try:
        phys = int(pltpu.get_tpu_info().vmem_capacity_bytes)
    except Exception:
        phys = 64 * 1024 * 1024
    return int(max(32 * 1024 * 1024, min(phys // 2, 96 * 1024 * 1024)))


def _compiler_params():
    return pltpu.CompilerParams(
        dimension_semantics=("parallel",),  # batch grid -> v7x megacore split
        vmem_limit_bytes=_vmem_limit_bytes(),
    )


# --------------------------- wrapper-side helpers --------------------------- #

def _phase_planes_flat(xb, stride, Ho, Wo):
    """xb: (B, H, W, C) bf16 (channel padded).  Returns flattened, zero-padded
    phase planes (B*stride^2, PROWS, C) and per-tap (plane_index, flat_offset)
    so that every 3x3 tap of the stride-`stride` conv is a contiguous slice."""
    B, H, W, C = xb.shape
    k, pad = 3, 1
    WW = Wo + 2                      # wide output width
    Hpl = Ho + (k - 1) // stride     # rows of each phase plane actually needed
    xp = jnp.pad(xb, ((0, 0), (pad, pad), (pad, pad), (0, 0)))
    planes = []
    for p in range(stride):
        for q in range(stride):
            pq = xp[:, p::stride, q::stride, :]
            pq = pq[:, :min(pq.shape[1], Hpl + 1), :min(pq.shape[2], WW), :]
            pq = jnp.pad(pq, ((0, 0), (0, Hpl + 1 - pq.shape[1]),
                              (0, WW - pq.shape[2]), (0, 0)))
            planes.append(pq.reshape(B, (Hpl + 1) * WW, C))
    planes = jnp.stack(planes, axis=1).reshape(B * stride * stride,
                                               (Hpl + 1) * WW, C)
    taps = []
    for dh in range(k):
        for dw in range(k):
            pidx = (dh % stride) * stride + (dw % stride)
            taps.append((pidx, (dh // stride) * WW + (dw // stride)))
    return planes, taps


def _widen_flat(z, WW):
    """(B, Ho, Wo, C) -> (B, Ho*WW, C) wide row layout, junk columns zeroed."""
    B, Ho, Wz, C = z.shape
    z = jnp.pad(z, ((0, 0), (0, 0), (0, WW - Wz), (0, 0)))
    return z.reshape(B, Ho * WW, C)


def _bn_fold(ch_sum, ch_sumsq, count, gamma, beta, cp):
    """O(C) fold of batch stats into per-channel (scale, shift).
    Note: E[y^2]-E[y]^2 in f32; fine at these sizes (see review) but a Welford
    fold would be safer for very large batches."""
    mean = ch_sum / float(count)
    var = jnp.maximum(ch_sumsq / float(count) - mean * mean, 0.0)
    g = jnp.pad(gamma.astype(jnp.float32), (0, cp - gamma.shape[0]))
    b = jnp.pad(beta.astype(jnp.float32), (0, cp - beta.shape[0]))
    scale = g * jax.lax.rsqrt(var + _BN_EPS)
    shift = b - mean * scale
    return scale.reshape(1, cp), shift.reshape(1, cp)


# ------------------------------ pallas passes ------------------------------- #

def _conv1_stats(planes, w1, mask, taps, B, s2, Ho, Wo):
    """Pass A: direct 3x3 stride-s conv1 + per-image BN1 partial stats."""
    _, PROWS, Cinp = planes.shape
    Cp = w1.shape[-1]
    WW = Wo + 2
    NW = Ho * WW

    def kernel(xph_ref, w_ref, mask_ref, y_ref, st_ref):
        acc = jnp.zeros((NW, Cp), jnp.float32)
        for t, (pidx, off) in enumerate(taps):
            acc = acc + jnp.dot(xph_ref[pidx, pl.ds(off, NW), :], w_ref[t],
                                preferred_element_type=jnp.float32)
        acc = acc * mask_ref[...]            # zero junk columns (exact stats)
        y_ref[0] = acc.astype(y_ref.dtype)   # bf16 intermediate (halved HBM)
        st_ref[0] = jnp.concatenate(
            [jnp.sum(acc, axis=0, keepdims=True),
             jnp.sum(acc * acc, axis=0, keepdims=True),
             jnp.zeros((6, Cp), jnp.float32)], axis=0)

    return pl.pallas_call(
        kernel,
        out_shape=(jax.ShapeDtypeStruct((B, NW, Cp), jnp.bfloat16),
                   jax.ShapeDtypeStruct((B, 8, Cp), jnp.float32)),
        grid=(B,),
        in_specs=[pl.BlockSpec((s2, PROWS, Cinp), lambda b: (b, 0, 0)),
                  pl.BlockSpec((9, Cinp, Cp), lambda b: (0, 0, 0)),
                  pl.BlockSpec((NW, 1), lambda b: (0, 0))],
        out_specs=(pl.BlockSpec((1, NW, Cp), lambda b: (b, 0, 0)),
                   pl.BlockSpec((1, 8, Cp), lambda b: (b, 0, 0))),
        compiler_params=_compiler_params(),
    )(planes, w1, mask)


def _conv2_block(y1, sc1, sh1, w2, mask, xs, ws, Ho, Wo, proj):
    """Pass B: BN1-apply + ReLU fused into the conv2 prologue (zero-bordered
    VMEM scratch), direct 3x3 conv2, optional fused 1x1 projection, and fused
    BN2 / BN_shortcut partial stats."""
    B, NW, Cp = y1.shape
    WW = Wo + 2
    HROWS = (Ho + 3) * WW  # padded h1 image (+1 spare row for tap slice slack)

    def _conv2_body(y1_ref, sc1_ref, sh1_ref, w2_ref, mask_ref, h_ref):
        h_ref[...] = jnp.zeros_like(h_ref)
        hval = jnp.maximum(
            y1_ref[0].astype(jnp.float32) * sc1_ref[...] + sh1_ref[...],
            0.0) * mask_ref[...]
        h_ref[pl.ds(WW + 1, NW), :] = hval.astype(h_ref.dtype)
        acc = jnp.zeros((NW, Cp), jnp.float32)
        for t in range(9):
            dh, dw = divmod(t, 3)
            acc = acc + jnp.dot(h_ref[pl.ds(dh * WW + dw, NW), :], w2_ref[t],
                                preferred_element_type=jnp.float32)
        return acc * mask_ref[...]

    if proj:
        Cinp = ws.shape[0]

        def kernel(y1_ref, sc1_ref, sh1_ref, w2_ref, xs_ref, ws_ref, mask_ref,
                   y2_ref, ysc_ref, st_ref, h_ref):
            acc = _conv2_body(y1_ref, sc1_ref, sh1_ref, w2_ref, mask_ref, h_ref)
            ysc = jnp.dot(xs_ref[0], ws_ref[...],
                          preferred_element_type=jnp.float32)
            y2_ref[0] = acc.astype(y2_ref.dtype)
            ysc_ref[0] = ysc.astype(ysc_ref.dtype)
            st_ref[0] = jnp.concatenate(
                [jnp.sum(acc, axis=0, keepdims=True),
                 jnp.sum(acc * acc, axis=0, keepdims=True),
                 jnp.sum(ysc, axis=0, keepdims=True),
                 jnp.sum(ysc * ysc, axis=0, keepdims=True),
                 jnp.zeros((4, Cp), jnp.float32)], axis=0)

        return pl.pallas_call(
            kernel,
            out_shape=(jax.ShapeDtypeStruct((B, NW, Cp), jnp.bfloat16),
                       jax.ShapeDtypeStruct((B, NW, Cp), jnp.bfloat16),
                       jax.ShapeDtypeStruct((B, 8, Cp), jnp.float32)),
            grid=(B,),
            in_specs=[pl.BlockSpec((1, NW, Cp), lambda b: (b, 0, 0)),
                      pl.BlockSpec((1, Cp), lambda b: (0, 0)),
                      pl.BlockSpec((1, Cp), lambda b: (0, 0)),
                      pl.BlockSpec((9, Cp, Cp), lambda b: (0, 0, 0)),
                      pl.BlockSpec((1, NW, Cinp), lambda b: (b, 0, 0)),
                      pl.BlockSpec((Cinp, Cp), lambda b: (0, 0)),
                      pl.BlockSpec((NW, 1), lambda b: (0, 0))],
            out_specs=(pl.BlockSpec((1, NW, Cp), lambda b: (b, 0, 0)),
                       pl.BlockSpec((1, NW, Cp), lambda b: (b, 0, 0)),
                       pl.BlockSpec((1, 8, Cp), lambda b: (b, 0, 0))),
            scratch_shapes=[pltpu.VMEM((HROWS, Cp), jnp.bfloat16)],
            compiler_params=_compiler_params(),
        )(y1, sc1, sh1, w2, xs, ws, mask)

    def kernel(y1_ref, sc1_ref, sh1_ref, w2_ref, mask_ref,
               y2_ref, st_ref, h_ref):
        acc = _conv2_body(y1_ref, sc1_ref, sh1_ref, w2_ref, mask_ref, h_ref)
        y2_ref[0] = acc.astype(y2_ref.dtype)
        st_ref[0] = jnp.concatenate(
            [jnp.sum(acc, axis=0, keepdims=True),
             jnp.sum(acc * acc, axis=0, keepdims=True),
             jnp.zeros((6, Cp), jnp.float32)], axis=0)

    return pl.pallas_call(
        kernel,
        out_shape=(jax.ShapeDtypeStruct((B, NW, Cp), jnp.bfloat16),
                   jax.ShapeDtypeStruct((B, 8, Cp), jnp.float32)),
        grid=(B,),
        in_specs=[pl.BlockSpec((1, NW, Cp), lambda b: (b, 0, 0)),
                  pl.BlockSpec((1, Cp), lambda b: (0, 0)),
                  pl.BlockSpec((1, Cp), lambda b: (0, 0)),
                  pl.BlockSpec((9, Cp, Cp), lambda b: (0, 0, 0)),
                  pl.BlockSpec((NW, 1), lambda b: (0, 0))],
        out_specs=(pl.BlockSpec((1, NW, Cp), lambda b: (b, 0, 0)),
                   pl.BlockSpec((1, 8, Cp), lambda b: (b, 0, 0))),
        scratch_shapes=[pltpu.VMEM((HROWS, Cp), jnp.bfloat16)],
        compiler_params=_compiler_params(),
    )(y1, sc1, sh1, w2, mask)


def _epilogue(y2, sc2, sh2, short, scs, shs, proj):
    """Pass C: BN2-apply (+ shortcut BN-apply or bf16 identity add) + ReLU."""
    B, NW, Cp = y2.shape

    if proj:
        def kernel(y2_ref, ysc_ref, sc2_ref, sh2_ref, scs_ref, shs_ref, o_ref):
            r = y2_ref[...].astype(jnp.float32) * sc2_ref[...] + sh2_ref[...]
            s = ysc_ref[...].astype(jnp.float32) * scs_ref[...] + shs_ref[...]
            o_ref[...] = jnp.maximum(r + s, 0.0)
        in_specs = [pl.BlockSpec((1, NW, Cp), lambda b: (b, 0, 0)),
                    pl.BlockSpec((1, NW, Cp), lambda b: (b, 0, 0)),
                    pl.BlockSpec((1, Cp), lambda b: (0, 0)),
                    pl.BlockSpec((1, Cp), lambda b: (0, 0)),
                    pl.BlockSpec((1, Cp), lambda b: (0, 0)),
                    pl.BlockSpec((1, Cp), lambda b: (0, 0))]
        args = (y2, short, sc2, sh2, scs, shs)
    else:
        def kernel(y2_ref, xs_ref, sc2_ref, sh2_ref, o_ref):
            r = y2_ref[...].astype(jnp.float32) * sc2_ref[...] + sh2_ref[...]
            o_ref[...] = jnp.maximum(r + xs_ref[...].astype(jnp.float32), 0.0)
        in_specs = [pl.BlockSpec((1, NW, Cp), lambda b: (b, 0, 0)),
                    pl.BlockSpec((1, NW, Cp), lambda b: (b, 0, 0)),
                    pl.BlockSpec((1, Cp), lambda b: (0, 0)),
                    pl.BlockSpec((1, Cp), lambda b: (0, 0))]
        args = (y2, short, sc2, sh2)

    return pl.pallas_call(
        kernel,
        out_shape=jax.ShapeDtypeStruct((B, NW, Cp), jnp.float32),
        grid=(B,),
        in_specs=in_specs,
        out_specs=pl.BlockSpec((1, NW, Cp), lambda b: (b, 0, 0)),
        compiler_params=_compiler_params(),
    )(*args)


# ------------------------------- forward pass ------------------------------- #

def basic_block_forward(x_nchw, params, stride):
    x = jnp.transpose(x_nchw, (0, 2, 3, 1))               # NHWC f32
    B, H, W, Cin = x.shape
    Cout = params["w1"].shape[-1]
    Cp = _round_up(Cout, _LANE)
    Cinp = _round_up(Cin, _LANE)
    proj = (stride != 1) or (Cin != Cout)

    Ho = (H + 2 - 3) // stride + 1
    Wo = (W + 2 - 3) // stride + 1
    WW = Wo + 2
    NW = Ho * WW
    M = B * Ho * Wo

    xb = jnp.pad(x.astype(jnp.bfloat16),
                 ((0, 0), (0, 0), (0, 0), (0, Cinp - Cin)))
    mask = (jnp.arange(NW, dtype=jnp.int32) % WW < Wo
            ).astype(jnp.float32).reshape(NW, 1)

    # ---- pass A: conv1 + BN1 partial stats ----
    planes, taps = _phase_planes_flat(xb, stride, Ho, Wo)
    w1 = jnp.pad(params["w1"].astype(jnp.bfloat16),
                 ((0, 0), (0, 0), (0, Cinp - Cin), (0, Cp - Cout)))
    w1 = w1.reshape(9, Cinp, Cp)
    y1, st1p = _conv1_stats(planes, w1, mask, taps, B, stride * stride, Ho, Wo)
    st1 = jnp.sum(st1p, axis=0)
    sc1, sh1 = _bn_fold(st1[0], st1[1], M, params["g1"], params["b1"], Cp)

    # ---- pass B: fused BN1-ReLU + conv2 (+ 1x1 projection) + stats ----
    w2 = jnp.pad(params["w2"].astype(jnp.bfloat16),
                 ((0, 0), (0, 0), (0, Cp - Cout), (0, Cp - Cout)))
    w2 = w2.reshape(9, Cp, Cp)
    if proj:
        xs = _widen_flat(xb[:, ::stride, ::stride, :], WW)       # bf16 stream
        ws = jnp.pad(params["ws"].astype(jnp.bfloat16).reshape(Cin, Cout),
                     ((0, Cinp - Cin), (0, Cp - Cout)))
        y2, ysc, st2p = _conv2_block(y1, sc1, sh1, w2, mask, xs, ws,
                                     Ho, Wo, True)
        st2 = jnp.sum(st2p, axis=0)
        sc2, sh2 = _bn_fold(st2[0], st2[1], M, params["g2"], params["b2"], Cp)
        scs, shs = _bn_fold(st2[2], st2[3], M, params["gs"], params["bs"], Cp)
        out = _epilogue(y2, sc2, sh2, ysc, scs, shs, True)
    else:
        y2, st2p = _conv2_block(y1, sc1, sh1, w2, mask, None, None,
                                Ho, Wo, False)
        st2 = jnp.sum(st2p, axis=0)
        sc2, sh2 = _bn_fold(st2[0], st2[1], M, params["g2"], params["b2"], Cp)
        xs_id = _widen_flat(xb, WW)            # identity shortcut, bf16 stream
        out = _epilogue(y2, sc2, sh2, xs_id, None, None, False)

    out = out.reshape(B, Ho, WW, Cp)[:, :, :Wo, :Cout]
    return jnp.transpose(out, (0, 3, 1, 2))               # back to NCHW


# --------------------------------- reference -------------------------------- #

def _reference_forward(x_nchw, params, stride):
    # Same cast points as the kernel path (bf16 matmul operands, f32 accumulate,
    # BN applied to bf16-rounded activations) for an apples-to-apples check.
    x = jnp.transpose(x_nchw, (0, 2, 3, 1)).astype(jnp.float32)
    Cin = x.shape[-1]
    Cout = params["w1"].shape[-1]

    def conv(z, w_hwio, s, pad):
        return jax.lax.conv_general_dilated(
            z.astype(jnp.bfloat16), w_hwio.astype(jnp.bfloat16), (s, s),
            [(pad, pad), (pad, pad)],
            dimension_numbers=("NHWC", "HWIO", "NHWC"),
            preferred_element_type=jnp.float32)

    def bn_fold(y, g, b):
        mean = jnp.mean(y, axis=(0, 1, 2))
        var = jnp.maximum(jnp.mean(y * y, axis=(0, 1, 2)) - mean * mean, 0.0)
        scale = g * jax.lax.rsqrt(var + _BN_EPS)
        return scale, b - mean * scale

    y1 = conv(x, params["w1"], stride, 1)
    sc1, sh1 = bn_fold(y1, params["g1"], params["b1"])
    h1 = jax.nn.relu(y1.astype(jnp.bfloat16).astype(jnp.float32) * sc1 + sh1)
    y2 = conv(h1, params["w2"], 1, 1)
    sc2, sh2 = bn_fold(y2, params["g2"], params["b2"])
    r = y2.astype(jnp.bfloat16).astype(jnp.float32) * sc2 + sh2
    if stride != 1 or Cin != Cout:
        ysc = conv(x, params["ws"], stride, 0)
        scs, shs = bn_fold(ysc, params["gs"], params["bs"])
        s = ysc.astype(jnp.bfloat16).astype(jnp.float32) * scs + shs
    else:
        s = x.astype(jnp.bfloat16).astype(jnp.float32)
    return jnp.transpose(jax.nn.relu(r + s), (0, 3, 1, 2))


# ----------------------------------- main ------------------------------------ #

def _init_params(key, cin, cout):
    k = jax.random.split(key, 9)
    return {
        "w1": 0.1 * jax.random.normal(k[0], (3, 3, cin, cout), jnp.float32),
        "g1": 1.0 + 0.1 * jax.random.normal(k[1], (cout,), jnp.float32),
        "b1": 0.1 * jax.random.normal(k[2], (cout,), jnp.float32),
        "w2": 0.1 * jax.random.normal(k[3], (3, 3, cout, cout), jnp.float32),
        "g2": 1.0 + 0.1 * jax.random.normal(k[4], (cout,), jnp.float32),
        "b2": 0.1 * jax.random.normal(k[5], (cout,), jnp.float32),
        "ws": 0.1 * jax.random.normal(k[6], (1, 1, cin, cout), jnp.float32),
        "gs": 1.0 + 0.1 * jax.random.normal(k[7], (cout,), jnp.float32),
        "bs": 0.1 * jax.random.normal(k[8], (cout,), jnp.float32),
    }


if __name__ == "__main__":
    key = jax.random.PRNGKey(0)
    fwd = jax.jit(basic_block_forward, static_argnames=("stride",))

    # (cin, cout, stride): projection shortcut, then identity shortcut.
    configs = [(4, 8, 2), (8, 8, 1)]
    for idx, (cin, cout, stride) in enumerate(configs):
        kx, kp = jax.random.split(jax.random.fold_in(key, idx))
        x = jax.random.normal(kx, (2, cin, 16, 16), jnp.float32)  # NCHW
        params = _init_params(kp, cin, cout)

        out = jax.block_until_ready(fwd(x, params, stride=stride))
        ref = jax.block_until_ready(_reference_forward(x, params, stride))

        hw = 16 // stride
        assert out.shape == (2, cout, hw, hw), out.shape
        np.testing.assert_allclose(np.asarray(out), np.asarray(ref),
                                   rtol=1e-2, atol=1e-2)

    print("KERNEL_OK")
</pallas_src>

<mosaic_0001>
module attributes {stable_mosaic.version = 11 : i64} {
  func.func @kernel(%arg0: i32, %arg1: memref<4x100x128xbf16, #tpu.memory_space<vmem>>, %arg2: memref<9x128x128xbf16, #tpu.memory_space<vmem>>, %arg3: memref<80x1xf32, #tpu.memory_space<vmem>>, %arg4: memref<1x80x128xbf16, #tpu.memory_space<vmem>>, %arg5: memref<1x8x128xf32, #tpu.memory_space<vmem>>) attributes {dimension_semantics = [#tpu.dimension_semantics<parallel>], iteration_bounds = array<i64: 2>, scalar_prefetch = 0 : i64, scratch_operands = 0 : i64, tpu.core_type = #tpu.core_type<tc>, window_params = [{transform_indices = @transform_0, window_bounds = array<i64: 4, 100, 128>}, {pipeline_mode = #tpu.pipeline_mode<synchronous>, transform_indices = @transform_1, window_bounds = array<i64: 9, 128, 128>}, {pipeline_mode = #tpu.pipeline_mode<synchronous>, transform_indices = @transform_2, window_bounds = array<i64: 80, 1>}, {transform_indices = @transform_3, window_bounds = array<i64: 1, 80, 128>}, {transform_indices = @transform_4, window_bounds = array<i64: 1, 8, 128>}]} {
    %cst = arith.constant 0.000000e+00 : f32
    %0 = vector.broadcast %cst : f32 to vector<80x128xf32>
    %c0 = arith.constant 0 : index
    %c0_0 = arith.constant 0 : index
    %c0_1 = arith.constant 0 : index
    %1 = vector.load %arg1[%c0, %c0_0, %c0_1] : memref<4x100x128xbf16, #tpu.memory_space<vmem>>, vector<1x80x128xbf16>
    %2 = vector.shape_cast %1 : vector<1x80x128xbf16> to vector<80x128xbf16>
    %c0_2 = arith.constant 0 : index
    %c0_3 = arith.constant 0 : index
    %c0_4 = arith.constant 0 : index
    %3 = vector.load %arg2[%c0_2, %c0_3, %c0_4] : memref<9x128x128xbf16, #tpu.memory_space<vmem>>, vector<1x128x128xbf16>
    %4 = vector.shape_cast %3 : vector<1x128x128xbf16> to vector<128x128xbf16>
    %cst_5 = arith.constant dense<0.000000e+00> : vector<80x128xf32>
    %5 = tpu.matmul %2, %4, %cst_5 {dimension_numbers = #tpu.dot_dimension_numbers<[1], [0], [0], [1], [0, 0, 1, 1], [], []>} : vector<80x128xbf16>, vector<128x128xbf16>, vector<80x128xf32> -> vector<80x128xf32>
    %6 = arith.addf %0, %5 : vector<80x128xf32>
    %c1 = arith.constant 1 : index
    %c0_6 = arith.constant 0 : index
    %c0_7 = arith.constant 0 : index
    %7 = vector.load %arg1[%c1, %c0_6, %c0_7] : memref<4x100x128xbf16, #tpu.memory_space<vmem>>, vector<1x80x128xbf16>
    %8 = vector.shape_cast %7 : vector<1x80x128xbf16> to vector<80x128xbf16>
    %c1_8 = arith.constant 1 : index
    %c0_9 = arith.constant 0 : index
    %c0_10 = arith.constant 0 : index
    %9 = vector.load %arg2[%c1_8, %c0_9, %c0_10] : memref<9x128x128xbf16, #tpu.memory_space<vmem>>, vector<1x128x128xbf16>
    %10 = vector.shape_cast %9 : vector<1x128x128xbf16> to vector<128x128xbf16>
    %cst_11 = arith.constant dense<0.000000e+00> : vector<80x128xf32>
    %11 = tpu.matmul %8, %10, %cst_11 {dimension_numbers = #tpu.dot_dimension_numbers<[1], [0], [0], [1], [0, 0, 1, 1], [], []>} : vector<80x128xbf16>, vector<128x128xbf16>, vector<80x128xf32> -> vector<80x128xf32>
    %12 = arith.addf %6, %11 : vector<80x128xf32>
    %c0_12 = arith.constant 0 : index
    %c1_13 = arith.constant 1 : index
    %c0_14 = arith.constant 0 : index
    %13 = vector.load %arg1[%c0_12, %c1_13, %c0_14] : memref<4x100x128xbf16, #tpu.memory_space<vmem>>, vector<1x80x128xbf16>
    %14 = vector.shape_cast %13 : vector<1x80x128xbf16> to vector<80x128xbf16>
    %c2 = arith.constant 2 : index
    %c0_15 = arith.constant 0 : index
    %c0_16 = arith.constant 0 : index
    %15 = vector.load %arg2[%c2, %c0_15, %c0_16] : memref<9x128x128xbf16, #tpu.memory_space<vmem>>, vector<1x128x128xbf16>
    %16 = vector.shape_cast %15 : vector<1x128x128xbf16> to vector<128x128xbf16>
    %cst_17 = arith.constant dense<0.000000e+00> : vector<80x128xf32>
    %17 = tpu.matmul %14, %16, %cst_17 {dimension_numbers = #tpu.dot_dimension_numbers<[1], [0], [0], [1], [0, 0, 1, 1], [], []>} : vector<80x128xbf16>, vector<128x128xbf16>, vector<80x128xf32> -> vector<80x128xf32>
    %18 = arith.addf %12, %17 : vector<80x128xf32>
    %c2_18 = arith.constant 2 : index
    %c0_19 = arith.constant 0 : index
    %c0_20 = arith.constant 0 : index
    %19 = vector.load %arg1[%c2_18, %c0_19, %c0_20] : memref<4x100x128xbf16, #tpu.memory_space<vmem>>, vector<1x80x128xbf16>
    %20 = vector.shape_cast %19 : vector<1x80x128xbf16> to vector<80x128xbf16>
    %c3 = arith.constant 3 : index
    %c0_21 = arith.constant 0 : index
    %c0_22 = arith.constant 0 : index
    %21 = vector.load %arg2[%c3, %c0_21, %c0_22] : memref<9x128x128xbf16, #tpu.memory_space<vmem>>, vector<1x128x128xbf16>
    %22 = vector.shape_cast %21 : vector<1x128x128xbf16> to vector<128x128xbf16>
    %cst_23 = arith.constant dense<0.000000e+00> : vector<80x128xf32>
    %23 = tpu.matmul %20, %22, %cst_23 {dimension_numbers = #tpu.dot_dimension_numbers<[1], [0], [0], [1], [0, 0, 1, 1], [], []>} : vector<80x128xbf16>, vector<128x128xbf16>, vector<80x128xf32> -> vector<80x128xf32>
    %24 = arith.addf %18, %23 : vector<80x128xf32>
    %c3_24 = arith.constant 3 : index
    %c0_25 = arith.constant 0 : index
    %c0_26 = arith.constant 0 : index
    %25 = vector.load %arg1[%c3_24, %c0_25, %c0_26] : memref<4x100x128xbf16, #tpu.memory_space<vmem>>, vector<1x80x128xbf16>
    %26 = vector.shape_cast %25 : vector<1x80x128xbf16> to vector<80x128xbf16>
    %c4 = arith.constant 4 : index
    %c0_27 = arith.constant 0 : index
    %c0_28 = arith.constant 0 : index
    %27 = vector.load %arg2[%c4, %c0_27, %c0_28] : memref<9x128x128xbf16, #tpu.memory_space<vmem>>, vector<1x128x128xbf16>
    %28 = vector.shape_cast %27 : vector<1x128x128xbf16> to vector<128x128xbf16>
    %cst_29 = arith.constant dense<0.000000e+00> : vector<80x128xf32>
    %29 = tpu.matmul %26, %28, %cst_29 {dimension_numbers = #tpu.dot_dimension_numbers<[1], [0], [0], [1], [0, 0, 1, 1], [], []>} : vector<80x128xbf16>, vector<128x128xbf16>, vector<80x128xf32> -> vector<80x128xf32>
    %30 = arith.addf %24, %29 : vector<80x128xf32>
    %c2_30 = arith.constant 2 : index
    %c1_31 = arith.constant 1 : index
    %c0_32 = arith.constant 0 : index
    %31 = vector.load %arg1[%c2_30, %c1_31, %c0_32] : memref<4x100x128xbf16, #tpu.memory_space<vmem>>, vector<1x80x128xbf16>
    %32 = vector.shape_cast %31 : vector<1x80x128xbf16> to vector<80x128xbf16>
    %c5 = arith.constant 5 : index
    %c0_33 = arith.constant 0 : index
    %c0_34 = arith.constant 0 : index
    %33 = vector.load %arg2[%c5, %c0_33, %c0_34] : memref<9x128x128xbf16, #tpu.memory_space<vmem>>, vector<1x128x128xbf16>
    %34 = vector.shape_cast %33 : vector<1x128x128xbf16> to vector<128x128xbf16>
    %cst_35 = arith.constant dense<0.000000e+00> : vector<80x128xf32>
    %35 = tpu.matmul %32, %34, %cst_35 {dimension_numbers = #tpu.dot_dimension_numbers<[1], [0], [0], [1], [0, 0, 1, 1], [], []>} : vector<80x128xbf16>, vector<128x128xbf16>, vector<80x128xf32> -> vector<80x128xf32>
    %36 = arith.addf %30, %35 : vector<80x128xf32>
    %c0_36 = arith.constant 0 : index
    %c10 = arith.constant 10 : index
    %c0_37 = arith.constant 0 : index
    %37 = vector.load %arg1[%c0_36, %c10, %c0_37] : memref<4x100x128xbf16, #tpu.memory_space<vmem>>, vector<1x80x128xbf16>
    %38 = vector.shape_cast %37 : vector<1x80x128xbf16> to vector<80x128xbf16>
    %c6 = arith.constant 6 : index
    %c0_38 = arith.constant 0 : index
    %c0_39 = arith.constant 0 : index
    %39 = vector.load %arg2[%c6, %c0_38, %c0_39] : memref<9x128x128xbf16, #tpu.memory_space<vmem>>, vector<1x128x128xbf16>
    %40 = vector.shape_cast %39 : vector<1x128x128xbf16> to vector<128x128xbf16>
    %cst_40 = arith.constant dense<0.000000e+00> : vector<80x128xf32>
    %41 = tpu.matmul %38, %40, %cst_40 {dimension_numbers = #tpu.dot_dimension_numbers<[1], [0], [0], [1], [0, 0, 1, 1], [], []>} : vector<80x128xbf16>, vector<128x128xbf16>, vector<80x128xf32> -> vector<80x128xf32>
    %42 = arith.addf %36, %41 : vector<80x128xf32>
    %c1_41 = arith.constant 1 : index
    %c10_42 = arith.constant 10 : index
    %c0_43 = arith.constant 0 : index
    %43 = vector.load %arg1[%c1_41, %c10_42, %c0_43] : memref<4x100x128xbf16, #tpu.memory_space<vmem>>, vector<1x80x128xbf16>
    %44 = vector.shape_cast %43 : vector<1x80x128xbf16> to vector<80x128xbf16>
    %c7 = arith.constant 7 : index
    %c0_44 = arith.constant 0 : index
    %c0_45 = arith.constant 0 : index
    %45 = vector.load %arg2[%c7, %c0_44, %c0_45] : memref<9x128x128xbf16, #tpu.memory_space<vmem>>, vector<1x128x128xbf16>
    %46 = vector.shape_cast %45 : vector<1x128x128xbf16> to vector<128x128xbf16>
    %cst_46 = arith.constant dense<0.000000e+00> : vector<80x128xf32>
    %47 = tpu.matmul %44, %46, %cst_46 {dimension_numbers = #tpu.dot_dimension_numbers<[1], [0], [0], [1], [0, 0, 1, 1], [], []>} : vector<80x128xbf16>, vector<128x128xbf16>, vector<80x128xf32> -> vector<80x128xf32>
    %48 = arith.addf %42, %47 : vector<80x128xf32>
    %c0_47 = arith.constant 0 : index
    %c11 = arith.constant 11 : index
    %c0_48 = arith.constant 0 : index
    %49 = vector.load %arg1[%c0_47, %c11, %c0_48] : memref<4x100x128xbf16, #tpu.memory_space<vmem>>, vector<1x80x128xbf16>
    %50 = vector.shape_cast %49 : vector<1x80x128xbf16> to vector<80x128xbf16>
    %c8 = arith.constant 8 : index
    %c0_49 = arith.constant 0 : index
    %c0_50 = arith.constant 0 : index
    %51 = vector.load %arg2[%c8, %c0_49, %c0_50] : memref<9x128x128xbf16, #tpu.memory_space<vmem>>, vector<1x128x128xbf16>
    %52 = vector.shape_cast %51 : vector<1x128x128xbf16> to vector<128x128xbf16>
    %cst_51 = arith.constant dense<0.000000e+00> : vector<80x128xf32>
    %53 = tpu.matmul %50, %52, %cst_51 {dimension_numbers = #tpu.dot_dimension_numbers<[1], [0], [0], [1], [0, 0, 1, 1], [], []>} : vector<80x128xbf16>, vector<128x128xbf16>, vector<80x128xf32> -> vector<80x128xf32>
    %54 = arith.addf %48, %53 : vector<80x128xf32>
    %c0_52 = arith.constant 0 : index
    %c0_53 = arith.constant 0 : index
    %55 = vector.load %arg3[%c0_52, %c0_53] : memref<80x1xf32, #tpu.memory_space<vmem>>, vector<80x1xf32>
    %56 = vector.broadcast %55 : vector<80x1xf32> to vector<80x128xf32>
    %57 = arith.mulf %54, %56 : vector<80x128xf32>
    %58 = arith.truncf %57 : vector<80x128xf32> to vector<80x128xbf16>
    %c0_54 = arith.constant 0 : index
    %c0_55 = arith.constant 0 : index
    %c0_56 = arith.constant 0 : index
    %59 = vector.load %arg4[%c0_54, %c0_55, %c0_56] : memref<1x80x128xbf16, #tpu.memory_space<vmem>>, vector<1x80x128xbf16>
    %60 = vector.shape_cast %59 : vector<1x80x128xbf16> to vector<80x128xbf16>
    %61 = vector.shape_cast %58 : vector<80x128xbf16> to vector<1x80x128xbf16>
    tpu.vector_store %arg4[%c0_54, %c0_55, %c0_56], %61 {strides = array<i32>} : memref<1x80x128xbf16, #tpu.memory_space<vmem>>, vector<1x80x128xbf16>,
    %cst_57 = arith.constant dense<0.000000e+00> : vector<128xf32>
    %62 = vector.multi_reduction <add>, %57, %cst_57 [0] : vector<80x128xf32> to vector<128xf32>
    %63 = vector.shape_cast %62 : vector<128xf32> to vector<1x128xf32>
    %64 = arith.mulf %57, %57 : vector<80x128xf32>
    %cst_58 = arith.constant dense<0.000000e+00> : vector<128xf32>
    %65 = vector.multi_reduction <add>, %64, %cst_58 [0] : vector<80x128xf32> to vector<128xf32>
    %66 = vector.shape_cast %65 : vector<128xf32> to vector<1x128xf32>
    %cst_59 = arith.constant 0.000000e+00 : f32
    %67 = vector.broadcast %cst_59 : f32 to vector<6x128xf32>
    %68 = tpu.concatenate %63, %66, %67 in 0 : vector<1x128xf32>, vector<1x128xf32>, vector<6x128xf32> -> vector<8x128xf32>
    %c0_60 = arith.constant 0 : index
    %c0_61 = arith.constant 0 : index
    %c0_62 = arith.constant 0 : index
    %69 = vector.load %arg5[%c0_60, %c0_61, %c0_62] : memref<1x8x128xf32, #tpu.memory_space<vmem>>, vector<1x8x128xf32>
    %70 = vector.shape_cast %69 : vector<1x8x128xf32> to vector<8x128xf32>
    %71 = vector.shape_cast %68 : vector<8x128xf32> to vector<1x8x128xf32>
    tpu.vector_store %arg5[%c0_60, %c0_61, %c0_62], %71 {strides = array<i32>} : memref<1x8x128xf32, #tpu.memory_space<vmem>>, vector<1x8x128xf32>,
    return
  }
  func.func @transform_0(%arg0: i32) -> (i32, i32, i32) {
    %c0_i32 = arith.constant 0 : i32
    %c0_i32_0 = arith.constant 0 : i32
    %c0_i32_1 = arith.constant 0 : i32
    return %arg0, %c0_i32, %c0_i32_0 : i32, i32, i32
  }
  func.func @transform_1(%arg0: i32) -> (i32, i32, i32) {
    %c0_i32 = arith.constant 0 : i32
    %c0_i32_0 = arith.constant 0 : i32
    %c0_i32_1 = arith.constant 0 : i32
    %c0_i32_2 = arith.constant 0 : i32
    return %c0_i32, %c0_i32_0, %c0_i32_1 : i32, i32, i32
  }
  func.func @transform_2(%arg0: i32) -> (i32, i32) {
    %c0_i32 = arith.constant 0 : i32
    %c0_i32_0 = arith.constant 0 : i32
    %c0_i32_1 = arith.constant 0 : i32
    return %c0_i32, %c0_i32_0 : i32, i32
  }
  func.func @transform_3(%arg0: i32) -> (i32, i32, i32) {
    %c0_i32 = arith.constant 0 : i32
    %c0_i32_0 = arith.constant 0 : i32
    %c0_i32_1 = arith.constant 0 : i32
    return %arg0, %c0_i32, %c0_i32_0 : i32, i32, i32
  }
  func.func @transform_4(%arg0: i32) -> (i32, i32, i32) {
    %c0_i32 = arith.constant 0 : i32
    %c0_i32_0 = arith.constant 0 : i32
    %c0_i32_1 = arith.constant 0 : i32
    return %arg0, %c0_i32, %c0_i32_0 : i32, i32, i32
  }
}

module attributes {stable_mosaic.version = 11 : i64} {
  func.func @kernel(%arg0: i32, %arg1: memref<1x80x128xbf16, #tpu.memory_space<vmem>>, %arg2: memref<1x128xf32, #tpu.memory_space<vmem>>, %arg3: memref<1x128xf32, #tpu.memory_space<vmem>>, %arg4: memref<9x128x128xbf16, #tpu.memory_space<vmem>>, %arg5: memref<1x80x128xbf16, #tpu.memory_space<vmem>>, %arg6: memref<128x128xbf16, #tpu.memory_space<vmem>>, %arg7: memref<80x1xf32, #tpu.memory_space<vmem>>, %arg8: memref<1x80x128xbf16, #tpu.memory_space<vmem>>, %arg9: memref<1x80x128xbf16, #tpu.memory_space<vmem>>, %arg10: memref<1x8x128xf32, #tpu.memory_space<vmem>>, %arg11: memref<110x128xbf16, #tpu.memory_space<vmem>>) attributes {dimension_semantics = [#tpu.dimension_semantics<parallel>], iteration_bounds = array<i64: 2>, scalar_prefetch = 0 : i64, scratch_operands = 1 : i64, tpu.core_type = #tpu.core_type<tc>, window_params = [{transform_indices = @transform_0, window_bounds = array<i64: 1, 80, 128>}, {pipeline_mode = #tpu.pipeline_mode<synchronous>, transform_indices = @transform_1, window_bounds = array<i64: 1, 128>}, {pipeline_mode = #tpu.pipeline_mode<synchronous>, transform_indices = @transform_2, window_bounds = array<i64: 1, 128>}, {pipeline_mode = #tpu.pipeline_mode<synchronous>, transform_indices = @transform_3, window_bounds = array<i64: 9, 128, 128>}, {transform_indices = @transform_4, window_bounds = array<i64: 1, 80, 128>}, {pipeline_mode = #tpu.pipeline_mode<synchronous>, transform_indices = @transform_5, window_bounds = array<i64: 128, 128>}, {pipeline_mode = #tpu.pipeline_mode<synchronous>, transform_indices = @transform_6, window_bounds = array<i64: 80, 1>}, {transform_indices = @transform_7, window_bounds = array<i64: 1, 80, 128>}, {transform_indices = @transform_8, window_bounds = array<i64: 1, 80, 128>}, {transform_indices = @transform_9, window_bounds = array<i64: 1, 8, 128>}]} {
    %cst = arith.constant 0.000000e+00 : bf16
    %0 = vector.broadcast %cst : bf16 to vector<110x128xbf16>
    %c0 = arith.constant 0 : index
    %c0_0 = arith.constant 0 : index
    %1 = vector.load %arg11[%c0, %c0_0] : memref<110x128xbf16, #tpu.memory_space<vmem>>, vector<110x128xbf16>
    tpu.vector_store %arg11[%c0, %c0_0], %0 {strides = array<i32>} : memref<110x128xbf16, #tpu.memory_space<vmem>>, vector<110x128xbf16>,
    %c0_1 = arith.constant 0 : index
    %c0_2 = arith.constant 0 : index
    %c0_3 = arith.constant 0 : index
    %2 = vector.load %arg1[%c0_1, %c0_2, %c0_3] : memref<1x80x128xbf16, #tpu.memory_space<vmem>>, vector<1x80x128xbf16>
    %3 = vector.shape_cast %2 : vector<1x80x128xbf16> to vector<80x128xbf16>
    %4 = arith.extf %3 : vector<80x128xbf16> to vector<80x128xf32>
    %c0_4 = arith.constant 0 : index
    %c0_5 = arith.constant 0 : index
    %5 = vector.load %arg2[%c0_4, %c0_5] : memref<1x128xf32, #tpu.memory_space<vmem>>, vector<1x128xf32>
    %6 = vector.broadcast %5 : vector<1x128xf32> to vector<80x128xf32>
    %7 = arith.mulf %4, %6 : vector<80x128xf32>
    %c0_6 = arith.constant 0 : index
    %c0_7 = arith.constant 0 : index
    %8 = vector.load %arg3[%c0_6, %c0_7] : memref<1x128xf32, #tpu.memory_space<vmem>>, vector<1x128xf32>
    %9 = vector.broadcast %8 : vector<1x128xf32> to vector<80x128xf32>
    %10 = arith.addf %7, %9 : vector<80x128xf32>
    %cst_8 = arith.constant 0.000000e+00 : f32
    %11 = vector.broadcast %cst_8 : f32 to vector<80x128xf32>
    %12 = arith.maximumf %10, %11 : vector<80x128xf32>
    %c0_9 = arith.constant 0 : index
    %c0_10 = arith.constant 0 : index
    %13 = vector.load %arg7[%c0_9, %c0_10] : memref<80x1xf32, #tpu.memory_space<vmem>>, vector<80x1xf32>
    %14 = vector.broadcast %13 : vector<80x1xf32> to vector<80x128xf32>
    %15 = arith.mulf %12, %14 : vector<80x128xf32>
    %16 = arith.truncf %15 : vector<80x128xf32> to vector<80x128xbf16>
    %c11 = arith.constant 11 : index
    %c0_11 = arith.constant 0 : index
    %17 = vector.load %arg11[%c11, %c0_11] : memref<110x128xbf16, #tpu.memory_space<vmem>>, vector<80x128xbf16>
    tpu.vector_store %arg11[%c11, %c0_11], %16 {strides = array<i32>} : memref<110x128xbf16, #tpu.memory_space<vmem>>, vector<80x128xbf16>,
    %cst_12 = arith.constant 0.000000e+00 : f32
    %18 = vector.broadcast %cst_12 : f32 to vector<80x128xf32>
    %c0_13 = arith.constant 0 : index
    %c0_14 = arith.constant 0 : index
    %19 = vector.load %arg11[%c0_13, %c0_14] : memref<110x128xbf16, #tpu.memory_space<vmem>>, vector<80x128xbf16>
    %c0_15 = arith.constant 0 : index
    %c0_16 = arith.constant 0 : index
    %c0_17 = arith.constant 0 : index
    %20 = vector.load %arg4[%c0_15, %c0_16, %c0_17] : memref<9x128x128xbf16, #tpu.memory_space<vmem>>, vector<1x128x128xbf16>
    %21 = vector.shape_cast %20 : vector<1x128x128xbf16> to vector<128x128xbf16>
    %cst_18 = arith.constant dense<0.000000e+00> : vector<80x128xf32>
    %22 = tpu.matmul %19, %21, %cst_18 {dimension_numbers = #tpu.dot_dimension_numbers<[1], [0], [0], [1], [0, 0, 1, 1], [], []>} : vector<80x128xbf16>, vector<128x128xbf16>, vector<80x128xf32> -> vector<80x128xf32>
    %23 = arith.addf %18, %22 : vector<80x128xf32>
    %c1 = arith.constant 1 : index
    %c0_19 = arith.constant 0 : index
    %24 = vector.load %arg11[%c1, %c0_19] : memref<110x128xbf16, #tpu.memory_space<vmem>>, vector<80x128xbf16>
    %c1_20 = arith.constant 1 : index
    %c0_21 = arith.constant 0 : index
    %c0_22 = arith.constant 0 : index
    %25 = vector.load %arg4[%c1_20, %c0_21, %c0_22] : memref<9x128x128xbf16, #tpu.memory_space<vmem>>, vector<1x128x128xbf16>
    %26 = vector.shape_cast %25 : vector<1x128x128xbf16> to vector<128x128xbf16>
    %cst_23 = arith.constant dense<0.000000e+00> : vector<80x128xf32>
    %27 = tpu.matmul %24, %26, %cst_23 {dimension_numbers = #tpu.dot_dimension_numbers<[1], [0], [0], [1], [0, 0, 1, 1], [], []>} : vector<80x128xbf16>, vector<128x128xbf16>, vector<80x128xf32> -> vector<80x128xf32>
    %28 = arith.addf %23, %27 : vector<80x128xf32>
    %c2 = arith.constant 2 : index
    %c0_24 = arith.constant 0 : index
    %29 = vector.load %arg11[%c2, %c0_24] : memref<110x128xbf16, #tpu.memory_space<vmem>>, vector<80x128xbf16>
    %c2_25 = arith.constant 2 : index
    %c0_26 = arith.constant 0 : index
    %c0_27 = arith.constant 0 : index
    %30 = vector.load %arg4[%c2_25, %c0_26, %c0_27] : memref<9x128x128xbf16, #tpu.memory_space<vmem>>, vector<1x128x128xbf16>
    %31 = vector.shape_cast %30 : vector<1x128x128xbf16> to vector<128x128xbf16>
    %cst_28 = arith.constant dense<0.000000e+00> : vector<80x128xf32>
    %32 = tpu.matmul %29, %31, %cst_28 {dimension_numbers = #tpu.dot_dimension_numbers<[1], [0], [0], [1], [0, 0, 1, 1], [], []>} : vector<80x128xbf16>, vector<128x128xbf16>, vector<80x128xf32> -> vector<80x128xf32>
    %33 = arith.addf %28, %32 : vector<80x128xf32>
    %c10 = arith.constant 10 : index
    %c0_29 = arith.constant 0 : index
    %34 = vector.load %arg11[%c10, %c0_29] : memref<110x128xbf16, #tpu.memory_space<vmem>>, vector<80x128xbf16>
    %c3 = arith.constant 3 : index
    %c0_30 = arith.constant 0 : index
    %c0_31 = arith.constant 0 : index
    %35 = vector.load %arg4[%c3, %c0_30, %c0_31] : memref<9x128x128xbf16, #tpu.memory_space<vmem>>, vector<1x128x128xbf16>
    %36 = vector.shape_cast %35 : vector<1x128x128xbf16> to vector<128x128xbf16>
    %cst_32 = arith.constant dense<0.000000e+00> : vector<80x128xf32>
    %37 = tpu.matmul %34, %36, %cst_32 {dimension_numbers = #tpu.dot_dimension_numbers<[1], [0], [0], [1], [0, 0, 1, 1], [], []>} : vector<80x128xbf16>, vector<128x128xbf16>, vector<80x128xf32> -> vector<80x128xf32>
    %38 = arith.addf %33, %37 : vector<80x128xf32>
    %c11_33 = arith.constant 11 : index
    %c0_34 = arith.constant 0 : index
    %39 = vector.load %arg11[%c11_33, %c0_34] : memref<110x128xbf16, #tpu.memory_space<vmem>>, vector<80x128xbf16>
    %c4 = arith.constant 4 : index
    %c0_35 = arith.constant 0 : index
    %c0_36 = arith.constant 0 : index
    %40 = vector.load %arg4[%c4, %c0_35, %c0_36] : memref<9x128x128xbf16, #tpu.memory_space<vmem>>, vector<1x128x128xbf16>
    %41 = vector.shape_cast %40 : vector<1x128x128xbf16> to vector<128x128xbf16>
    %cst_37 = arith.constant dense<0.000000e+00> : vector<80x128xf32>
    %42 = tpu.matmul %39, %41, %cst_37 {dimension_numbers = #tpu.dot_dimension_numbers<[1], [0], [0], [1], [0, 0, 1, 1], [], []>} : vector<80x128xbf16>, vector<128x128xbf16>, vector<80x128xf32> -> vector<80x128xf32>
    %43 = arith.addf %38, %42 : vector<80x128xf32>
    %c12 = arith.constant 12 : index
    %c0_38 = arith.constant 0 : index
    %44 = vector.load %arg11[%c12, %c0_38] : memref<110x128xbf16, #tpu.memory_space<vmem>>, vector<80x128xbf16>
    %c5 = arith.constant 5 : index
    %c0_39 = arith.constant 0 : index
    %c0_40 = arith.constant 0 : index
    %45 = vector.load %arg4[%c5, %c0_39, %c0_40] : memref<9x128x128xbf16, #tpu.memory_space<vmem>>, vector<1x128x128xbf16>
    %46 = vector.shape_cast %45 : vector<1x128x128xbf16> to vector<128x128xbf16>
    %cst_41 = arith.constant dense<0.000000e+00> : vector<80x128xf32>
    %47 = tpu.matmul %44, %46, %cst_41 {dimension_numbers = #tpu.dot_dimension_numbers<[1], [0], [0], [1], [0, 0, 1, 1], [], []>} : vector<80x128xbf16>, vector<128x128xbf16>, vector<80x128xf32> -> vector<80x128xf32>
    %48 = arith.addf %43, %47 : vector<80x128xf32>
    %c20 = arith.constant 20 : index
    %c0_42 = arith.constant 0 : index
    %49 = vector.load %arg11[%c20, %c0_42] : memref<110x128xbf16, #tpu.memory_space<vmem>>, vector<80x128xbf16>
    %c6 = arith.constant 6 : index
    %c0_43 = arith.constant 0 : index
    %c0_44 = arith.constant 0 : index
    %50 = vector.load %arg4[%c6, %c0_43, %c0_44] : memref<9x128x128xbf16, #tpu.memory_space<vmem>>, vector<1x128x128xbf16>
    %51 = vector.shape_cast %50 : vector<1x128x128xbf16> to vector<128x128xbf16>
    %cst_45 = arith.constant dense<0.000000e+00> : vector<80x128xf32>
    %52 = tpu.matmul %49, %51, %cst_45 {dimension_numbers = #tpu.dot_dimension_numbers<[1], [0], [0], [1], [0, 0, 1, 1], [], []>} : vector<80x128xbf16>, vector<128x128xbf16>, vector<80x128xf32> -> vector<80x128xf32>
    %53 = arith.addf %48, %52 : vector<80x128xf32>
    %c21 = arith.constant 21 : index
    %c0_46 = arith.constant 0 : index
    %54 = vector.load %arg11[%c21, %c0_46] : memref<110x128xbf16, #tpu.memory_space<vmem>>, vector<80x128xbf16>
    %c7 = arith.constant 7 : index
    %c0_47 = arith.constant 0 : index
    %c0_48 = arith.constant 0 : index
    %55 = vector.load %arg4[%c7, %c0_47, %c0_48] : memref<9x128x128xbf16, #tpu.memory_space<vmem>>, vector<1x128x128xbf16>
    %56 = vector.shape_cast %55 : vector<1x128x128xbf16> to vector<128x128xbf16>
    %cst_49 = arith.constant dense<0.000000e+00> : vector<80x128xf32>
    %57 = tpu.matmul %54, %56, %cst_49 {dimension_numbers = #tpu.dot_dimension_numbers<[1], [0], [0], [1], [0, 0, 1, 1], [], []>} : vector<80x128xbf16>, vector<128x128xbf16>, vector<80x128xf32> -> vector<80x128xf32>
    %58 = arith.addf %53, %57 : vector<80x128xf32>
    %c22 = arith.constant 22 : index
    %c0_50 = arith.constant 0 : index
    %59 = vector.load %arg11[%c22, %c0_50] : memref<110x128xbf16, #tpu.memory_space<vmem>>, vector<80x128xbf16>
    %c8 = arith.constant 8 : index
    %c0_51 = arith.constant 0 : index
    %c0_52 = arith.constant 0 : index
    %60 = vector.load %arg4[%c8, %c0_51, %c0_52] : memref<9x128x128xbf16, #tpu.memory_space<vmem>>, vector<1x128x128xbf16>
    %61 = vector.shape_cast %60 : vector<1x128x128xbf16> to vector<128x128xbf16>
    %cst_53 = arith.constant dense<0.000000e+00> : vector<80x128xf32>
    %62 = tpu.matmul %59, %61, %cst_53 {dimension_numbers = #tpu.dot_dimension_numbers<[1], [0], [0], [1], [0, 0, 1, 1], [], []>} : vector<80x128xbf16>, vector<128x128xbf16>, vector<80x128xf32> -> vector<80x128xf32>
    %63 = arith.addf %58, %62 : vector<80x128xf32>
    %c0_54 = arith.constant 0 : index
    %c0_55 = arith.constant 0 : index
    %64 = vector.load %arg7[%c0_54, %c0_55] : memref<80x1xf32, #tpu.memory_space<vmem>>, vector<80x1xf32>
    %65 = vector.broadcast %64 : vector<80x1xf32> to vector<80x128xf32>
    %66 = arith.mulf %63, %65 : vector<80x128xf32>
    %c0_56 = arith.constant 0 : index
    %c0_57 = arith.constant 0 : index
    %c0_58 = arith.constant 0 : index
    %67 = vector.load %arg5[%c0_56, %c0_57, %c0_58] : memref<1x80x128xbf16, #tpu.memory_space<vmem>>, vector<1x80x128xbf16>
    %68 = vector.shape_cast %67 : vector<1x80x128xbf16> to vector<80x128xbf16>
    %c0_59 = arith.constant 0 : index
    %c0_60 = arith.constant 0 : index
    %69 = vector.load %arg6[%c0_59, %c0_60] : memref<128x128xbf16, #tpu.memory_space<vmem>>, vector<128x128xbf16>
    %cst_61 = arith.constant dense<0.000000e+00> : vector<80x128xf32>
    %70 = tpu.matmul %68, %69, %cst_61 {dimension_numbers = #tpu.dot_dimension_numbers<[1], [0], [0], [1], [0, 0, 1, 1], [], []>} : vector<80x128xbf16>, vector<128x128xbf16>, vector<80x128xf32> -> vector<80x128xf32>
    %71 = arith.truncf %66 : vector<80x128xf32> to vector<80x128xbf16>
    %c0_62 = arith.constant 0 : index
    %c0_63 = arith.constant 0 : index
    %c0_64 = arith.constant 0 : index
    %72 = vector.load %arg8[%c0_62, %c0_63, %c0_64] : memref<1x80x128xbf16, #tpu.memory_space<vmem>>, vector<1x80x128xbf16>
    %73 = vector.shape_cast %72 : vector<1x80x128xbf16> to vector<80x128xbf16>
    %74 = vector.shape_cast %71 : vector<80x128xbf16> to vector<1x80x128xbf16>
    tpu.vector_store %arg8[%c0_62, %c0_63, %c0_64], %74 {strides = array<i32>} : memref<1x80x128xbf16, #tpu.memory_space<vmem>>, vector<1x80x128xbf16>,
    %75 = arith.truncf %70 : vector<80x128xf32> to vector<80x128xbf16>
    %c0_65 = arith.constant 0 : index
    %c0_66 = arith.constant 0 : index
    %c0_67 = arith.constant 0 : index
    %76 = vector.load %arg9[%c0_65, %c0_66, %c0_67] : memref<1x80x128xbf16, #tpu.memory_space<vmem>>, vector<1x80x128xbf16>
    %77 = vector.shape_cast %76 : vector<1x80x128xbf16> to vector<80x128xbf16>
    %78 = vector.shape_cast %75 : vector<80x128xbf16> to vector<1x80x128xbf16>
    tpu.vector_store %arg9[%c0_65, %c0_66, %c0_67], %78 {strides = array<i32>} : memref<1x80x128xbf16, #tpu.memory_space<vmem>>, vector<1x80x128xbf16>,
    %cst_68 = arith.constant dense<0.000000e+00> : vector<128xf32>
    %79 = vector.multi_reduction <add>, %66, %cst_68 [0] : vector<80x128xf32> to vector<128xf32>
    %80 = vector.shape_cast %79 : vector<128xf32> to vector<1x128xf32>
    %81 = arith.mulf %66, %66 : vector<80x128xf32>
    %cst_69 = arith.constant dense<0.000000e+00> : vector<128xf32>
    %82 = vector.multi_reduction <add>, %81, %cst_69 [0] : vector<80x128xf32> to vector<128xf32>
    %83 = vector.shape_cast %82 : vector<128xf32> to vector<1x128xf32>
    %cst_70 = arith.constant dense<0.000000e+00> : vector<128xf32>
    %84 = vector.multi_reduction <add>, %70, %cst_70 [0] : vector<80x128xf32> to vector<128xf32>
    %85 = vector.shape_cast %84 : vector<128xf32> to vector<1x128xf32>
    %86 = arith.mulf %70, %70 : vector<80x128xf32>
    %cst_71 = arith.constant dense<0.000000e+00> : vector<128xf32>
    %87 = vector.multi_reduction <add>, %86, %cst_71 [0] : vector<80x128xf32> to vector<128xf32>
    %88 = vector.shape_cast %87 : vector<128xf32> to vector<1x128xf32>
    %cst_72 = arith.constant 0.000000e+00 : f32
    %89 = vector.broadcast %cst_72 : f32 to vector<4x128xf32>
    %90 = tpu.concatenate %80, %83, %85, %88, %89 in 0 : vector<1x128xf32>, vector<1x128xf32>, vector<1x128xf32>, vector<1x128xf32>, vector<4x128xf32> -> vector<8x128xf32>
    %c0_73 = arith.constant 0 : index
    %c0_74 = arith.constant 0 : index
    %c0_75 = arith.constant 0 : index
    %91 = vector.load %arg10[%c0_73, %c0_74, %c0_75] : memref<1x8x128xf32, #tpu.memory_space<vmem>>, vector<1x8x128xf32>
    %92 = vector.shape_cast %91 : vector<1x8x128xf32> to vector<8x128xf32>
    %93 = vector.shape_cast %90 : vector<8x128xf32> to vector<1x8x128xf32>
    tpu.vector_store %arg10[%c0_73, %c0_74, %c0_75], %93 {strides = array<i32>} : memref<1x8x128xf32, #tpu.memory_space<vmem>>, vector<1x8x128xf32>,
    return
  }
  func.func @transform_0(%arg0: i32) -> (i32, i32, i32) {
    %c0_i32 = arith.constant 0 : i32
    %c0_i32_0 = arith.constant 0 : i32
    %c0_i32_1 = arith.constant 0 : i32
    return %arg0, %c0_i32, %c0_i32_0 : i32, i32, i32
  }
  func.func @transform_1(%arg0: i32) -> (i32, i32) {
    %c0_i32 = arith.constant 0 : i32
    %c0_i32_0 = arith.constant 0 : i32
    %c0_i32_1 = arith.constant 0 : i32
    return %c0_i32, %c0_i32_0 : i32, i32
  }
  func.func @transform_2(%arg0: i32) -> (i32, i32) {
    %c0_i32 = arith.constant 0 : i32
    %c0_i32_0 = arith.constant 0 : i32
    %c0_i32_1 = arith.constant 0 : i32
    return %c0_i32, %c0_i32_0 : i32, i32
  }
  func.func @transform_3(%arg0: i32) -> (i32, i32, i32) {
    %c0_i32 = arith.constant 0 : i32
    %c0_i32_0 = arith.constant 0 : i32
    %c0_i32_1 = arith.constant 0 : i32
    %c0_i32_2 = arith.constant 0 : i32
    return %c0_i32, %c0_i32_0, %c0_i32_1 : i32, i32, i32
  }
  func.func @transform_4(%arg0: i32) -> (i32, i32, i32) {
    %c0_i32 = arith.constant 0 : i32
    %c0_i32_0 = arith.constant 0 : i32
    %c0_i32_1 = arith.constant 0 : i32
    return %arg0, %c0_i32, %c0_i32_0 : i32, i32, i32
  }
  func.func @transform_5(%arg0: i32) -> (i32, i32) {
    %c0_i32 = arith.constant 0 : i32
    %c0_i32_0 = arith.constant 0 : i32
    %c0_i32_1 = arith.constant 0 : i32
    return %c0_i32, %c0_i32_0 : i32, i32
  }
  func.func @transform_6(%arg0: i32) -> (i32, i32) {
    %c0_i32 = arith.constant 0 : i32
    %c0_i32_0 = arith.constant 0 : i32
    %c0_i32_1 = arith.constant 0 : i32
    return %c0_i32, %c0_i32_0 : i32, i32
  }
  func.func @transform_7(%arg0: i32) -> (i32, i32, i32) {
    %c0_i32 = arith.constant 0 : i32
    %c0_i32_0 = arith.constant 0 : i32
    %c0_i32_1 = arith.constant 0 : i32
    return %arg0, %c0_i32, %c0_i32_0 : i32, i32, i32
  }
  func.func @transform_8(%arg0: i32) -> (i32, i32, i32) {
    %c0_i32 = arith.constant 0 : i32
    %c0_i32_0 = arith.constant 0 : i32
    %c0_i32_1 = arith.constant 0 : i32
    return %arg0, %c0_i32, %c0_i32_0 : i32, i32, i32
  }
  func.func @transform_9(%arg0: i32) -> (i32, i32, i32) {
    %c0_i32 = arith.constant 0 : i32
    %c0_i32_0 = arith.constant 0 : i32
    %c0_i32_1 = arith.constant 0 : i32
    return %arg0, %c0_i32, %c0_i32_0 : i32, i32, i32
  }
}

module attributes {stable_mosaic.version = 11 : i64} {
  func.func @kernel(%arg0: i32, %arg1: memref<1x80x128xbf16, #tpu.memory_space<vmem>>, %arg2: memref<1x80x128xbf16, #tpu.memory_space<vmem>>, %arg3: memref<1x128xf32, #tpu.memory_space<vmem>>, %arg4: memref<1x128xf32, #tpu.memory_space<vmem>>, %arg5: memref<1x128xf32, #tpu.memory_space<vmem>>, %arg6: memref<1x128xf32, #tpu.memory_space<vmem>>, %arg7: memref<1x80x128xf32, #tpu.memory_space<vmem>>) attributes {dimension_semantics = [#tpu.dimension_semantics<parallel>], iteration_bounds = array<i64: 2>, scalar_prefetch = 0 : i64, scratch_operands = 0 : i64, tpu.core_type = #tpu.core_type<tc>, window_params = [{transform_indices = @transform_0, window_bounds = array<i64: 1, 80, 128>}, {transform_indices = @transform_1, window_bounds = array<i64: 1, 80, 128>}, {pipeline_mode = #tpu.pipeline_mode<synchronous>, transform_indices = @transform_2, window_bounds = array<i64: 1, 128>}, {pipeline_mode = #tpu.pipeline_mode<synchronous>, transform_indices = @transform_3, window_bounds = array<i64: 1, 128>}, {pipeline_mode = #tpu.pipeline_mode<synchronous>, transform_indices = @transform_4, window_bounds = array<i64: 1, 128>}, {pipeline_mode = #tpu.pipeline_mode<synchronous>, transform_indices = @transform_5, window_bounds = array<i64: 1, 128>}, {transform_indices = @transform_6, window_bounds = array<i64: 1, 80, 128>}]} {
    %c0 = arith.constant 0 : index
    %c0_0 = arith.constant 0 : index
    %c0_1 = arith.constant 0 : index
    %0 = vector.load %arg1[%c0, %c0_0, %c0_1] : memref<1x80x128xbf16, #tpu.memory_space<vmem>>, vector<1x80x128xbf16>
    %1 = arith.extf %0 : vector<1x80x128xbf16> to vector<1x80x128xf32>
    %c0_2 = arith.constant 0 : index
    %c0_3 = arith.constant 0 : index
    %2 = vector.load %arg3[%c0_2, %c0_3] : memref<1x128xf32, #tpu.memory_space<vmem>>, vector<1x128xf32>
    %3 = vector.shape_cast %2 : vector<1x128xf32> to vector<1x1x128xf32>
    %4 = vector.broadcast %3 : vector<1x1x128xf32> to vector<1x80x128xf32>
    %5 = arith.mulf %1, %4 : vector<1x80x128xf32>
    %c0_4 = arith.constant 0 : index
    %c0_5 = arith.constant 0 : index
    %6 = vector.load %arg4[%c0_4, %c0_5] : memref<1x128xf32, #tpu.memory_space<vmem>>, vector<1x128xf32>
    %7 = vector.shape_cast %6 : vector<1x128xf32> to vector<1x1x128xf32>
    %8 = vector.broadcast %7 : vector<1x1x128xf32> to vector<1x80x128xf32>
    %9 = arith.addf %5, %8 : vector<1x80x128xf32>
    %c0_6 = arith.constant 0 : index
    %c0_7 = arith.constant 0 : index
    %c0_8 = arith.constant 0 : index
    %10 = vector.load %arg2[%c0_6, %c0_7, %c0_8] : memref<1x80x128xbf16, #tpu.memory_space<vmem>>, vector<1x80x128xbf16>
    %11 = arith.extf %10 : vector<1x80x128xbf16> to vector<1x80x128xf32>
    %c0_9 = arith.constant 0 : index
    %c0_10 = arith.constant 0 : index
    %12 = vector.load %arg5[%c0_9, %c0_10] : memref<1x128xf32, #tpu.memory_space<vmem>>, vector<1x128xf32>
    %13 = vector.shape_cast %12 : vector<1x128xf32> to vector<1x1x128xf32>
    %14 = vector.broadcast %13 : vector<1x1x128xf32> to vector<1x80x128xf32>
    %15 = arith.mulf %11, %14 : vector<1x80x128xf32>
    %c0_11 = arith.constant 0 : index
    %c0_12 = arith.constant 0 : index
    %16 = vector.load %arg6[%c0_11, %c0_12] : memref<1x128xf32, #tpu.memory_space<vmem>>, vector<1x128xf32>
    %17 = vector.shape_cast %16 : vector<1x128xf32> to vector<1x1x128xf32>
    %18 = vector.broadcast %17 : vector<1x1x128xf32> to vector<1x80x128xf32>
    %19 = arith.addf %15, %18 : vector<1x80x128xf32>
    %20 = arith.addf %9, %19 : vector<1x80x128xf32>
    %cst = arith.constant 0.000000e+00 : f32
    %21 = vector.broadcast %cst : f32 to vector<1x80x128xf32>
    %22 = arith.maximumf %20, %21 : vector<1x80x128xf32>
    %c0_13 = arith.constant 0 : index
    %c0_14 = arith.constant 0 : index
    %c0_15 = arith.constant 0 : index
    %23 = vector.load %arg7[%c0_13, %c0_14, %c0_15] : memref<1x80x128xf32, #tpu.memory_space<vmem>>, vector<1x80x128xf32>
    tpu.vector_store %arg7[%c0_13, %c0_14, %c0_15], %22 {strides = array<i32>} : memref<1x80x128xf32, #tpu.memory_space<vmem>>, vector<1x80x128xf32>,
    return
  }
  func.func @transform_0(%arg0: i32) -> (i32, i32, i32) {
    %c0_i32 = arith.constant 0 : i32
    %c0_i32_0 = arith.constant 0 : i32
    %c0_i32_1 = arith.constant 0 : i32
    return %arg0, %c0_i32, %c0_i32_0 : i32, i32, i32
  }
  func.func @transform_1(%arg0: i32) -> (i32, i32, i32) {
    %c0_i32 = arith.constant 0 : i32
    %c0_i32_0 = arith.constant 0 : i32
    %c0_i32_1 = arith.constant 0 : i32
    return %arg0, %c0_i32, %c0_i32_0 : i32, i32, i32
  }
  func.func @transform_2(%arg0: i32) -> (i32, i32) {
    %c0_i32 = arith.constant 0 : i32
    %c0_i32_0 = arith.constant 0 : i32
    %c0_i32_1 = arith.constant 0 : i32
    return %c0_i32, %c0_i32_0 : i32, i32
  }
  func.func @transform_3(%arg0: i32) -> (i32, i32) {
    %c0_i32 = arith.constant 0 : i32
    %c0_i32_0 = arith.constant 0 : i32
    %c0_i32_1 = arith.constant 0 : i32
    return %c0_i32, %c0_i32_0 : i32, i32
  }
  func.func @transform_4(%arg0: i32) -> (i32, i32) {
    %c0_i32 = arith.constant 0 : i32
    %c0_i32_0 = arith.constant 0 : i32
    %c0_i32_1 = arith.constant 0 : i32
    return %c0_i32, %c0_i32_0 : i32, i32
  }
  func.func @transform_5(%arg0: i32) -> (i32, i32) {
    %c0_i32 = arith.constant 0 : i32
    %c0_i32_0 = arith.constant 0 : i32
    %c0_i32_1 = arith.constant 0 : i32
    return %c0_i32, %c0_i32_0 : i32, i32
  }
  func.func @transform_6(%arg0: i32) -> (i32, i32, i32) {
    %c0_i32 = arith.constant 0 : i32
    %c0_i32_0 = arith.constant 0 : i32
    %c0_i32_1 = arith.constant 0 : i32
    return %arg0, %c0_i32, %c0_i32_0 : i32, i32, i32
  }
}

</mosaic_0001>

<llo_original>
// kernel: basic_block_forward.3
$region0: #{basic_block_forward.3}
  #allocation0 [shape = 'u32[]', space=smem, size = 0x4, offset = 0x4, fixed_abs, tag = 'smem constant byte address 0x4 - core index']
  #allocation1 [shape = 'u32[144,128]{1,0:T(1,128)}', space=vmem, size = 0x12000, scoped, tag = 'internal scratch']
  %s0 = inlined_call_operand.vmem [shape: bf16[8,100,128], index: 0, kind: input, shape index: {}]
  %s1 = inlined_call_operand.vmem [shape: bf16[9,128,128], index: 1, kind: input, shape index: {}]
  %s2 = inlined_call_operand.vmem [shape: f32[80,1], index: 2, kind: input, shape index: {}]
  %s3 = inlined_call_operand.vmem [shape: bf16[2,80,128], index: 3, kind: output, shape index: {0}]
  %s4 = inlined_call_operand.vmem [shape: f32[2,8,128], index: 4, kind: output, shape index: {1}]
  %5 = xla_tuple %s3, %s4
  %s6 = sld [smem:[#allocation0]]
  $region53: #{basic_block_forward.3} parent=0
    _
  %s8 = ssub.s32 1, %s6
  %s9 = scalar_select 0, %s8, %s6
  loop: start=0, step=1, limit=4
  $region2: #{basic_block_forward.3} parent=0 // loop_pre_header
    _
  $region3: #{basic_block_forward.3} parent=0 // loop_header
    %s11 = sphi 0, %s15
    %p12 = scmp.ge.s32.totalorder %s11, 4
    %s21 = sphi 0, %s23
    %s24 = sphi 0, %s21
    %s25 = sphi 0, %s24
    %s41 = sphi 0, %s25
    %s45 = sphi 0, %s45
    %s47 = sphi 0, %s45
    %s48 = sphi 0, %s47
    %s62 = sphi 0, %s48
    %s66 = sphi 0, %s66
    %s68 = sphi 0, %s66
    %s69 = sphi 0, %s68
    %s83 = sphi 0, %s69
    %s89 = sphi 0, %s91
    %s92 = sphi 0, %s89
    %s93 = sphi 0, %s92
    %s109 = sphi 0, %s93
    %s115 = sphi 0, %s117
    %s118 = sphi 0, %s115
    %s119 = sphi 0, %s118
    %s135 = sphi 0, %s119
  $region4: #{basic_block_forward.3} parent=0 // loop_header_branch
    %14 = sbr.rel (%p12) target = $region8
  $region5: #{basic_block_forward.3} parent=0 // loop_body
    %s16 = ssub.s32 %s11, 1
    %s17 = ssub.s32 %s11, 2
    %s18 = sadd.s32 %s11, 1
    %s19 = ssub.s32 %s11, %s18
    %p20 = scmp.eq.s32.totalorder %s19, 0
    %s22 = sadd.s32 %s21, 1
    %s23 = scalar_select %p20, %s21, %s22
    %p26 = pneg %p20
    %p27 = scmp.eq.s32.totalorder %s11, 1
    %p28 = por %p26, %p27
    %p29 = scmp.ne.s32.totalorder %s21, %s24
    %p30 = scmp.eq.s32.totalorder %s11, 0
    %p31 = por %p29, %p30
    %p32 = scmp.ne.s32.totalorder %s21, %s24
    %p33 = scmp.eq.s32.totalorder %s16, 1
    %p34 = por %p32, %p33
    %p35 = scmp.ne.s32.totalorder %s24, %s25
    %p36 = scmp.eq.s32.totalorder %s16, 0
    %p37 = por %p35, %p36
    %p38 = scmp.ne.s32.totalorder %s24, %s25
    %p39 = scmp.eq.s32.totalorder %s17, 1
    %p40 = por %p38, %p39
    %p42 = scmp.ne.s32.totalorder %s25, %s41
    %p43 = scmp.eq.s32.totalorder %s17, 0
    %p44 = por %p42, %p43
    %s46 = sadd.s32 %s45, 1
    %p49 = scmp.eq.s32.totalorder %s11, 1
    %p50 = scmp.ne.s32.totalorder %s45, %s47
    %p51 = scmp.eq.s32.totalorder %s11, 0
    %p52 = por %p50, %p51
    %p53 = scmp.ne.s32.totalorder %s45, %s47
    %p54 = scmp.eq.s32.totalorder %s16, 1
    %p55 = por %p53, %p54
    %p56 = scmp.ne.s32.totalorder %s47, %s48
    %p57 = scmp.eq.s32.totalorder %s16, 0
    %p58 = por %p56, %p57
    %p59 = scmp.ne.s32.totalorder %s47, %s48
    %p60 = scmp.eq.s32.totalorder %s17, 1
    %p61 = por %p59, %p60
    %p63 = scmp.ne.s32.totalorder %s48, %s62
    %p64 = scmp.eq.s32.totalorder %s17, 0
    %p65 = por %p63, %p64
    %s67 = sadd.s32 %s66, 1
    %p70 = scmp.eq.s32.totalorder %s11, 1
    %p71 = scmp.ne.s32.totalorder %s66, %s68
    %p72 = scmp.eq.s32.totalorder %s11, 0
    %p73 = por %p71, %p72
    %p74 = scmp.ne.s32.totalorder %s66, %s68
    %p75 = scmp.eq.s32.totalorder %s16, 1
    %p76 = por %p74, %p75
    %p77 = scmp.ne.s32.totalorder %s68, %s69
    %p78 = scmp.eq.s32.totalorder %s16, 0
    %p79 = por %p77, %p78
    %p80 = scmp.ne.s32.totalorder %s68, %s69
    %p81 = scmp.eq.s32.totalorder %s17, 1
    %p82 = por %p80, %p81
    %p84 = scmp.ne.s32.totalorder %s69, %s83
    %p85 = scmp.eq.s32.totalorder %s17, 0
    %p86 = por %p84, %p85
    %s87 = ssub.s32 %s11, %s18
    %p88 = scmp.eq.s32.totalorder %s87, 0
    %s90 = sadd.s32 %s89, 1
    %s91 = scalar_select %p88, %s89, %s90
    %p94 = pneg %p88
    %p95 = scmp.eq.s32.totalorder %s11, 1
    %p96 = por %p94, %p95
    %p97 = scmp.ne.s32.totalorder %s89, %s92
    %p98 = scmp.eq.s32.totalorder %s11, 0
    %p99 = por %p97, %p98
    %p100 = scmp.ne.s32.totalorder %s89, %s92
    %p101 = scmp.eq.s32.totalorder %s16, 1
    %p102 = por %p100, %p101
    %p103 = scmp.ne.s32.totalorder %s92, %s93
    %p104 = scmp.eq.s32.totalorder %s16, 0
    %p105 = por %p103, %p104
    %p106 = scmp.ne.s32.totalorder %s92, %s93
    %p107 = scmp.eq.s32.totalorder %s17, 1
    %p108 = por %p106, %p107
    %p110 = scmp.ne.s32.totalorder %s93, %s109
    %p111 = scmp.eq.s32.totalorder %s17, 0
    %p112 = por %p110, %p111
    %s113 = ssub.s32 %s11, %s18
    %p114 = scmp.eq.s32.totalorder %s113, 0
    %s116 = sadd.s32 %s115, 1
    %s117 = scalar_select %p114, %s115, %s116
    %p120 = pneg %p114
    %p121 = scmp.eq.s32.totalorder %s11, 1
    %p122 = por %p120, %p121
    %p123 = scmp.ne.s32.totalorder %s115, %s118
    %p124 = scmp.eq.s32.totalorder %s11, 0
    %p125 = por %p123, %p124
    %p126 = scmp.ne.s32.totalorder %s115, %s118
    %p127 = scmp.eq.s32.totalorder %s16, 1
    %p128 = por %p126, %p127
    %p129 = scmp.ne.s32.totalorder %s118, %s119
    %p130 = scmp.eq.s32.totalorder %s16, 0
    %p131 = por %p129, %p130
    %p132 = scmp.ne.s32.totalorder %s118, %s119
    %p133 = scmp.eq.s32.totalorder %s17, 1
    %p134 = por %p132, %p133
    %p136 = scmp.ne.s32.totalorder %s119, %s135
    %p137 = scmp.eq.s32.totalorder %s17, 0
    %p138 = por %p136, %p137
    %p139 = scmp.le.s32.totalorder 1, %s11
    %p140 = scmp.lt.s32.totalorder %s11, 3
    %p141 = pnand %p139, %p140
    %p142 = pneg %p141
    // Predicated region
    $region9: #{basic_block_forward.3} parent=5 // pred_check
      _
    $region10: #{basic_block_forward.3} parent=5 // pred_check_branch
      %144 = sbr.rel (%p141) target = $region12
    $region11: #{basic_block_forward.3} parent=5 // pred_region
      %s145 = ssub.s32 %s11, 1
      // Predicated region
      $region13: #{basic_block_forward.3} parent=11 // pred_check
        %p146 = pneg %p58
      $region14: #{basic_block_forward.3} parent=11 // pred_check_branch
        %148 = sbr.rel (%p146) target = $region16
      $region15: #{basic_block_forward.3} parent=11 // pred_region
        _
      $region16: #{basic_block_forward.3} parent=11 // pred_fallthru
        _
      // Predicated region
      $region17: #{basic_block_forward.3} parent=11 // pred_check
        %p149 = pneg %p79
      $region18: #{basic_block_forward.3} parent=11 // pred_check_branch
        %151 = sbr.rel (%p149) target = $region20
      $region19: #{basic_block_forward.3} parent=11 // pred_region
        _
      $region20: #{basic_block_forward.3} parent=11 // pred_fallthru
        _
    $region12: #{basic_block_forward.3} parent=5 // pred_fallthru
      _
    %p152 = scmp.lt.s32.totalorder %s11, 2
    // Predicated region
    $region21: #{basic_block_forward.3} parent=5 // pred_check
      %p153 = pneg %p152
    $region22: #{basic_block_forward.3} parent=5 // pred_check_branch
      %155 = sbr.rel (%p153) target = $region24
    $region23: #{basic_block_forward.3} parent=5 // pred_region
      // Predicated region
      $region25: #{basic_block_forward.3} parent=23 // pred_check
        %p156 = pneg %p31
      $region26: #{basic_block_forward.3} parent=23 // pred_check_branch
        %158 = sbr.rel (%p156) target = $region28
      $region27: #{basic_block_forward.3} parent=23 // pred_region
        %s159 = smul.u32 4, %s11
        %p160 = scmp.lt.s32.totalorder %s159, 7
        %s161 = scalar_select %p160, %s159, 7
        %s162 = smul.addr %s161, 13
        %s163 = smul.addr %s162, 4
        %s164 = scalar_lea.vmem %s0, %s163
        %s165 = smul.u32 4, %s11
      $region28: #{basic_block_forward.3} parent=23 // pred_fallthru
        _
    $region24: #{basic_block_forward.3} parent=5 // pred_fallthru
      _
    %p166 = scmp.le.s32.totalorder 1, %s11
    %p167 = scmp.lt.s32.totalorder %s11, 3
    %p168 = pnand %p166, %p167
    %p169 = pneg %p168
    // Predicated region
    $region29: #{basic_block_forward.3} parent=5 // pred_check
      _
    $region30: #{basic_block_forward.3} parent=5 // pred_check_branch
      %171 = sbr.rel (%p168) target = $region32
    $region31: #{basic_block_forward.3} parent=5 // pred_region
      %s172 = ssub.s32 %s11, 1
      %s173 = smul.u32 4, %s16
      %p174 = scmp.lt.s32.totalorder %s173, 7
      %s175 = scalar_select %p174, %s173, 7
      %s176 = smul.addr %s175, 13
      %s177 = smul.addr %s176, 4
      %s178 = scalar_lea.vmem %s0, %s177
      %p179 = pneg %p37
      %p180 = pneg %p34
      %p181 = pneg %p58
      %p182 = pneg %p55
      %p183 = pneg %p79
      %p184 = pneg %p76
      %p185 = pneg %p105
      %p186 = pneg %p102
      %p187 = scmp.lt.s32.totalorder %s16, 1
      %s188 = scalar_select %p187, %s16, 1
      %s189 = smul.addr %s188, 10
      %s190 = smul.addr %s189, 4
      %s191 = scalar_lea.vmem %s3, %s190
      %p192 = pneg %p131
      %p193 = pneg %p128
      %p194 = scmp.lt.s32.totalorder %s16, 1
      %s195 = scalar_select %p194, %s16, 1
      %s196 = smul.addr %s195, 8
      %s197 = scalar_lea.vmem %s4, %s196
      %s198 = smul.u32 4, %s16
      %p199 = scmp.lt.s32.totalorder %s198, 7
      %s200 = scalar_select %p199, %s198, 7
      %s201 = smul.addr %s200, 13
      %s202 = smul.addr %s201, 4
      %s203 = scalar_lea.vmem %s0, %s202
      %s204 = smul.u32 4, %s16
      %p205 = scmp.lt.s32.totalorder %s16, 1
      %s206 = scalar_select %p205, %s16, 1
      %s207 = smul.addr %s206, 10
      %s208 = smul.addr %s207, 4
      %s209 = scalar_lea.vmem %s3, %s208
      %p210 = scmp.lt.s32.totalorder %s16, 1
      %s211 = scalar_select %p210, %s16, 1
      %s212 = smul.addr %s211, 8
      %s213 = scalar_lea.vmem %s4, %s212
      %v215 = vld [vmem:[%s203] sm:$0xf]
      %v216 = vld [vmem:[%s203 + $0x4] sm:$0xf]
      %v217 = vld [vmem:[%s203 + $0x8] sm:$0xf]
      %v218 = vld [vmem:[%s203 + $0xc] sm:$0xf]
      %v219 = vld [vmem:[%s203 + $0x10] sm:$0xf]
      %v220 = vld [vmem:[%s203 + $0x14] sm:$0xf]
      %v221 = vld [vmem:[%s203 + $0x18] sm:$0xf]
      %v222 = vld [vmem:[%s203 + $0x1c] sm:$0xf]
      %v223 = vld [vmem:[%s203 + $0x20] sm:$0xf]
      %v224 = vld [vmem:[%s203 + $0x24] sm:$0xf]
      %v225 = vld [vmem:[%s1] sm:$0xf]
      %v226 = vld [vmem:[%s1 + $0x4] sm:$0xf]
      %v227 = vld [vmem:[%s1 + $0x8] sm:$0xf]
      %v228 = vld [vmem:[%s1 + $0xc] sm:$0xf]
      %v229 = vld [vmem:[%s1 + $0x10] sm:$0xf]
      %v230 = vld [vmem:[%s1 + $0x14] sm:$0xf]
      %v231 = vld [vmem:[%s1 + $0x18] sm:$0xf]
      %v232 = vld [vmem:[%s1 + $0x1c] sm:$0xf]
      %v233 = vld [vmem:[%s1 + $0x20] sm:$0xf]
      %v234 = vld [vmem:[%s1 + $0x24] sm:$0xf]
      %v235 = vld [vmem:[%s1 + $0x28] sm:$0xf]
      %v236 = vld [vmem:[%s1 + $0x2c] sm:$0xf]
      %v237 = vld [vmem:[%s1 + $0x30] sm:$0xf]
      %v238 = vld [vmem:[%s1 + $0x34] sm:$0xf]
      %v239 = vld [vmem:[%s1 + $0x38] sm:$0xf]
      %v240 = vld [vmem:[%s1 + $0x3c] sm:$0xf]
      %s241 = scalar_lea.vmem %s203, 52
      %v242 = vld [vmem:[%s241] sm:$0xf]
      %v243 = vld [vmem:[%s241 + $0x4] sm:$0xf]
      %v244 = vld [vmem:[%s241 + $0x8] sm:$0xf]
      %v245 = vld [vmem:[%s241 + $0xc] sm:$0xf]
      %v246 = vld [vmem:[%s241 + $0x10] sm:$0xf]
      %v247 = vld [vmem:[%s241 + $0x14] sm:$0xf]
      %v248 = vld [vmem:[%s241 + $0x18] sm:$0xf]
      %v249 = vld [vmem:[%s241 + $0x1c] sm:$0xf]
      %v250 = vld [vmem:[%s241 + $0x20] sm:$0xf]
      %v251 = vld [vmem:[%s241 + $0x24] sm:$0xf]
      %s252 = scalar_lea.vmem %s1, 64
      %v253 = vld [vmem:[%s252] sm:$0xf]
      %v254 = vld [vmem:[%s252 + $0x4] sm:$0xf]
      %v255 = vld [vmem:[%s252 + $0x8] sm:$0xf]
      %v256 = vld [vmem:[%s252 + $0xc] sm:$0xf]
      %v257 = vld [vmem:[%s252 + $0x10] sm:$0xf]
      %v258 = vld [vmem:[%s252 + $0x14] sm:$0xf]
      %v259 = vld [vmem:[%s252 + $0x18] sm:$0xf]
      %v260 = vld [vmem:[%s252 + $0x1c] sm:$0xf]
      %v261 = vld [vmem:[%s252 + $0x20] sm:$0xf]
      %v262 = vld [vmem:[%s252 + $0x24] sm:$0xf]
      %v263 = vld [vmem:[%s252 + $0x28] sm:$0xf]
      %v264 = vld [vmem:[%s252 + $0x2c] sm:$0xf]
      %v265 = vld [vmem:[%s252 + $0x30] sm:$0xf]
      %v266 = vld [vmem:[%s252 + $0x34] sm:$0xf]
      %v267 = vld [vmem:[%s252 + $0x38] sm:$0xf]
      %v268 = vld [vmem:[%s252 + $0x3c] sm:$0xf]
      %v279 = vunpack.c.l.b16 %v242
      %v280 = vunpack.c.l.b16 %v243
      %v281 = vunpack.c.l.b16 %v244
      %v282 = vunpack.c.l.b16 %v245
      %v283 = vunpack.c.l.b16 %v246
      %v284 = vunpack.c.l.b16 %v247
      %v285 = vunpack.c.l.b16 %v248
      %v286 = vunpack.c.l.b16 %v249
      %v287 = vunpack.c.l.b16 %v250
      %v288 = vunpack.c.l.b16 %v251
      %v289 = vpack.c.b16 %v280, %v279
      %v290 = vpack.c.b16 %v282, %v281
      %v291 = vpack.c.b16 %v284, %v283
      %v292 = vpack.c.b16 %v286, %v285
      %v293 = vpack.c.b16 %v288, %v287
      %v315 = vunpack.c.l.b16 %v253
      %v316 = vunpack.c.l.b16 %v254
      %v317 = vunpack.c.l.b16 %v255
      %v318 = vunpack.c.l.b16 %v256
      %v319 = vunpack.c.l.b16 %v257
      %v320 = vunpack.c.l.b16 %v258
      %v321 = vunpack.c.l.b16 %v259
      %v322 = vunpack.c.l.b16 %v260
      %v323 = vunpack.c.l.b16 %v261
      %v324 = vunpack.c.l.b16 %v262
      %v325 = vunpack.c.l.b16 %v263
      %v326 = vunpack.c.l.b16 %v264
      %v327 = vunpack.c.l.b16 %v265
      %v328 = vunpack.c.l.b16 %v266
      %v329 = vunpack.c.l.b16 %v267
      %v330 = vunpack.c.l.b16 %v268
      %v331 = vpack.c.b16 %v316, %v315
      %v332 = vpack.c.b16 %v318, %v317
      %v333 = vpack.c.b16 %v320, %v319
      %v334 = vpack.c.b16 %v322, %v321
      %v335 = vpack.c.b16 %v324, %v323
      %v336 = vpack.c.b16 %v326, %v325
      %v337 = vpack.c.b16 %v328, %v327
      %v338 = vpack.c.b16 %v330, %v329
      %347 = vmatprep.subr.bf16.mxu0 0
      %348 = vmatpush1.bf16.msra.mxu0 %v338
      %349 = vmatprep.subr.bf16.mxu0 0
      %350 = vmatpush1.bf16.msra.mxu0 %v337
      %351 = vmatprep.subr.bf16.mxu0 0
      %352 = vmatpush1.bf16.msra.mxu0 %v336
      %353 = vmatprep.subr.bf16.mxu0 0
      %354 = vmatpush1.bf16.msra.mxu0 %v335
      %355 = vmatprep.subr.bf16.mxu0 0
      %356 = vmatpush1.bf16.msra.mxu0 %v334
      %357 = vmatprep.subr.bf16.mxu0 0
      %358 = vmatpush1.bf16.msra.mxu0 %v333
      %359 = vmatprep.subr.bf16.mxu0 0
      %360 = vmatpush1.bf16.msra.mxu0 %v332
      %361 = vmatprep.subr.bf16.mxu0 0
      %362 = vmatpush1.bf16.msra.mxu0 %v331
      %363 = vmatprep.subr.bf16.mxu0 0
      %364 = vmatpush2.bf16.msra.mxu0 0
      %365 = vmatprep.subr.bf16.mxu0 0
      %366 = vmatpush2.bf16.msra.mxu0 0
      %367 = vmatprep.subr.bf16.mxu0 0
      %368 = vmatpush2.bf16.msra.mxu0 0
      %369 = vmatprep.subr.bf16.mxu0 0
      %370 = vmatpush2.bf16.msra.mxu0 0
      %371 = vmatprep.subr.bf16.mxu0 0
      %372 = vmatpush2.bf16.msra.mxu0 0
      %373 = vmatprep.subr.bf16.mxu0 0
      %374 = vmatpush2.bf16.msra.mxu0 0
      %375 = vmatprep.subr.bf16.mxu0 0
      %376 = vmatpush2.bf16.msra.mxu0 0
      %377 = vmatprep.subr.bf16.mxu0 0
      %378 = vmatpush2.bf16.msra.mxu0 0
      %379 = vmatprep.mubr.bf16.mxu0 0
      %380 = vmatmul.mubr.bf16.gmra.mxu0 %v289
      %v381 = vpop.f32.mrf.mxu0
      %v382 = vadd.f32 0.0, %v381
      %v383 = vpop.f32.mrf.mxu0
      %v384 = vpop.f32.mrf.mxu0
      %v385 = vadd.f32 0.0, %v384
      %v386 = vpop.f32.mrf.mxu0
      %387 = vmatprep.mubr.bf16.mxu0 0
      %388 = vmatmul.mubr.bf16.gmra.mxu0 %v290
      %v389 = vpop.f32.mrf.mxu0
      %v390 = vadd.f32 0.0, %v389
      %v391 = vpop.f32.mrf.mxu0
      %v392 = vpop.f32.mrf.mxu0
      %v393 = vadd.f32 0.0, %v392
      %v394 = vpop.f32.mrf.mxu0
      %395 = vmatprep.mubr.bf16.mxu0 0
      %396 = vmatmul.mubr.bf16.gmra.mxu0 %v291
      %v397 = vpop.f32.mrf.mxu0
      %v398 = vadd.f32 0.0, %v397
      %v399 = vpop.f32.mrf.mxu0
      %v400 = vpop.f32.mrf.mxu0
      %v401 = vadd.f32 0.0, %v400
      %v402 = vpop.f32.mrf.mxu0
      %403 = vmatprep.mubr.bf16.mxu0 0
      %404 = vmatmul.mubr.bf16.gmra.mxu0 %v292
      %v405 = vpop.f32.mrf.mxu0
      %v406 = vadd.f32 0.0, %v405
      %v407 = vpop.f32.mrf.mxu0
      %v408 = vpop.f32.mrf.mxu0
      %v409 = vadd.f32 0.0, %v408
      %v410 = vpop.f32.mrf.mxu0
      %411 = vmatprep.mubr.bf16.mxu0 0
      %412 = vmatmul.mubr.bf16.gmra.mxu0 %v293
      %v413 = vpop.f32.mrf.mxu0
      %v414 = vadd.f32 0.0, %v413
      %v415 = vpop.f32.mrf.mxu0
      %v416 = vpop.f32.mrf.mxu0
      %v417 = vadd.f32 0.0, %v416
      %v418 = vpop.f32.mrf.mxu0
      %419 = vdwg.mxu0
      %v430 = vunpack.c.l.b16 %v215
      %v431 = vunpack.c.l.b16 %v216
      %v432 = vunpack.c.l.b16 %v217
      %v433 = vunpack.c.l.b16 %v218
      %v434 = vunpack.c.l.b16 %v219
      %v435 = vunpack.c.l.b16 %v220
      %v436 = vunpack.c.l.b16 %v221
      %v437 = vunpack.c.l.b16 %v222
      %v438 = vunpack.c.l.b16 %v223
      %v439 = vunpack.c.l.b16 %v224
      %v440 = vpack.c.b16 %v431, %v430
      %v441 = vpack.c.b16 %v433, %v432
      %v442 = vpack.c.b16 %v435, %v434
      %v443 = vpack.c.b16 %v437, %v436
      %v444 = vpack.c.b16 %v439, %v438
      %v466 = vunpack.c.l.b16 %v225
      %v467 = vunpack.c.l.b16 %v226
      %v468 = vunpack.c.l.b16 %v227
      %v469 = vunpack.c.l.b16 %v228
      %v470 = vunpack.c.l.b16 %v229
      %v471 = vunpack.c.l.b16 %v230
      %v472 = vunpack.c.l.b16 %v231
      %v473 = vunpack.c.l.b16 %v232
      %v474 = vunpack.c.l.b16 %v233
      %v475 = vunpack.c.l.b16 %v234
      %v476 = vunpack.c.l.b16 %v235
      %v477 = vunpack.c.l.b16 %v236
      %v478 = vunpack.c.l.b16 %v237
      %v479 = vunpack.c.l.b16 %v238
      %v480 = vunpack.c.l.b16 %v239
      %v481 = vunpack.c.l.b16 %v240
      %v482 = vpack.c.b16 %v467, %v466
      %v483 = vpack.c.b16 %v469, %v468
      %v484 = vpack.c.b16 %v471, %v470
      %v485 = vpack.c.b16 %v473, %v472
      %v486 = vpack.c.b16 %v475, %v474
      %v487 = vpack.c.b16 %v477, %v476
      %v488 = vpack.c.b16 %v479, %v478
      %v489 = vpack.c.b16 %v481, %v480
      %498 = vmatprep.subr.bf16.mxu0 0
      %499 = vmatpush1.bf16.msra.mxu0 %v489
      %500 = vmatprep.subr.bf16.mxu0 0
      %501 = vmatpush1.bf16.msra.mxu0 %v488
      %502 = vmatprep.subr.bf16.mxu0 0
      %503 = vmatpush1.bf16.msra.mxu0 %v487
      %504 = vmatprep.subr.bf16.mxu0 0
      %505 = vmatpush1.bf16.msra.mxu0 %v486
      %506 = vmatprep.subr.bf16.mxu0 0
      %507 = vmatpush1.bf16.msra.mxu0 %v485
      %508 = vmatprep.subr.bf16.mxu0 0
      %509 = vmatpush1.bf16.msra.mxu0 %v484
      %510 = vmatprep.subr.bf16.mxu0 0
      %511 = vmatpush1.bf16.msra.mxu0 %v483
      %512 = vmatprep.subr.bf16.mxu0 0
      %513 = vmatpush1.bf16.msra.mxu0 %v482
      %514 = vmatprep.subr.bf16.mxu0 0
      %515 = vmatpush2.bf16.msra.mxu0 0
      %516 = vmatprep.subr.bf16.mxu0 0
      %517 = vmatpush2.bf16.msra.mxu0 0
      %518 = vmatprep.subr.bf16.mxu0 0
      %519 = vmatpush2.bf16.msra.mxu0 0
      %520 = vmatprep.subr.bf16.mxu0 0
      %521 = vmatpush2.bf16.msra.mxu0 0
      %522 = vmatprep.subr.bf16.mxu0 0
      %523 = vmatpush2.bf16.msra.mxu0 0
      %524 = vmatprep.subr.bf16.mxu0 0
      %525 = vmatpush2.bf16.msra.mxu0 0
      %526 = vmatprep.subr.bf16.mxu0 0
      %527 = vmatpush2.bf16.msra.mxu0 0
      %528 = vmatprep.subr.bf16.mxu0 0
      %529 = vmatpush2.bf16.msra.mxu0 0
      %530 = vmatprep.mubr.bf16.mxu0 0
      %531 = vmatmul.mubr.bf16.gmra.mxu0 %v440
      %v532 = vpop.f32.mrf.mxu0
      %v533 = vadd.f32 %v382, %v532
      %v534 = vpop.f32.mrf.mxu0
      %v535 = vpop.f32.mrf.mxu0
      %v536 = vadd.f32 %v385, %v535
      %v537 = vpop.f32.mrf.mxu0
      %538 = vmatprep.mubr.bf16.mxu0 0
      %539 = vmatmul.mubr.bf16.gmra.mxu0 %v441
      %v540 = vpop.f32.mrf.mxu0
      %v541 = vadd.f32 %v390, %v540
      %v542 = vpop.f32.mrf.mxu0
      %v543 = vpop.f32.mrf.mxu0
      %v544 = vadd.f32 %v393, %v543
      %v545 = vpop.f32.mrf.mxu0
      %546 = vmatprep.mubr.bf16.mxu0 0
      %547 = vmatmul.mubr.bf16.gmra.mxu0 %v442
      %v548 = vpop.f32.mrf.mxu0
      %v549 = vadd.f32 %v398, %v548
      %v550 = vpop.f32.mrf.mxu0
      %v551 = vpop.f32.mrf.mxu0
      %v552 = vadd.f32 %v401, %v551
      %v553 = vpop.f32.mrf.mxu0
      %554 = vmatprep.mubr.bf16.mxu0 0
      %555 = vmatmul.mubr.bf16.gmra.mxu0 %v443
      %v556 = vpop.f32.mrf.mxu0
      %v557 = vadd.f32 %v406, %v556
      %v558 = vpop.f32.mrf.mxu0
      %v559 = vpop.f32.mrf.mxu0
      %v560 = vadd.f32 %v409, %v559
      %v561 = vpop.f32.mrf.mxu0
      %562 = vmatprep.mubr.bf16.mxu0 0
      %563 = vmatmul.mubr.bf16.gmra.mxu0 %v444
      %v564 = vpop.f32.mrf.mxu0
      %v565 = vadd.f32 %v414, %v564
      %v566 = vpop.f32.mrf.mxu0
      %v567 = vpop.f32.mrf.mxu0
      %v568 = vadd.f32 %v417, %v567
      %v569 = vpop.f32.mrf.mxu0
      %570 = vdwg.mxu0
      %v571 = vld [vmem:[%s203] sm:$0xf]
      %v572 = vld [vmem:[%s203 + $0x4] sm:$0xf]
      %v573 = vld [vmem:[%s203 + $0x8] sm:$0xf]
      %v574 = vld [vmem:[%s203 + $0xc] sm:$0xf]
      %v575 = vld [vmem:[%s203 + $0x10] sm:$0xf]
      %v576 = vld [vmem:[%s203 + $0x14] sm:$0xf]
      %v577 = vld [vmem:[%s203 + $0x18] sm:$0xf]
      %v578 = vld [vmem:[%s203 + $0x1c] sm:$0xf]
      %v579 = vld [vmem:[%s203 + $0x20] sm:$0xf]
      %v580 = vld [vmem:[%s203 + $0x24] sm:$0xf]
      %v581 = vld [vmem:[%s203 + $0x28] sm:$0x1]
      %s582 = scalar_lea.vmem %s1, 128
      %v583 = vld [vmem:[%s582] sm:$0xf]
      %v584 = vld [vmem:[%s582 + $0x4] sm:$0xf]
      %v585 = vld [vmem:[%s582 + $0x8] sm:$0xf]
      %v586 = vld [vmem:[%s582 + $0xc] sm:$0xf]
      %v587 = vld [vmem:[%s582 + $0x10] sm:$0xf]
      %v588 = vld [vmem:[%s582 + $0x14] sm:$0xf]
      %v589 = vld [vmem:[%s582 + $0x18] sm:$0xf]
      %v590 = vld [vmem:[%s582 + $0x1c] sm:$0xf]
      %v591 = vld [vmem:[%s582 + $0x20] sm:$0xf]
      %v592 = vld [vmem:[%s582 + $0x24] sm:$0xf]
      %v593 = vld [vmem:[%s582 + $0x28] sm:$0xf]
      %v594 = vld [vmem:[%s582 + $0x2c] sm:$0xf]
      %v595 = vld [vmem:[%s582 + $0x30] sm:$0xf]
      %v596 = vld [vmem:[%s582 + $0x34] sm:$0xf]
      %v597 = vld [vmem:[%s582 + $0x38] sm:$0xf]
      %v598 = vld [vmem:[%s582 + $0x3c] sm:$0xf]
      %v610 = vunpack.c.l.b16 %v571
      %v611 = vunpack.c.l.b16 %v572
      %v612 = vunpack.c.l.b16 %v573
      %v613 = vunpack.c.l.b16 %v574
      %v614 = vunpack.c.l.b16 %v575
      %v615 = vunpack.c.l.b16 %v576
      %v616 = vunpack.c.l.b16 %v577
      %v617 = vunpack.c.l.b16 %v578
      %v618 = vunpack.c.l.b16 %v579
      %v619 = vunpack.c.l.b16 %v580
      %v620 = vunpack.c.l.b16 %v581
      %v621 = vpack.c.b16 %v611, %v610
      %v622 = vpack.c.b16 %v613, %v612
      %v623 = vpack.c.b16 %v615, %v614
      %v624 = vpack.c.b16 %v617, %v616
      %v625 = vpack.c.b16 %v619, %v618
      %v626 = vpack.c.b16 %v620, %v620
      %vm627 = vsmask.f32 7424
      %v629 = vshrl.u32 %v621, 16
      %v631 = vshll.u32 %v621, 16
      %v633 = vrot.slane %v631, 1
      %v634 = vor.u32 %v629, %v633
      %v636 = vshll.u32 %v622, 16
      %v638 = vrot.slane %v636, 1
      %v639 = vsel %vm627, %v634, %v638
      %v640 = vshrl.u32 %v622, 16
      %v642 = vor.u32 %v640, %v638
      %v644 = vshll.u32 %v623, 16
      %v646 = vrot.slane %v644, 1
      %v647 = vsel %vm627, %v642, %v646
      %v648 = vshrl.u32 %v623, 16
      %v650 = vor.u32 %v648, %v646
      %v652 = vshll.u32 %v624, 16
      %v654 = vrot.slane %v652, 1
      %v655 = vsel %vm627, %v650, %v654
      %v656 = vshrl.u32 %v624, 16
      %v658 = vor.u32 %v656, %v654
      %v660 = vshll.u32 %v625, 16
      %v662 = vrot.slane %v660, 1
      %v663 = vsel %vm627, %v658, %v662
      %v664 = vshrl.u32 %v625, 16
      %v666 = vor.u32 %v664, %v662
      %v668 = vshll.u32 %v626, 16
      %v670 = vrot.slane %v668, 1
      %v671 = vsel %vm627, %v666, %v670
      %v693 = vunpack.c.l.b16 %v583
      %v694 = vunpack.c.l.b16 %v584
      %v695 = vunpack.c.l.b16 %v585
      %v696 = vunpack.c.l.b16 %v586
      %v697 = vunpack.c.l.b16 %v587
      %v698 = vunpack.c.l.b16 %v588
      %v699 = vunpack.c.l.b16 %v589
      %v700 = vunpack.c.l.b16 %v590
      %v701 = vunpack.c.l.b16 %v591
      %v702 = vunpack.c.l.b16 %v592
      %v703 = vunpack.c.l.b16 %v593
      %v704 = vunpack.c.l.b16 %v594
      %v705 = vunpack.c.l.b16 %v595
      %v706 = vunpack.c.l.b16 %v596
      %v707 = vunpack.c.l.b16 %v597
      %v708 = vunpack.c.l.b16 %v598
      %v709 = vpack.c.b16 %v694, %v693
      %v710 = vpack.c.b16 %v696, %v695
      %v711 = vpack.c.b16 %v698, %v697
      %v712 = vpack.c.b16 %v700, %v699
      %v713 = vpack.c.b16 %v702, %v701
      %v714 = vpack.c.b16 %v704, %v703
      %v715 = vpack.c.b16 %v706, %v705
      %v716 = vpack.c.b16 %v708, %v707
      %725 = vmatprep.subr.bf16.mxu0 0
      %726 = vmatpush1.bf16.msra.mxu0 %v716
      %727 = vmatprep.subr.bf16.mxu0 0
      %728 = vmatpush1.bf16.msra.mxu0 %v715
      %729 = vmatprep.subr.bf16.mxu0 0
      %730 = vmatpush1.bf16.msra.mxu0 %v714
      %731 = vmatprep.subr.bf16.mxu0 0
      %732 = vmatpush1.bf16.msra.mxu0 %v713
      %733 = vmatprep.subr.bf16.mxu0 0
      %734 = vmatpush1.bf16.msra.mxu0 %v712
      %735 = vmatprep.subr.bf16.mxu0 0
      %736 = vmatpush1.bf16.msra.mxu0 %v711
      %737 = vmatprep.subr.bf16.mxu0 0
      %738 = vmatpush1.bf16.msra.mxu0 %v710
      %739 = vmatprep.subr.bf16.mxu0 0
      %740 = vmatpush1.bf16.msra.mxu0 %v709
      %741 = vmatprep.subr.bf16.mxu0 0
      %742 = vmatpush2.bf16.msra.mxu0 0
      %743 = vmatprep.subr.bf16.mxu0 0
      %744 = vmatpush2.bf16.msra.mxu0 0
      %745 = vmatprep.subr.bf16.mxu0 0
      %746 = vmatpush2.bf16.msra.mxu0 0
      %747 = vmatprep.subr.bf16.mxu0 0
      %748 = vmatpush2.bf16.msra.mxu0 0
      %749 = vmatprep.subr.bf16.mxu0 0
      %750 = vmatpush2.bf16.msra.mxu0 0
      %751 = vmatprep.subr.bf16.mxu0 0
      %752 = vmatpush2.bf16.msra.mxu0 0
      %753 = vmatprep.subr.bf16.mxu0 0
      %754 = vmatpush2.bf16.msra.mxu0 0
      %755 = vmatprep.subr.bf16.mxu0 0
      %756 = vmatpush2.bf16.msra.mxu0 0
      %757 = vmatprep.mubr.bf16.mxu0 0
      %758 = vmatmul.mubr.bf16.gmra.mxu0 %v639
      %v759 = vpop.f32.mrf.mxu0
      %v760 = vadd.f32 0.0, %v759
      %v761 = vpop.f32.mrf.mxu0
      %v762 = vpop.f32.mrf.mxu0
      %v763 = vadd.f32 0.0, %v762
      %v764 = vpop.f32.mrf.mxu0
      %765 = vmatprep.mubr.bf16.mxu0 0
      %766 = vmatmul.mubr.bf16.gmra.mxu0 %v647
      %v767 = vpop.f32.mrf.mxu0
      %v768 = vadd.f32 0.0, %v767
      %v769 = vpop.f32.mrf.mxu0
      %v770 = vpop.f32.mrf.mxu0
      %v771 = vadd.f32 0.0, %v770
      %v772 = vpop.f32.mrf.mxu0
      %773 = vmatprep.mubr.bf16.mxu0 0
      %774 = vmatmul.mubr.bf16.gmra.mxu0 %v655
      %v775 = vpop.f32.mrf.mxu0
      %v776 = vadd.f32 0.0, %v775
      %v777 = vpop.f32.mrf.mxu0
      %v778 = vpop.f32.mrf.mxu0
      %v779 = vadd.f32 0.0, %v778
      %v780 = vpop.f32.mrf.mxu0
      %781 = vmatprep.mubr.bf16.mxu0 0
      %782 = vmatmul.mubr.bf16.gmra.mxu0 %v663
      %v783 = vpop.f32.mrf.mxu0
      %v784 = vadd.f32 0.0, %v783
      %v785 = vpop.f32.mrf.mxu0
      %v786 = vpop.f32.mrf.mxu0
      %v787 = vadd.f32 0.0, %v786
      %v788 = vpop.f32.mrf.mxu0
      %789 = vmatprep.mubr.bf16.mxu0 0
      %790 = vmatmul.mubr.bf16.gmra.mxu0 %v671
      %v791 = vpop.f32.mrf.mxu0
      %v792 = vadd.f32 0.0, %v791
      %v793 = vpop.f32.mrf.mxu0
      %v794 = vpop.f32.mrf.mxu0
      %v795 = vadd.f32 0.0, %v794
      %v796 = vpop.f32.mrf.mxu0
      %797 = vdwg.mxu0
      %v798 = vadd.f32 %v533, %v760
      %v799 = vadd.f32 %v536, %v763
      %v800 = vadd.f32 %v541, %v768
      %v801 = vadd.f32 %v544, %v771
      %v802 = vadd.f32 %v549, %v776
      %v803 = vadd.f32 %v552, %v779
      %v804 = vadd.f32 %v557, %v784
      %v805 = vadd.f32 %v560, %v787
      %v806 = vadd.f32 %v565, %v792
      %v807 = vadd.f32 %v568, %v795
      %s808 = scalar_lea.vmem %s203, 104
      %v809 = vld [vmem:[%s808] sm:$0xf]
      %v810 = vld [vmem:[%s808 + $0x4] sm:$0xf]
      %v811 = vld [vmem:[%s808 + $0x8] sm:$0xf]
      %v812 = vld [vmem:[%s808 + $0xc] sm:$0xf]
      %v813 = vld [vmem:[%s808 + $0x10] sm:$0xf]
      %v814 = vld [vmem:[%s808 + $0x14] sm:$0xf]
      %v815 = vld [vmem:[%s808 + $0x18] sm:$0xf]
      %v816 = vld [vmem:[%s808 + $0x1c] sm:$0xf]
      %v817 = vld [vmem:[%s808 + $0x20] sm:$0xf]
      %v818 = vld [vmem:[%s808 + $0x24] sm:$0xf]
      %s819 = scalar_lea.vmem %s1, 192
      %v820 = vld [vmem:[%s819] sm:$0xf]
      %v821 = vld [vmem:[%s819 + $0x4] sm:$0xf]
      %v822 = vld [vmem:[%s819 + $0x8] sm:$0xf]
      %v823 = vld [vmem:[%s819 + $0xc] sm:$0xf]
      %v824 = vld [vmem:[%s819 + $0x10] sm:$0xf]
      %v825 = vld [vmem:[%s819 + $0x14] sm:$0xf]
      %v826 = vld [vmem:[%s819 + $0x18] sm:$0xf]
      %v827 = vld [vmem:[%s819 + $0x1c] sm:$0xf]
      %v828 = vld [vmem:[%s819 + $0x20] sm:$0xf]
      %v829 = vld [vmem:[%s819 + $0x24] sm:$0xf]
      %v830 = vld [vmem:[%s819 + $0x28] sm:$0xf]
      %v831 = vld [vmem:[%s819 + $0x2c] sm:$0xf]
      %v832 = vld [vmem:[%s819 + $0x30] sm:$0xf]
      %v833 = vld [vmem:[%s819 + $0x34] sm:$0xf]
      %v834 = vld [vmem:[%s819 + $0x38] sm:$0xf]
      %v835 = vld [vmem:[%s819 + $0x3c] sm:$0xf]
      %v846 = vunpack.c.l.b16 %v809
      %v847 = vunpack.c.l.b16 %v810
      %v848 = vunpack.c.l.b16 %v811
      %v849 = vunpack.c.l.b16 %v812
      %v850 = vunpack.c.l.b16 %v813
      %v851 = vunpack.c.l.b16 %v814
      %v852 = vunpack.c.l.b16 %v815
      %v853 = vunpack.c.l.b16 %v816
      %v854 = vunpack.c.l.b16 %v817
      %v855 = vunpack.c.l.b16 %v818
      %v856 = vpack.c.b16 %v847, %v846
      %v857 = vpack.c.b16 %v849, %v848
      %v858 = vpack.c.b16 %v851, %v850
      %v859 = vpack.c.b16 %v853, %v852
      %v860 = vpack.c.b16 %v855, %v854
      %v882 = vunpack.c.l.b16 %v820
      %v883 = vunpack.c.l.b16 %v821
      %v884 = vunpack.c.l.b16 %v822
      %v885 = vunpack.c.l.b16 %v823
      %v886 = vunpack.c.l.b16 %v824
      %v887 = vunpack.c.l.b16 %v825
      %v888 = vunpack.c.l.b16 %v826
      %v889 = vunpack.c.l.b16 %v827
      %v890 = vunpack.c.l.b16 %v828
      %v891 = vunpack.c.l.b16 %v829
      %v892 = vunpack.c.l.b16 %v830
      %v893 = vunpack.c.l.b16 %v831
      %v894 = vunpack.c.l.b16 %v832
      %v895 = vunpack.c.l.b16 %v833
      %v896 = vunpack.c.l.b16 %v834
      %v897 = vunpack.c.l.b16 %v835
      %v898 = vpack.c.b16 %v883, %v882
      %v899 = vpack.c.b16 %v885, %v884
      %v900 = vpack.c.b16 %v887, %v886
      %v901 = vpack.c.b16 %v889, %v888
      %v902 = vpack.c.b16 %v891, %v890
      %v903 = vpack.c.b16 %v893, %v892
      %v904 = vpack.c.b16 %v895, %v894
      %v905 = vpack.c.b16 %v897, %v896
      %914 = vmatprep.subr.bf16.mxu0 0
      %915 = vmatpush1.bf16.msra.mxu0 %v905
      %916 = vmatprep.subr.bf16.mxu0 0
      %917 = vmatpush1.bf16.msra.mxu0 %v904
      %918 = vmatprep.subr.bf16.mxu0 0
      %919 = vmatpush1.bf16.msra.mxu0 %v903
      %920 = vmatprep.subr.bf16.mxu0 0
      %921 = vmatpush1.bf16.msra.mxu0 %v902
      %922 = vmatprep.subr.bf16.mxu0 0
      %923 = vmatpush1.bf16.msra.mxu0 %v901
      %924 = vmatprep.subr.bf16.mxu0 0
      %925 = vmatpush1.bf16.msra.mxu0 %v900
      %926 = vmatprep.subr.bf16.mxu0 0
      %927 = vmatpush1.bf16.msra.mxu0 %v899
      %928 = vmatprep.subr.bf16.mxu0 0
      %929 = vmatpush1.bf16.msra.mxu0 %v898
      %930 = vmatprep.subr.bf16.mxu0 0
      %931 = vmatpush2.bf16.msra.mxu0 0
      %932 = vmatprep.subr.bf16.mxu0 0
      %933 = vmatpush2.bf16.msra.mxu0 0
      %934 = vmatprep.subr.bf16.mxu0 0
      %935 = vmatpush2.bf16.msra.mxu0 0
      %936 = vmatprep.subr.bf16.mxu0 0
      %937 = vmatpush2.bf16.msra.mxu0 0
      %938 = vmatprep.subr.bf16.mxu0 0
      %939 = vmatpush2.bf16.msra.mxu0 0
      %940 = vmatprep.subr.bf16.mxu0 0
      %941 = vmatpush2.bf16.msra.mxu0 0
      %942 = vmatprep.subr.bf16.mxu0 0
      %943 = vmatpush2.bf16.msra.mxu0 0
      %944 = vmatprep.subr.bf16.mxu0 0
      %945 = vmatpush2.bf16.msra.mxu0 0
      %946 = vmatprep.mubr.bf16.mxu0 0
      %947 = vmatmul.mubr.bf16.gmra.mxu0 %v856
      %v948 = vpop.f32.mrf.mxu0
      %v949 = vadd.f32 0.0, %v948
      %v950 = vpop.f32.mrf.mxu0
      %v951 = vpop.f32.mrf.mxu0
      %v952 = vadd.f32 0.0, %v951
      %v953 = vpop.f32.mrf.mxu0
      %954 = vmatprep.mubr.bf16.mxu0 0
      %955 = vmatmul.mubr.bf16.gmra.mxu0 %v857
      %v956 = vpop.f32.mrf.mxu0
      %v957 = vadd.f32 0.0, %v956
      %v958 = vpop.f32.mrf.mxu0
      %v959 = vpop.f32.mrf.mxu0
      %v960 = vadd.f32 0.0, %v959
      %v961 = vpop.f32.mrf.mxu0
      %962 = vmatprep.mubr.bf16.mxu0 0
      %963 = vmatmul.mubr.bf16.gmra.mxu0 %v858
      %v964 = vpop.f32.mrf.mxu0
      %v965 = vadd.f32 0.0, %v964
      %v966 = vpop.f32.mrf.mxu0
      %v967 = vpop.f32.mrf.mxu0
      %v968 = vadd.f32 0.0, %v967
      %v969 = vpop.f32.mrf.mxu0
      %970 = vmatprep.mubr.bf16.mxu0 0
      %971 = vmatmul.mubr.bf16.gmra.mxu0 %v859
      %v972 = vpop.f32.mrf.mxu0
      %v973 = vadd.f32 0.0, %v972
      %v974 = vpop.f32.mrf.mxu0
      %v975 = vpop.f32.mrf.mxu0
      %v976 = vadd.f32 0.0, %v975
      %v977 = vpop.f32.mrf.mxu0
      %978 = vmatprep.mubr.bf16.mxu0 0
      %979 = vmatmul.mubr.bf16.gmra.mxu0 %v860
      %v980 = vpop.f32.mrf.mxu0
      %v981 = vadd.f32 0.0, %v980
      %v982 = vpop.f32.mrf.mxu0
      %v983 = vpop.f32.mrf.mxu0
      %v984 = vadd.f32 0.0, %v983
      %v985 = vpop.f32.mrf.mxu0
      %986 = vdwg.mxu0
      %v987 = vadd.f32 %v798, %v949
      %v988 = vadd.f32 %v799, %v952
      %v989 = vadd.f32 %v800, %v957
      %v990 = vadd.f32 %v801, %v960
      %v991 = vadd.f32 %v802, %v965
      %v992 = vadd.f32 %v803, %v968
      %v993 = vadd.f32 %v804, %v973
      %v994 = vadd.f32 %v805, %v976
      %v995 = vadd.f32 %v806, %v981
      %v996 = vadd.f32 %v807, %v984
      %s997 = scalar_lea.vmem %s203, 156
      %v998 = vld [vmem:[%s997] sm:$0xf]
      %v999 = vld [vmem:[%s997 + $0x4] sm:$0xf]
      %v1000 = vld [vmem:[%s997 + $0x8] sm:$0xf]
      %v1001 = vld [vmem:[%s997 + $0xc] sm:$0xf]
      %v1002 = vld [vmem:[%s997 + $0x10] sm:$0xf]
      %v1003 = vld [vmem:[%s997 + $0x14] sm:$0xf]
      %v1004 = vld [vmem:[%s997 + $0x18] sm:$0xf]
      %v1005 = vld [vmem:[%s997 + $0x1c] sm:$0xf]
      %v1006 = vld [vmem:[%s997 + $0x20] sm:$0xf]
      %v1007 = vld [vmem:[%s997 + $0x24] sm:$0xf]
      %s1008 = scalar_lea.vmem %s1, 256
      %v1009 = vld [vmem:[%s1008] sm:$0xf]
      %v1010 = vld [vmem:[%s1008 + $0x4] sm:$0xf]
      %v1011 = vld [vmem:[%s1008 + $0x8] sm:$0xf]
      %v1012 = vld [vmem:[%s1008 + $0xc] sm:$0xf]
      %v1013 = vld [vmem:[%s1008 + $0x10] sm:$0xf]
      %v1014 = vld [vmem:[%s1008 + $0x14] sm:$0xf]
      %v1015 = vld [vmem:[%s1008 + $0x18] sm:$0xf]
      %v1016 = vld [vmem:[%s1008 + $0x1c] sm:$0xf]
      %v1017 = vld [vmem:[%s1008 + $0x20] sm:$0xf]
      %v1018 = vld [vmem:[%s1008 + $0x24] sm:$0xf]
      %v1019 = vld [vmem:[%s1008 + $0x28] sm:$0xf]
      %v1020 = vld [vmem:[%s1008 + $0x2c] sm:$0xf]
      %v1021 = vld [vmem:[%s1008 + $0x30] sm:$0xf]
      %v1022 = vld [vmem:[%s1008 + $0x34] sm:$0xf]
      %v1023 = vld [vmem:[%s1008 + $0x38] sm:$0xf]
      %v1024 = vld [vmem:[%s1008 + $0x3c] sm:$0xf]
      %v1035 = vunpack.c.l.b16 %v998
      %v1036 = vunpack.c.l.b16 %v999
      %v1037 = vunpack.c.l.b16 %v1000
      %v1038 = vunpack.c.l.b16 %v1001
      %v1039 = vunpack.c.l.b16 %v1002
      %v1040 = vunpack.c.l.b16 %v1003
      %v1041 = vunpack.c.l.b16 %v1004
      %v1042 = vunpack.c.l.b16 %v1005
      %v1043 = vunpack.c.l.b16 %v1006
      %v1044 = vunpack.c.l.b16 %v1007
      %v1045 = vpack.c.b16 %v1036, %v1035
      %v1046 = vpack.c.b16 %v1038, %v1037
      %v1047 = vpack.c.b16 %v1040, %v1039
      %v1048 = vpack.c.b16 %v1042, %v1041
      %v1049 = vpack.c.b16 %v1044, %v1043
      %v1071 = vunpack.c.l.b16 %v1009
      %v1072 = vunpack.c.l.b16 %v1010
      %v1073 = vunpack.c.l.b16 %v1011
      %v1074 = vunpack.c.l.b16 %v1012
      %v1075 = vunpack.c.l.b16 %v1013
      %v1076 = vunpack.c.l.b16 %v1014
      %v1077 = vunpack.c.l.b16 %v1015
      %v1078 = vunpack.c.l.b16 %v1016
      %v1079 = vunpack.c.l.b16 %v1017
      %v1080 = vunpack.c.l.b16 %v1018
      %v1081 = vunpack.c.l.b16 %v1019
      %v1082 = vunpack.c.l.b16 %v1020
      %v1083 = vunpack.c.l.b16 %v1021
      %v1084 = vunpack.c.l.b16 %v1022
      %v1085 = vunpack.c.l.b16 %v1023
      %v1086 = vunpack.c.l.b16 %v1024
      %v1087 = vpack.c.b16 %v1072, %v1071
      %v1088 = vpack.c.b16 %v1074, %v1073
      %v1089 = vpack.c.b16 %v1076, %v1075
      %v1090 = vpack.c.b16 %v1078, %v1077
      %v1091 = vpack.c.b16 %v1080, %v1079
      %v1092 = vpack.c.b16 %v1082, %v1081
      %v1093 = vpack.c.b16 %v1084, %v1083
      %v1094 = vpack.c.b16 %v1086, %v1085
      %1103 = vmatprep.subr.bf16.mxu0 0
      %1104 = vmatpush1.bf16.msra.mxu0 %v1094
      %1105 = vmatprep.subr.bf16.mxu0 0
      %1106 = vmatpush1.bf16.msra.mxu0 %v1093
      %1107 = vmatprep.subr.bf16.mxu0 0
      %1108 = vmatpush1.bf16.msra.mxu0 %v1092
      %1109 = vmatprep.subr.bf16.mxu0 0
      %1110 = vmatpush1.bf16.msra.mxu0 %v1091
      %1111 = vmatprep.subr.bf16.mxu0 0
      %1112 = vmatpush1.bf16.msra.mxu0 %v1090
      %1113 = vmatprep.subr.bf16.mxu0 0
      %1114 = vmatpush1.bf16.msra.mxu0 %v1089
      %1115 = vmatprep.subr.bf16.mxu0 0
      %1116 = vmatpush1.bf16.msra.mxu0 %v1088
      %1117 = vmatprep.subr.bf16.mxu0 0
      %1118 = vmatpush1.bf16.msra.mxu0 %v1087
      %1119 = vmatprep.subr.bf16.mxu0 0
      %1120 = vmatpush2.bf16.msra.mxu0 0
      %1121 = vmatprep.subr.bf16.mxu0 0
      %1122 = vmatpush2.bf16.msra.mxu0 0
      %1123 = vmatprep.subr.bf16.mxu0 0
      %1124 = vmatpush2.bf16.msra.mxu0 0
      %1125 = vmatprep.subr.bf16.mxu0 0
      %1126 = vmatpush2.bf16.msra.mxu0 0
      %1127 = vmatprep.subr.bf16.mxu0 0
      %1128 = vmatpush2.bf16.msra.mxu0 0
      %1129 = vmatprep.subr.bf16.mxu0 0
      %1130 = vmatpush2.bf16.msra.mxu0 0
      %1131 = vmatprep.subr.bf16.mxu0 0
      %1132 = vmatpush2.bf16.msra.mxu0 0
      %1133 = vmatprep.subr.bf16.mxu0 0
      %1134 = vmatpush2.bf16.msra.mxu0 0
      %1135 = vmatprep.mubr.bf16.mxu0 0
      %1136 = vmatmul.mubr.bf16.gmra.mxu0 %v1045
      %v1137 = vpop.f32.mrf.mxu0
      %v1138 = vadd.f32 0.0, %v1137
      %v1139 = vpop.f32.mrf.mxu0
      %v1140 = vpop.f32.mrf.mxu0
      %v1141 = vadd.f32 0.0, %v1140
      %v1142 = vpop.f32.mrf.mxu0
      %1143 = vmatprep.mubr.bf16.mxu0 0
      %1144 = vmatmul.mubr.bf16.gmra.mxu0 %v1046
      %v1145 = vpop.f32.mrf.mxu0
      %v1146 = vadd.f32 0.0, %v1145
      %v1147 = vpop.f32.mrf.mxu0
      %v1148 = vpop.f32.mrf.mxu0
      %v1149 = vadd.f32 0.0, %v1148
      %v1150 = vpop.f32.mrf.mxu0
      %1151 = vmatprep.mubr.bf16.mxu0 0
      %1152 = vmatmul.mubr.bf16.gmra.mxu0 %v1047
      %v1153 = vpop.f32.mrf.mxu0
      %v1154 = vadd.f32 0.0, %v1153
      %v1155 = vpop.f32.mrf.mxu0
      %v1156 = vpop.f32.mrf.mxu0
      %v1157 = vadd.f32 0.0, %v1156
      %v1158 = vpop.f32.mrf.mxu0
      %1159 = vmatprep.mubr.bf16.mxu0 0
      %1160 = vmatmul.mubr.bf16.gmra.mxu0 %v1048
      %v1161 = vpop.f32.mrf.mxu0
      %v1162 = vadd.f32 0.0, %v1161
      %v1163 = vpop.f32.mrf.mxu0
      %v1164 = vpop.f32.mrf.mxu0
      %v1165 = vadd.f32 0.0, %v1164
      %v1166 = vpop.f32.mrf.mxu0
      %1167 = vmatprep.mubr.bf16.mxu0 0
      %1168 = vmatmul.mubr.bf16.gmra.mxu0 %v1049
      %v1169 = vpop.f32.mrf.mxu0
      %v1170 = vadd.f32 0.0, %v1169
      %v1171 = vpop.f32.mrf.mxu0
      %v1172 = vpop.f32.mrf.mxu0
      %v1173 = vadd.f32 0.0, %v1172
      %v1174 = vpop.f32.mrf.mxu0
      %1175 = vdwg.mxu0
      %v1176 = vadd.f32 %v987, %v1138
      %v1177 = vadd.f32 %v988, %v1141
      %v1178 = vadd.f32 %v989, %v1146
      %v1179 = vadd.f32 %v990, %v1149
      %v1180 = vadd.f32 %v991, %v1154
      %v1181 = vadd.f32 %v992, %v1157
      %v1182 = vadd.f32 %v993, %v1162
      %v1183 = vadd.f32 %v994, %v1165
      %v1184 = vadd.f32 %v995, %v1170
      %v1185 = vadd.f32 %v996, %v1173
      %v1186 = vld [vmem:[%s808] sm:$0xf]
      %v1187 = vld [vmem:[%s808 + $0x4] sm:$0xf]
      %v1188 = vld [vmem:[%s808 + $0x8] sm:$0xf]
      %v1189 = vld [vmem:[%s808 + $0xc] sm:$0xf]
      %v1190 = vld [vmem:[%s808 + $0x10] sm:$0xf]
      %v1191 = vld [vmem:[%s808 + $0x14] sm:$0xf]
      %v1192 = vld [vmem:[%s808 + $0x18] sm:$0xf]
      %v1193 = vld [vmem:[%s808 + $0x1c] sm:$0xf]
      %v1194 = vld [vmem:[%s808 + $0x20] sm:$0xf]
      %v1195 = vld [vmem:[%s808 + $0x24] sm:$0xf]
      %v1196 = vld [vmem:[%s808 + $0x28] sm:$0x1]
      %s1197 = scalar_lea.vmem %s1, 320
      %v1198 = vld [vmem:[%s1197] sm:$0xf]
      %v1199 = vld [vmem:[%s1197 + $0x4] sm:$0xf]
      %v1200 = vld [vmem:[%s1197 + $0x8] sm:$0xf]
      %v1201 = vld [vmem:[%s1197 + $0xc] sm:$0xf]
      %v1202 = vld [vmem:[%s1197 + $0x10] sm:$0xf]
      %v1203 = vld [vmem:[%s1197 + $0x14] sm:$0xf]
      %v1204 = vld [vmem:[%s1197 + $0x18] sm:$0xf]
      %v1205 = vld [vmem:[%s1197 + $0x1c] sm:$0xf]
      %v1206 = vld [vmem:[%s1197 + $0x20] sm:$0xf]
      %v1207 = vld [vmem:[%s1197 + $0x24] sm:$0xf]
      %v1208 = vld [vmem:[%s1197 + $0x28] sm:$0xf]
      %v1209 = vld [vmem:[%s1197 + $0x2c] sm:$0xf]
      %v1210 = vld [vmem:[%s1197 + $0x30] sm:$0xf]
      %v1211 = vld [vmem:[%s1197 + $0x34] sm:$0xf]
      %v1212 = vld [vmem:[%s1197 + $0x38] sm:$0xf]
      %v1213 = vld [vmem:[%s1197 + $0x3c] sm:$0xf]
      %v1225 = vunpack.c.l.b16 %v1186
      %v1226 = vunpack.c.l.b16 %v1187
      %v1227 = vunpack.c.l.b16 %v1188
      %v1228 = vunpack.c.l.b16 %v1189
      %v1229 = vunpack.c.l.b16 %v1190
      %v1230 = vunpack.c.l.b16 %v1191
      %v1231 = vunpack.c.l.b16 %v1192
      %v1232 = vunpack.c.l.b16 %v1193
      %v1233 = vunpack.c.l.b16 %v1194
      %v1234 = vunpack.c.l.b16 %v1195
      %v1235 = vunpack.c.l.b16 %v1196
      %v1236 = vpack.c.b16 %v1226, %v1225
      %v1237 = vpack.c.b16 %v1228, %v1227
      %v1238 = vpack.c.b16 %v1230, %v1229
      %v1239 = vpack.c.b16 %v1232, %v1231
      %v1240 = vpack.c.b16 %v1234, %v1233
      %v1241 = vpack.c.b16 %v1235, %v1235
      %v1243 = vshrl.u32 %v1236, 16
      %v1245 = vshll.u32 %v1236, 16
      %v1247 = vrot.slane %v1245, 1
      %v1248 = vor.u32 %v1243, %v1247
      %v1250 = vshll.u32 %v1237, 16
      %v1252 = vrot.slane %v1250, 1
      %v1253 = vsel %vm627, %v1248, %v1252
      %v1254 = vshrl.u32 %v1237, 16
      %v1256 = vor.u32 %v1254, %v1252
      %v1258 = vshll.u32 %v1238, 16
      %v1260 = vrot.slane %v1258, 1
      %v1261 = vsel %vm627, %v1256, %v1260
      %v1262 = vshrl.u32 %v1238, 16
      %v1264 = vor.u32 %v1262, %v1260
      %v1266 = vshll.u32 %v1239, 16
      %v1268 = vrot.slane %v1266, 1
      %v1269 = vsel %vm627, %v1264, %v1268
      %v1270 = vshrl.u32 %v1239, 16
      %v1272 = vor.u32 %v1270, %v1268
      %v1274 = vshll.u32 %v1240, 16
      %v1276 = vrot.slane %v1274, 1
      %v1277 = vsel %vm627, %v1272, %v1276
      %v1278 = vshrl.u32 %v1240, 16
      %v1280 = vor.u32 %v1278, %v1276
      %v1282 = vshll.u32 %v1241, 16
      %v1284 = vrot.slane %v1282, 1
      %v1285 = vsel %vm627, %v1280, %v1284
      %v1307 = vunpack.c.l.b16 %v1198
      %v1308 = vunpack.c.l.b16 %v1199
      %v1309 = vunpack.c.l.b16 %v1200
      %v1310 = vunpack.c.l.b16 %v1201
      %v1311 = vunpack.c.l.b16 %v1202
      %v1312 = vunpack.c.l.b16 %v1203
      %v1313 = vunpack.c.l.b16 %v1204
      %v1314 = vunpack.c.l.b16 %v1205
      %v1315 = vunpack.c.l.b16 %v1206
      %v1316 = vunpack.c.l.b16 %v1207
      %v1317 = vunpack.c.l.b16 %v1208
      %v1318 = vunpack.c.l.b16 %v1209
      %v1319 = vunpack.c.l.b16 %v1210
      %v1320 = vunpack.c.l.b16 %v1211
      %v1321 = vunpack.c.l.b16 %v1212
      %v1322 = vunpack.c.l.b16 %v1213
      %v1323 = vpack.c.b16 %v1308, %v1307
      %v1324 = vpack.c.b16 %v1310, %v1309
      %v1325 = vpack.c.b16 %v1312, %v1311
      %v1326 = vpack.c.b16 %v1314, %v1313
      %v1327 = vpack.c.b16 %v1316, %v1315
      %v1328 = vpack.c.b16 %v1318, %v1317
      %v1329 = vpack.c.b16 %v1320, %v1319
      %v1330 = vpack.c.b16 %v1322, %v1321
      %1339 = vmatprep.subr.bf16.mxu0 0
      %1340 = vmatpush1.bf16.msra.mxu0 %v1330
      %1341 = vmatprep.subr.bf16.mxu0 0
      %1342 = vmatpush1.bf16.msra.mxu0 %v1329
      %1343 = vmatprep.subr.bf16.mxu0 0
      %1344 = vmatpush1.bf16.msra.mxu0 %v1328
      %1345 = vmatprep.subr.bf16.mxu0 0
      %1346 = vmatpush1.bf16.msra.mxu0 %v1327
      %1347 = vmatprep.subr.bf16.mxu0 0
      %1348 = vmatpush1.bf16.msra.mxu0 %v1326
      %1349 = vmatprep.subr.bf16.mxu0 0
      %1350 = vmatpush1.bf16.msra.mxu0 %v1325
      %1351 = vmatprep.subr.bf16.mxu0 0
      %1352 = vmatpush1.bf16.msra.mxu0 %v1324
      %1353 = vmatprep.subr.bf16.mxu0 0
      %1354 = vmatpush1.bf16.msra.mxu0 %v1323
      %1355 = vmatprep.subr.bf16.mxu0 0
      %1356 = vmatpush2.bf16.msra.mxu0 0
      %1357 = vmatprep.subr.bf16.mxu0 0
      %1358 = vmatpush2.bf16.msra.mxu0 0
      %1359 = vmatprep.subr.bf16.mxu0 0
      %1360 = vmatpush2.bf16.msra.mxu0 0
      %1361 = vmatprep.subr.bf16.mxu0 0
      %1362 = vmatpush2.bf16.msra.mxu0 0
      %1363 = vmatprep.subr.bf16.mxu0 0
      %1364 = vmatpush2.bf16.msra.mxu0 0
      %1365 = vmatprep.subr.bf16.mxu0 0
      %1366 = vmatpush2.bf16.msra.mxu0 0
      %1367 = vmatprep.subr.bf16.mxu0 0
      %1368 = vmatpush2.bf16.msra.mxu0 0
      %1369 = vmatprep.subr.bf16.mxu0 0
      %1370 = vmatpush2.bf16.msra.mxu0 0
      %1371 = vmatprep.mubr.bf16.mxu0 0
      %1372 = vmatmul.mubr.bf16.gmra.mxu0 %v1253
      %v1373 = vpop.f32.mrf.mxu0
      %v1374 = vadd.f32 0.0, %v1373
      %v1375 = vpop.f32.mrf.mxu0
      %v1376 = vpop.f32.mrf.mxu0
      %v1377 = vadd.f32 0.0, %v1376
      %v1378 = vpop.f32.mrf.mxu0
      %1379 = vmatprep.mubr.bf16.mxu0 0
      %1380 = vmatmul.mubr.bf16.gmra.mxu0 %v1261
      %v1381 = vpop.f32.mrf.mxu0
      %v1382 = vadd.f32 0.0, %v1381
      %v1383 = vpop.f32.mrf.mxu0
      %v1384 = vpop.f32.mrf.mxu0
      %v1385 = vadd.f32 0.0, %v1384
      %v1386 = vpop.f32.mrf.mxu0
      %1387 = vmatprep.mubr.bf16.mxu0 0
      %1388 = vmatmul.mubr.bf16.gmra.mxu0 %v1269
      %v1389 = vpop.f32.mrf.mxu0
      %v1390 = vadd.f32 0.0, %v1389
      %v1391 = vpop.f32.mrf.mxu0
      %v1392 = vpop.f32.mrf.mxu0
      %v1393 = vadd.f32 0.0, %v1392
      %v1394 = vpop.f32.mrf.mxu0
      %1395 = vmatprep.mubr.bf16.mxu0 0
      %1396 = vmatmul.mubr.bf16.gmra.mxu0 %v1277
      %v1397 = vpop.f32.mrf.mxu0
      %v1398 = vadd.f32 0.0, %v1397
      %v1399 = vpop.f32.mrf.mxu0
      %v1400 = vpop.f32.mrf.mxu0
      %v1401 = vadd.f32 0.0, %v1400
      %v1402 = vpop.f32.mrf.mxu0
      %1403 = vmatprep.mubr.bf16.mxu0 0
      %1404 = vmatmul.mubr.bf16.gmra.mxu0 %v1285
      %v1405 = vpop.f32.mrf.mxu0
      %v1406 = vadd.f32 0.0, %v1405
      %v1407 = vpop.f32.mrf.mxu0
      %v1408 = vpop.f32.mrf.mxu0
      %v1409 = vadd.f32 0.0, %v1408
      %v1410 = vpop.f32.mrf.mxu0
      %1411 = vdwg.mxu0
      %v1412 = vadd.f32 %v1176, %v1374
      %v1413 = vadd.f32 %v1177, %v1377
      %v1414 = vadd.f32 %v1178, %v1382
      %v1415 = vadd.f32 %v1179, %v1385
      %v1416 = vadd.f32 %v1180, %v1390
      %v1417 = vadd.f32 %v1181, %v1393
      %v1418 = vadd.f32 %v1182, %v1398
      %v1419 = vadd.f32 %v1183, %v1401
      %v1420 = vadd.f32 %v1184, %v1406
      %v1421 = vadd.f32 %v1185, %v1409
      %v1422 = vld [vmem:[%s203 + $0x4] sm:$0xe]
      %v1423 = vld [vmem:[%s203 + $0x8] sm:$0xf]
      %v1424 = vld [vmem:[%s203 + $0xc] sm:$0xf]
      %v1425 = vld [vmem:[%s203 + $0x10] sm:$0xf]
      %v1426 = vld [vmem:[%s203 + $0x14] sm:$0xf]
      %v1427 = vld [vmem:[%s203 + $0x18] sm:$0xf]
      %v1428 = vld [vmem:[%s203 + $0x1c] sm:$0xf]
      %v1429 = vld [vmem:[%s203 + $0x20] sm:$0xf]
      %v1430 = vld [vmem:[%s203 + $0x24] sm:$0xf]
      %v1431 = vld [vmem:[%s203 + $0x28] sm:$0xf]
      %v1432 = vld [vmem:[%s203 + $0x2c] sm:$0x1]
      %s1433 = scalar_lea.vmem %s1, 384
      %v1434 = vld [vmem:[%s1433] sm:$0xf]
      %v1435 = vld [vmem:[%s1433 + $0x4] sm:$0xf]
      %v1436 = vld [vmem:[%s1433 + $0x8] sm:$0xf]
      %v1437 = vld [vmem:[%s1433 + $0xc] sm:$0xf]
      %v1438 = vld [vmem:[%s1433 + $0x10] sm:$0xf]
      %v1439 = vld [vmem:[%s1433 + $0x14] sm:$0xf]
      %v1440 = vld [vmem:[%s1433 + $0x18] sm:$0xf]
      %v1441 = vld [vmem:[%s1433 + $0x1c] sm:$0xf]
      %v1442 = vld [vmem:[%s1433 + $0x20] sm:$0xf]
      %v1443 = vld [vmem:[%s1433 + $0x24] sm:$0xf]
      %v1444 = vld [vmem:[%s1433 + $0x28] sm:$0xf]
      %v1445 = vld [vmem:[%s1433 + $0x2c] sm:$0xf]
      %v1446 = vld [vmem:[%s1433 + $0x30] sm:$0xf]
      %v1447 = vld [vmem:[%s1433 + $0x34] sm:$0xf]
      %v1448 = vld [vmem:[%s1433 + $0x38] sm:$0xf]
      %v1449 = vld [vmem:[%s1433 + $0x3c] sm:$0xf]
      %v1461 = vunpack.c.l.b16 %v1422
      %v1462 = vunpack.c.l.b16 %v1423
      %v1463 = vunpack.c.l.b16 %v1424
      %v1464 = vunpack.c.l.b16 %v1425
      %v1465 = vunpack.c.l.b16 %v1426
      %v1466 = vunpack.c.l.b16 %v1427
      %v1467 = vunpack.c.l.b16 %v1428
      %v1468 = vunpack.c.l.b16 %v1429
      %v1469 = vunpack.c.l.b16 %v1430
      %v1470 = vunpack.c.l.b16 %v1431
      %v1471 = vunpack.c.l.b16 %v1432
      %v1472 = vpack.c.b16 %v1462, %v1461
      %v1473 = vpack.c.b16 %v1464, %v1463
      %v1474 = vpack.c.b16 %v1466, %v1465
      %v1475 = vpack.c.b16 %v1468, %v1467
      %v1476 = vpack.c.b16 %v1470, %v1469
      %v1477 = vpack.c.b16 %v1471, %v1471
      %vm1478 = vcmask 1046528
      %v1479 = vrot.slane %v1472, 1
      %v1480 = vrot.slane %v1473, 1
      %v1481 = vsel %vm1478, %v1479, %v1480
      %v1482 = vrot.slane %v1474, 1
      %v1483 = vsel %vm1478, %v1480, %v1482
      %v1484 = vrot.slane %v1475, 1
      %v1485 = vsel %vm1478, %v1482, %v1484
      %v1486 = vrot.slane %v1476, 1
      %v1487 = vsel %vm1478, %v1484, %v1486
      %v1488 = vrot.slane %v1477, 1
      %v1489 = vsel %vm1478, %v1486, %v1488
      %v1511 = vunpack.c.l.b16 %v1434
      %v1512 = vunpack.c.l.b16 %v1435
      %v1513 = vunpack.c.l.b16 %v1436
      %v1514 = vunpack.c.l.b16 %v1437
      %v1515 = vunpack.c.l.b16 %v1438
      %v1516 = vunpack.c.l.b16 %v1439
      %v1517 = vunpack.c.l.b16 %v1440
      %v1518 = vunpack.c.l.b16 %v1441
      %v1519 = vunpack.c.l.b16 %v1442
      %v1520 = vunpack.c.l.b16 %v1443
      %v1521 = vunpack.c.l.b16 %v1444
      %v1522 = vunpack.c.l.b16 %v1445
      %v1523 = vunpack.c.l.b16 %v1446
      %v1524 = vunpack.c.l.b16 %v1447
      %v1525 = vunpack.c.l.b16 %v1448
      %v1526 = vunpack.c.l.b16 %v1449
      %v1527 = vpack.c.b16 %v1512, %v1511
      %v1528 = vpack.c.b16 %v1514, %v1513
      %v1529 = vpack.c.b16 %v1516, %v1515
      %v1530 = vpack.c.b16 %v1518, %v1517
      %v1531 = vpack.c.b16 %v1520, %v1519
      %v1532 = vpack.c.b16 %v1522, %v1521
      %v1533 = vpack.c.b16 %v1524, %v1523
      %v1534 = vpack.c.b16 %v1526, %v1525
      %1543 = vmatprep.subr.bf16.mxu0 0
      %1544 = vmatpush1.bf16.msra.mxu0 %v1534
      %1545 = vmatprep.subr.bf16.mxu0 0
      %1546 = vmatpush1.bf16.msra.mxu0 %v1533
      %1547 = vmatprep.subr.bf16.mxu0 0
      %1548 = vmatpush1.bf16.msra.mxu0 %v1532
      %1549 = vmatprep.subr.bf16.mxu0 0
      %1550 = vmatpush1.bf16.msra.mxu0 %v1531
      %1551 = vmatprep.subr.bf16.mxu0 0
      %1552 = vmatpush1.bf16.msra.mxu0 %v1530
      %1553 = vmatprep.subr.bf16.mxu0 0
      %1554 = vmatpush1.bf16.msra.mxu0 %v1529
      %1555 = vmatprep.subr.bf16.mxu0 0
      %1556 = vmatpush1.bf16.msra.mxu0 %v1528
      %1557 = vmatprep.subr.bf16.mxu0 0
      %1558 = vmatpush1.bf16.msra.mxu0 %v1527
      %1559 = vmatprep.subr.bf16.mxu0 0
      %1560 = vmatpush2.bf16.msra.mxu0 0
      %1561 = vmatprep.subr.bf16.mxu0 0
      %1562 = vmatpush2.bf16.msra.mxu0 0
      %1563 = vmatprep.subr.bf16.mxu0 0
      %1564 = vmatpush2.bf16.msra.mxu0 0
      %1565 = vmatprep.subr.bf16.mxu0 0
      %1566 = vmatpush2.bf16.msra.mxu0 0
      %1567 = vmatprep.subr.bf16.mxu0 0
      %1568 = vmatpush2.bf16.msra.mxu0 0
      %1569 = vmatprep.subr.bf16.mxu0 0
      %1570 = vmatpush2.bf16.msra.mxu0 0
      %1571 = vmatprep.subr.bf16.mxu0 0
      %1572 = vmatpush2.bf16.msra.mxu0 0
      %1573 = vmatprep.subr.bf16.mxu0 0
      %1574 = vmatpush2.bf16.msra.mxu0 0
      %1575 = vmatprep.mubr.bf16.mxu0 0
      %1576 = vmatmul.mubr.bf16.gmra.mxu0 %v1481
      %v1577 = vpop.f32.mrf.mxu0
      %v1578 = vadd.f32 0.0, %v1577
      %v1579 = vpop.f32.mrf.mxu0
      %v1580 = vpop.f32.mrf.mxu0
      %v1581 = vadd.f32 0.0, %v1580
      %v1582 = vpop.f32.mrf.mxu0
      %1583 = vmatprep.mubr.bf16.mxu0 0
      %1584 = vmatmul.mubr.bf16.gmra.mxu0 %v1483
      %v1585 = vpop.f32.mrf.mxu0
      %v1586 = vadd.f32 0.0, %v1585
      %v1587 = vpop.f32.mrf.mxu0
      %v1588 = vpop.f32.mrf.mxu0
      %v1589 = vadd.f32 0.0, %v1588
      %v1590 = vpop.f32.mrf.mxu0
      %1591 = vmatprep.mubr.bf16.mxu0 0
      %1592 = vmatmul.mubr.bf16.gmra.mxu0 %v1485
      %v1593 = vpop.f32.mrf.mxu0
      %v1594 = vadd.f32 0.0, %v1593
      %v1595 = vpop.f32.mrf.mxu0
      %v1596 = vpop.f32.mrf.mxu0
      %v1597 = vadd.f32 0.0, %v1596
      %v1598 = vpop.f32.mrf.mxu0
      %1599 = vmatprep.mubr.bf16.mxu0 0
      %1600 = vmatmul.mubr.bf16.gmra.mxu0 %v1487
      %v1601 = vpop.f32.mrf.mxu0
      %v1602 = vadd.f32 0.0, %v1601
      %v1603 = vpop.f32.mrf.mxu0
      %v1604 = vpop.f32.mrf.mxu0
      %v1605 = vadd.f32 0.0, %v1604
      %v1606 = vpop.f32.mrf.mxu0
      %1607 = vmatprep.mubr.bf16.mxu0 0
      %1608 = vmatmul.mubr.bf16.gmra.mxu0 %v1489
      %v1609 = vpop.f32.mrf.mxu0
      %v1610 = vadd.f32 0.0, %v1609
      %v1611 = vpop.f32.mrf.mxu0
      %v1612 = vpop.f32.mrf.mxu0
      %v1613 = vadd.f32 0.0, %v1612
      %v1614 = vpop.f32.mrf.mxu0
      %1615 = vdwg.mxu0
      %v1616 = vadd.f32 %v1412, %v1578
      %v1617 = vadd.f32 %v1413, %v1581
      %v1618 = vadd.f32 %v1414, %v1586
      %v1619 = vadd.f32 %v1415, %v1589
      %v1620 = vadd.f32 %v1416, %v1594
      %v1621 = vadd.f32 %v1417, %v1597
      %v1622 = vadd.f32 %v1418, %v1602
      %v1623 = vadd.f32 %v1419, %v1605
      %v1624 = vadd.f32 %v1420, %v1610
      %v1625 = vadd.f32 %v1421, %v1613
      %v1626 = vld [vmem:[%s241 + $0x4] sm:$0xe]
      %v1627 = vld [vmem:[%s241 + $0x8] sm:$0xf]
      %v1628 = vld [vmem:[%s241 + $0xc] sm:$0xf]
      %v1629 = vld [vmem:[%s241 + $0x10] sm:$0xf]
      %v1630 = vld [vmem:[%s241 + $0x14] sm:$0xf]
      %v1631 = vld [vmem:[%s241 + $0x18] sm:$0xf]
      %v1632 = vld [vmem:[%s241 + $0x1c] sm:$0xf]
      %v1633 = vld [vmem:[%s241 + $0x20] sm:$0xf]
      %v1634 = vld [vmem:[%s241 + $0x24] sm:$0xf]
      %v1635 = vld [vmem:[%s241 + $0x28] sm:$0xf]
      %v1636 = vld [vmem:[%s241 + $0x2c] sm:$0x1]
      %s1637 = scalar_lea.vmem %s1, 448
      %v1638 = vld [vmem:[%s1637] sm:$0xf]
      %v1639 = vld [vmem:[%s1637 + $0x4] sm:$0xf]
      %v1640 = vld [vmem:[%s1637 + $0x8] sm:$0xf]
      %v1641 = vld [vmem:[%s1637 + $0xc] sm:$0xf]
      %v1642 = vld [vmem:[%s1637 + $0x10] sm:$0xf]
      %v1643 = vld [vmem:[%s1637 + $0x14] sm:$0xf]
      %v1644 = vld [vmem:[%s1637 + $0x18] sm:$0xf]
      %v1645 = vld [vmem:[%s1637 + $0x1c] sm:$0xf]
      %v1646 = vld [vmem:[%s1637 + $0x20] sm:$0xf]
      %v1647 = vld [vmem:[%s1637 + $0x24] sm:$0xf]
      %v1648 = vld [vmem:[%s1637 + $0x28] sm:$0xf]
      %v1649 = vld [vmem:[%s1637 + $0x2c] sm:$0xf]
      %v1650 = vld [vmem:[%s1637 + $0x30] sm:$0xf]
      %v1651 = vld [vmem:[%s1637 + $0x34] sm:$0xf]
      %v1652 = vld [vmem:[%s1637 + $0x38] sm:$0xf]
      %v1653 = vld [vmem:[%s1637 + $0x3c] sm:$0xf]
      %v1665 = vunpack.c.l.b16 %v1626
      %v1666 = vunpack.c.l.b16 %v1627
      %v1667 = vunpack.c.l.b16 %v1628
      %v1668 = vunpack.c.l.b16 %v1629
      %v1669 = vunpack.c.l.b16 %v1630
      %v1670 = vunpack.c.l.b16 %v1631
      %v1671 = vunpack.c.l.b16 %v1632
      %v1672 = vunpack.c.l.b16 %v1633
      %v1673 = vunpack.c.l.b16 %v1634
      %v1674 = vunpack.c.l.b16 %v1635
      %v1675 = vunpack.c.l.b16 %v1636
      %v1676 = vpack.c.b16 %v1666, %v1665
      %v1677 = vpack.c.b16 %v1668, %v1667
      %v1678 = vpack.c.b16 %v1670, %v1669
      %v1679 = vpack.c.b16 %v1672, %v1671
      %v1680 = vpack.c.b16 %v1674, %v1673
      %v1681 = vpack.c.b16 %v1675, %v1675
      %v1682 = vrot.slane %v1676, 1
      %v1683 = vrot.slane %v1677, 1
      %v1684 = vsel %vm1478, %v1682, %v1683
      %v1685 = vrot.slane %v1678, 1
      %v1686 = vsel %vm1478, %v1683, %v1685
      %v1687 = vrot.slane %v1679, 1
      %v1688 = vsel %vm1478, %v1685, %v1687
      %v1689 = vrot.slane %v1680, 1
      %v1690 = vsel %vm1478, %v1687, %v1689
      %v1691 = vrot.slane %v1681, 1
      %v1692 = vsel %vm1478, %v1689, %v1691
      %v1714 = vunpack.c.l.b16 %v1638
      %v1715 = vunpack.c.l.b16 %v1639
      %v1716 = vunpack.c.l.b16 %v1640
      %v1717 = vunpack.c.l.b16 %v1641
      %v1718 = vunpack.c.l.b16 %v1642
      %v1719 = vunpack.c.l.b16 %v1643
      %v1720 = vunpack.c.l.b16 %v1644
      %v1721 = vunpack.c.l.b16 %v1645
      %v1722 = vunpack.c.l.b16 %v1646
      %v1723 = vunpack.c.l.b16 %v1647
      %v1724 = vunpack.c.l.b16 %v1648
      %v1725 = vunpack.c.l.b16 %v1649
      %v1726 = vunpack.c.l.b16 %v1650
      %v1727 = vunpack.c.l.b16 %v1651
      %v1728 = vunpack.c.l.b16 %v1652
      %v1729 = vunpack.c.l.b16 %v1653
      %v1730 = vpack.c.b16 %v1715, %v1714
      %v1731 = vpack.c.b16 %v1717, %v1716
      %v1732 = vpack.c.b16 %v1719, %v1718
      %v1733 = vpack.c.b16 %v1721, %v1720
      %v1734 = vpack.c.b16 %v1723, %v1722
      %v1735 = vpack.c.b16 %v1725, %v1724
      %v1736 = vpack.c.b16 %v1727, %v1726
      %v1737 = vpack.c.b16 %v1729, %v1728
      %1746 = vmatprep.subr.bf16.mxu0 0
      %1747 = vmatpush1.bf16.msra.mxu0 %v1737
      %1748 = vmatprep.subr.bf16.mxu0 0
      %1749 = vmatpush1.bf16.msra.mxu0 %v1736
      %1750 = vmatprep.subr.bf16.mxu0 0
      %1751 = vmatpush1.bf16.msra.mxu0 %v1735
      %1752 = vmatprep.subr.bf16.mxu0 0
      %1753 = vmatpush1.bf16.msra.mxu0 %v1734
      %1754 = vmatprep.subr.bf16.mxu0 0
      %1755 = vmatpush1.bf16.msra.mxu0 %v1733
      %1756 = vmatprep.subr.bf16.mxu0 0
      %1757 = vmatpush1.bf16.msra.mxu0 %v1732
      %1758 = vmatprep.subr.bf16.mxu0 0
      %1759 = vmatpush1.bf16.msra.mxu0 %v1731
      %1760 = vmatprep.subr.bf16.mxu0 0
      %1761 = vmatpush1.bf16.msra.mxu0 %v1730
      %1762 = vmatprep.subr.bf16.mxu0 0
      %1763 = vmatpush2.bf16.msra.mxu0 0
      %1764 = vmatprep.subr.bf16.mxu0 0
      %1765 = vmatpush2.bf16.msra.mxu0 0
      %1766 = vmatprep.subr.bf16.mxu0 0
      %1767 = vmatpush2.bf16.msra.mxu0 0
      %1768 = vmatprep.subr.bf16.mxu0 0
      %1769 = vmatpush2.bf16.msra.mxu0 0
      %1770 = vmatprep.subr.bf16.mxu0 0
      %1771 = vmatpush2.bf16.msra.mxu0 0
      %1772 = vmatprep.subr.bf16.mxu0 0
      %1773 = vmatpush2.bf16.msra.mxu0 0
      %1774 = vmatprep.subr.bf16.mxu0 0
      %1775 = vmatpush2.bf16.msra.mxu0 0
      %1776 = vmatprep.subr.bf16.mxu0 0
      %1777 = vmatpush2.bf16.msra.mxu0 0
      %1778 = vmatprep.mubr.bf16.mxu0 0
      %1779 = vmatmul.mubr.bf16.gmra.mxu0 %v1684
      %v1780 = vpop.f32.mrf.mxu0
      %v1781 = vadd.f32 0.0, %v1780
      %v1782 = vpop.f32.mrf.mxu0
      %v1783 = vpop.f32.mrf.mxu0
      %v1784 = vadd.f32 0.0, %v1783
      %v1785 = vpop.f32.mrf.mxu0
      %1786 = vmatprep.mubr.bf16.mxu0 0
      %1787 = vmatmul.mubr.bf16.gmra.mxu0 %v1686
      %v1788 = vpop.f32.mrf.mxu0
      %v1789 = vadd.f32 0.0, %v1788
      %v1790 = vpop.f32.mrf.mxu0
      %v1791 = vpop.f32.mrf.mxu0
      %v1792 = vadd.f32 0.0, %v1791
      %v1793 = vpop.f32.mrf.mxu0
      %1794 = vmatprep.mubr.bf16.mxu0 0
      %1795 = vmatmul.mubr.bf16.gmra.mxu0 %v1688
      %v1796 = vpop.f32.mrf.mxu0
      %v1797 = vadd.f32 0.0, %v1796
      %v1798 = vpop.f32.mrf.mxu0
      %v1799 = vpop.f32.mrf.mxu0
      %v1800 = vadd.f32 0.0, %v1799
      %v1801 = vpop.f32.mrf.mxu0
      %1802 = vmatprep.mubr.bf16.mxu0 0
      %1803 = vmatmul.mubr.bf16.gmra.mxu0 %v1690
      %v1804 = vpop.f32.mrf.mxu0
      %v1805 = vadd.f32 0.0, %v1804
      %v1806 = vpop.f32.mrf.mxu0
      %v1807 = vpop.f32.mrf.mxu0
      %v1808 = vadd.f32 0.0, %v1807
      %v1809 = vpop.f32.mrf.mxu0
      %1810 = vmatprep.mubr.bf16.mxu0 0
      %1811 = vmatmul.mubr.bf16.gmra.mxu0 %v1692
      %v1812 = vpop.f32.mrf.mxu0
      %v1813 = vadd.f32 0.0, %v1812
      %v1814 = vpop.f32.mrf.mxu0
      %v1815 = vpop.f32.mrf.mxu0
      %v1816 = vadd.f32 0.0, %v1815
      %v1817 = vpop.f32.mrf.mxu0
      %1818 = vdwg.mxu0
      %v1819 = vadd.f32 %v1616, %v1781
      %v1820 = vadd.f32 %v1617, %v1784
      %v1821 = vadd.f32 %v1618, %v1789
      %v1822 = vadd.f32 %v1619, %v1792
      %v1823 = vadd.f32 %v1620, %v1797
      %v1824 = vadd.f32 %v1621, %v1800
      %v1825 = vadd.f32 %v1622, %v1805
      %v1826 = vadd.f32 %v1623, %v1808
      %v1827 = vadd.f32 %v1624, %v1813
      %v1828 = vadd.f32 %v1625, %v1816
      %v1829 = vld [vmem:[%s203 + $0x2c] sm:$0x3]
      %s1830 = scalar_lea.vmem %s1, 512
      %v1831 = vld [vmem:[%s1830] sm:$0xf]
      %v1832 = vld [vmem:[%s1830 + $0x4] sm:$0xf]
      %v1833 = vld [vmem:[%s1830 + $0x8] sm:$0xf]
      %v1834 = vld [vmem:[%s1830 + $0xc] sm:$0xf]
      %v1835 = vld [vmem:[%s1830 + $0x10] sm:$0xf]
      %v1836 = vld [vmem:[%s1830 + $0x14] sm:$0xf]
      %v1837 = vld [vmem:[%s1830 + $0x18] sm:$0xf]
      %v1838 = vld [vmem:[%s1830 + $0x1c] sm:$0xf]
      %v1839 = vld [vmem:[%s1830 + $0x20] sm:$0xf]
      %v1840 = vld [vmem:[%s1830 + $0x24] sm:$0xf]
      %v1841 = vld [vmem:[%s1830 + $0x28] sm:$0xf]
      %v1842 = vld [vmem:[%s1830 + $0x2c] sm:$0xf]
      %v1843 = vld [vmem:[%s1830 + $0x30] sm:$0xf]
      %v1844 = vld [vmem:[%s1830 + $0x34] sm:$0xf]
      %v1845 = vld [vmem:[%s1830 + $0x38] sm:$0xf]
      %v1846 = vld [vmem:[%s1830 + $0x3c] sm:$0xf]
      %v1848 = vunpack.c.l.b16 %v1829
      %v1849 = vpack.c.b16 %v1848, %v1848
      %vm1850 = vsmask.f32 6400
      %v1852 = vshrl.u32 %v1472, 16
      %v1854 = vrot.slane %v1852, 1
      %v1855 = vshll.u32 %v1472, 16
      %v1857 = vrot.slane %v1855, 2
      %v1858 = vor.u32 %v1854, %v1857
      %v1860 = vshrl.u32 %v1473, 16
      %v1862 = vrot.slane %v1860, 1
      %v1863 = vshll.u32 %v1473, 16
      %v1865 = vrot.slane %v1863, 2
      %v1866 = vor.u32 %v1862, %v1865
      %v1867 = vsel %vm1850, %v1858, %v1866
      %v1869 = vshrl.u32 %v1474, 16
      %v1871 = vrot.slane %v1869, 1
      %v1872 = vshll.u32 %v1474, 16
      %v1874 = vrot.slane %v1872, 2
      %v1875 = vor.u32 %v1871, %v1874
      %v1876 = vsel %vm1850, %v1866, %v1875
      %v1878 = vshrl.u32 %v1475, 16
      %v1880 = vrot.slane %v1878, 1
      %v1881 = vshll.u32 %v1475, 16
      %v1883 = vrot.slane %v1881, 2
      %v1884 = vor.u32 %v1880, %v1883
      %v1885 = vsel %vm1850, %v1875, %v1884
      %v1887 = vshrl.u32 %v1476, 16
      %v1889 = vrot.slane %v1887, 1
      %v1890 = vshll.u32 %v1476, 16
      %v1892 = vrot.slane %v1890, 2
      %v1893 = vor.u32 %v1889, %v1892
      %v1894 = vsel %vm1850, %v1884, %v1893
      %v1896 = vshrl.u32 %v1849, 16
      %v1898 = vrot.slane %v1896, 1
      %v1899 = vshll.u32 %v1849, 16
      %v1901 = vrot.slane %v1899, 2
      %v1902 = vor.u32 %v1898, %v1901
      %v1903 = vsel %vm1850, %v1893, %v1902
      %v1925 = vunpack.c.l.b16 %v1831
      %v1926 = vunpack.c.l.b16 %v1832
      %v1927 = vunpack.c.l.b16 %v1833
      %v1928 = vunpack.c.l.b16 %v1834
      %v1929 = vunpack.c.l.b16 %v1835
      %v1930 = vunpack.c.l.b16 %v1836
      %v1931 = vunpack.c.l.b16 %v1837
      %v1932 = vunpack.c.l.b16 %v1838
      %v1933 = vunpack.c.l.b16 %v1839
      %v1934 = vunpack.c.l.b16 %v1840
      %v1935 = vunpack.c.l.b16 %v1841
      %v1936 = vunpack.c.l.b16 %v1842
      %v1937 = vunpack.c.l.b16 %v1843
      %v1938 = vunpack.c.l.b16 %v1844
      %v1939 = vunpack.c.l.b16 %v1845
      %v1940 = vunpack.c.l.b16 %v1846
      %v1941 = vpack.c.b16 %v1926, %v1925
      %v1942 = vpack.c.b16 %v1928, %v1927
      %v1943 = vpack.c.b16 %v1930, %v1929
      %v1944 = vpack.c.b16 %v1932, %v1931
      %v1945 = vpack.c.b16 %v1934, %v1933
      %v1946 = vpack.c.b16 %v1936, %v1935
      %v1947 = vpack.c.b16 %v1938, %v1937
      %v1948 = vpack.c.b16 %v1940, %v1939
      %1957 = vmatprep.subr.bf16.mxu0 0
      %1958 = vmatpush1.bf16.msra.mxu0 %v1948
      %1959 = vmatprep.subr.bf16.mxu0 0
      %1960 = vmatpush1.bf16.msra.mxu0 %v1947
      %1961 = vmatprep.subr.bf16.mxu0 0
      %1962 = vmatpush1.bf16.msra.mxu0 %v1946
      %1963 = vmatprep.subr.bf16.mxu0 0
      %1964 = vmatpush1.bf16.msra.mxu0 %v1945
      %1965 = vmatprep.subr.bf16.mxu0 0
      %1966 = vmatpush1.bf16.msra.mxu0 %v1944
      %1967 = vmatprep.subr.bf16.mxu0 0
      %1968 = vmatpush1.bf16.msra.mxu0 %v1943
      %1969 = vmatprep.subr.bf16.mxu0 0
      %1970 = vmatpush1.bf16.msra.mxu0 %v1942
      %1971 = vmatprep.subr.bf16.mxu0 0
      %1972 = vmatpush1.bf16.msra.mxu0 %v1941
      %1973 = vmatprep.subr.bf16.mxu0 0
      %1974 = vmatpush2.bf16.msra.mxu0 0
      %1975 = vmatprep.subr.bf16.mxu0 0
      %1976 = vmatpush2.bf16.msra.mxu0 0
      %1977 = vmatprep.subr.bf16.mxu0 0
      %1978 = vmatpush2.bf16.msra.mxu0 0
      %1979 = vmatprep.subr.bf16.mxu0 0
      %1980 = vmatpush2.bf16.msra.mxu0 0
      %1981 = vmatprep.subr.bf16.mxu0 0
      %1982 = vmatpush2.bf16.msra.mxu0 0
      %1983 = vmatprep.subr.bf16.mxu0 0
      %1984 = vmatpush2.bf16.msra.mxu0 0
      %1985 = vmatprep.subr.bf16.mxu0 0
      %1986 = vmatpush2.bf16.msra.mxu0 0
      %1987 = vmatprep.subr.bf16.mxu0 0
      %1988 = vmatpush2.bf16.msra.mxu0 0
      %1989 = vmatprep.mubr.bf16.mxu0 0
      %1990 = vmatmul.mubr.bf16.gmra.mxu0 %v1867
      %v1991 = vpop.f32.mrf.mxu0
      %v1992 = vadd.f32 0.0, %v1991
      %v1993 = vpop.f32.mrf.mxu0
      %v1994 = vpop.f32.mrf.mxu0
      %v1995 = vadd.f32 0.0, %v1994
      %v1996 = vpop.f32.mrf.mxu0
      %1997 = vmatprep.mubr.bf16.mxu0 0
      %1998 = vmatmul.mubr.bf16.gmra.mxu0 %v1876
      %v1999 = vpop.f32.mrf.mxu0
      %v2000 = vadd.f32 0.0, %v1999
      %v2001 = vpop.f32.mrf.mxu0
      %v2002 = vpop.f32.mrf.mxu0
      %v2003 = vadd.f32 0.0, %v2002
      %v2004 = vpop.f32.mrf.mxu0
      %2005 = vmatprep.mubr.bf16.mxu0 0
      %2006 = vmatmul.mubr.bf16.gmra.mxu0 %v1885
      %v2007 = vpop.f32.mrf.mxu0
      %v2008 = vadd.f32 0.0, %v2007
      %v2009 = vpop.f32.mrf.mxu0
      %v2010 = vpop.f32.mrf.mxu0
      %v2011 = vadd.f32 0.0, %v2010
      %v2012 = vpop.f32.mrf.mxu0
      %2013 = vmatprep.mubr.bf16.mxu0 0
      %2014 = vmatmul.mubr.bf16.gmra.mxu0 %v1894
      %v2015 = vpop.f32.mrf.mxu0
      %v2016 = vadd.f32 0.0, %v2015
      %v2017 = vpop.f32.mrf.mxu0
      %v2018 = vpop.f32.mrf.mxu0
      %v2019 = vadd.f32 0.0, %v2018
      %v2020 = vpop.f32.mrf.mxu0
      %2021 = vmatprep.mubr.bf16.mxu0 0
      %2022 = vmatmul.mubr.bf16.gmra.mxu0 %v1903
      %v2023 = vpop.f32.mrf.mxu0
      %v2024 = vadd.f32 0.0, %v2023
      %v2025 = vpop.f32.mrf.mxu0
      %v2026 = vpop.f32.mrf.mxu0
      %v2027 = vadd.f32 0.0, %v2026
      %v2028 = vpop.f32.mrf.mxu0
      %2029 = vdwg.mxu0
      %v2030 = vadd.f32 %v1819, %v1992
      %v2031 = vadd.f32 %v1820, %v1995
      %v2032 = vadd.f32 %v1821, %v2000
      %v2033 = vadd.f32 %v1822, %v2003
      %v2034 = vadd.f32 %v1823, %v2008
      %v2035 = vadd.f32 %v1824, %v2011
      %v2036 = vadd.f32 %v1825, %v2016
      %v2037 = vadd.f32 %v1826, %v2019
      %v2038 = vadd.f32 %v1827, %v2024
      %v2039 = vadd.f32 %v1828, %v2027
      %v2040 = vld [vmem:[%s2] sm:$0xff]
      %v2041 = vld [vmem:[%s2 + $0x8] sm:$0xff]
      %v2042 = vld [vmem:[%s2 + $0x10] sm:$0xff]
      %v2043 = vld [vmem:[%s2 + $0x18] sm:$0xff]
      %v2044 = vld [vmem:[%s2 + $0x20] sm:$0xff]
      %v2045 = vld [vmem:[%s2 + $0x28] sm:$0xff]
      %v2046 = vld [vmem:[%s2 + $0x30] sm:$0xff]
      %v2047 = vld [vmem:[%s2 + $0x38] sm:$0xff]
      %v2048 = vld [vmem:[%s2 + $0x40] sm:$0xff]
      %v2049 = vld [vmem:[%s2 + $0x48] sm:$0xff]
      %2051 = vset.pattern.permute.xlu0 0
      %2052 = vperm.xlu0 %2051, %v2040
      %v2053 = vpop.permute.xlu0 %2052
      %2056 = vset.pattern.permute.xlu0 0
      %2057 = vperm.xlu0 %2056, %v2041
      %v2058 = vpop.permute.xlu0 %2057
      %2061 = vset.pattern.permute.xlu0 0
      %2062 = vperm.xlu0 %2061, %v2042
      %v2063 = vpop.permute.xlu0 %2062
      %2066 = vset.pattern.permute.xlu0 0
      %2067 = vperm.xlu0 %2066, %v2043
      %v2068 = vpop.permute.xlu0 %2067
      %2071 = vset.pattern.permute.xlu0 0
      %2072 = vperm.xlu0 %2071, %v2044
      %v2073 = vpop.permute.xlu0 %2072
      %2076 = vset.pattern.permute.xlu0 0
      %2077 = vperm.xlu0 %2076, %v2045
      %v2078 = vpop.permute.xlu0 %2077
      %2081 = vset.pattern.permute.xlu0 0
      %2082 = vperm.xlu0 %2081, %v2046
      %v2083 = vpop.permute.xlu0 %2082
      %2086 = vset.pattern.permute.xlu0 0
      %2087 = vperm.xlu0 %2086, %v2047
      %v2088 = vpop.permute.xlu0 %2087
      %2091 = vset.pattern.permute.xlu0 0
      %2092 = vperm.xlu0 %2091, %v2048
      %v2093 = vpop.permute.xlu0 %2092
      %2096 = vset.pattern.permute.xlu0 0
      %2097 = vperm.xlu0 %2096, %v2049
      %v2098 = vpop.permute.xlu0 %2097
      %v2100 = vmul.f32 %v2030, %v2053
      %v2101 = vmul.f32 %v2031, %v2058
      %v2102 = vmul.f32 %v2032, %v2063
      %v2103 = vmul.f32 %v2033, %v2068
      %v2104 = vmul.f32 %v2034, %v2073
      %v2105 = vmul.f32 %v2035, %v2078
      %v2106 = vmul.f32 %v2036, %v2083
      %v2107 = vmul.f32 %v2037, %v2088
      %v2108 = vmul.f32 %v2038, %v2093
      %v2109 = vmul.f32 %v2039, %v2098
      %v2110 = vpack.c.bf16 %v2101, %v2100
      %v2111 = vpack.c.bf16 %v2103, %v2102
      %v2112 = vpack.c.bf16 %v2105, %v2104
      %v2113 = vpack.c.bf16 %v2107, %v2106
      %v2114 = vpack.c.bf16 %v2109, %v2108
      %v2120 = vunpack.c.l.b16 %v2110
      %v2121 = vunpack.c.h.b16 %v2110
      %v2122 = vunpack.c.l.b16 %v2111
      %v2123 = vunpack.c.h.b16 %v2111
      %v2124 = vunpack.c.l.b16 %v2112
      %v2125 = vunpack.c.h.b16 %v2112
      %v2126 = vunpack.c.l.b16 %v2113
      %v2127 = vunpack.c.h.b16 %v2113
      %v2128 = vunpack.c.l.b16 %v2114
      %v2129 = vunpack.c.h.b16 %v2114
      %v2130 = vpack.c.b16 %v2120, %v2120
      %v2131 = vpack.c.b16 %v2121, %v2121
      %v2132 = vpack.c.b16 %v2122, %v2122
      %v2133 = vpack.c.b16 %v2123, %v2123
      %v2134 = vpack.c.b16 %v2124, %v2124
      %v2135 = vpack.c.b16 %v2125, %v2125
      %v2136 = vpack.c.b16 %v2126, %v2126
      %v2137 = vpack.c.b16 %v2127, %v2127
      %v2138 = vpack.c.b16 %v2128, %v2128
      %v2139 = vpack.c.b16 %v2129, %v2129
      %2150 = vst [vmem:[%s209] sm:$0xf] %v2130
      %2151 = vst [vmem:[%s209 + $0x4] sm:$0xf] %v2131
      %2152 = vst [vmem:[%s209 + $0x8] sm:$0xf] %v2132
      %2153 = vst [vmem:[%s209 + $0xc] sm:$0xf] %v2133
      %2154 = vst [vmem:[%s209 + $0x10] sm:$0xf] %v2134
      %2155 = vst [vmem:[%s209 + $0x14] sm:$0xf] %v2135
      %2156 = vst [vmem:[%s209 + $0x18] sm:$0xf] %v2136
      %2157 = vst [vmem:[%s209 + $0x1c] sm:$0xf] %v2137
      %2158 = vst [vmem:[%s209 + $0x20] sm:$0xf] %v2138
      %2159 = vst [vmem:[%s209 + $0x24] sm:$0xf] %v2139
      %v2160 = vadd.f32 %v2100, %v2101
      %v2161 = vadd.f32 %v2160, %v2102
      %v2162 = vadd.f32 %v2161, %v2103
      %v2163 = vadd.f32 %v2162, %v2104
      %v2164 = vadd.f32 %v2163, %v2105
      %v2165 = vadd.f32 %v2164, %v2106
      %v2166 = vadd.f32 %v2165, %v2107
      %v2167 = vadd.f32 %v2166, %v2108
      %v2168 = vadd.f32 %v2167, %v2109
      %v2169 = vrot.slane %v2168, 4
      %v2170 = vadd.f32 %v2168, %v2169
      %v2171 = vrot.slane %v2170, 2
      %v2172 = vadd.f32 %v2170, %v2171
      %v2173 = vrot.slane %v2172, 1
      %v2174 = vadd.f32 %v2172, %v2173
      %v2175 = vmul.f32 %v2100, %v2100
      %v2176 = vmul.f32 %v2101, %v2101
      %v2177 = vmul.f32 %v2102, %v2102
      %v2178 = vmul.f32 %v2103, %v2103
      %v2179 = vmul.f32 %v2104, %v2104
      %v2180 = vmul.f32 %v2105, %v2105
      %v2181 = vmul.f32 %v2106, %v2106
      %v2182 = vmul.f32 %v2107, %v2107
      %v2183 = vmul.f32 %v2108, %v2108
      %v2184 = vmul.f32 %v2109, %v2109
      %v2185 = vadd.f32 %v2175, %v2176
      %v2186 = vadd.f32 %v2185, %v2177
      %v2187 = vadd.f32 %v2186, %v2178
      %v2188 = vadd.f32 %v2187, %v2179
      %v2189 = vadd.f32 %v2188, %v2180
      %v2190 = vadd.f32 %v2189, %v2181
      %v2191 = vadd.f32 %v2190, %v2182
      %v2192 = vadd.f32 %v2191, %v2183
      %v2193 = vadd.f32 %v2192, %v2184
      %v2194 = vrot.slane %v2193, 4
      %v2195 = vadd.f32 %v2193, %v2194
      %v2196 = vrot.slane %v2195, 2
      %v2197 = vadd.f32 %v2195, %v2196
      %v2198 = vrot.slane %v2197, 1
      %v2199 = vadd.f32 %v2197, %v2198
      %vm2200 = vcmask 1040384
      %v2201 = vsel %vm2200, %v2174, %v2199
      %vm2202 = vcmask 1041408
      %v2203 = vsel %vm2202, %v2201, 0.0
      %2204 = vst [vmem:[%s213] sm:$0xff] %v2203
      %p2205 = scmp.lt.s32.totalorder %s16, 1
      %s2206 = scalar_select %p2205, %s16, 1
      %s2207 = smul.addr %s2206, 10
      %s2208 = smul.addr %s2207, 4
      %s2209 = scalar_lea.vmem %s3, %s2208
      %p2210 = scmp.lt.s32.totalorder %s16, 1
      %s2211 = scalar_select %p2210, %s16, 1
      %s2212 = smul.addr %s2211, 8
      %s2213 = scalar_lea.vmem %s4, %s2212
      // Predicated region
      $region33: #{basic_block_forward.3} parent=31 // pred_check
        %p2214 = pneg %p102
      $region34: #{basic_block_forward.3} parent=31 // pred_check_branch
        %2216 = sbr.rel (%p2214) target = $region36
      $region35: #{basic_block_forward.3} parent=31 // pred_region
        _
      $region36: #{basic_block_forward.3} parent=31 // pred_fallthru
        _
      // Predicated region
      $region37: #{basic_block_forward.3} parent=31 // pred_check
        %p2217 = pneg %p128
      $region38: #{basic_block_forward.3} parent=31 // pred_check_branch
        %2219 = sbr.rel (%p2217) target = $region40
      $region39: #{basic_block_forward.3} parent=31 // pred_region
        _
      $region40: #{basic_block_forward.3} parent=31 // pred_fallthru
        _
    $region32: #{basic_block_forward.3} parent=5 // pred_fallthru
      _
    %p2220 = scmp.le.s32.totalorder 2, %s11
    // Predicated region
    $region41: #{basic_block_forward.3} parent=5 // pred_check
      %p2221 = pneg %p2220
    $region42: #{basic_block_forward.3} parent=5 // pred_check_branch
      %2223 = sbr.rel (%p2221) target = $region44
    $region43: #{basic_block_forward.3} parent=5 // pred_region
      %s2224 = ssub.s32 %s11, 2
      // Predicated region
      $region45: #{basic_block_forward.3} parent=43 // pred_check
        %p2225 = pneg %p108
      $region46: #{basic_block_forward.3} parent=43 // pred_check_branch
        %2227 = sbr.rel (%p2225) target = $region48
      $region47: #{basic_block_forward.3} parent=43 // pred_region
        %p2228 = scmp.lt.s32.totalorder %s17, 1
        %s2229 = scalar_select %p2228, %s17, 1
        %s2230 = smul.addr %s2229, 10
        %s2231 = smul.addr %s2230, 4
        %s2232 = scalar_lea.vmem %s3, %s2231
      $region48: #{basic_block_forward.3} parent=43 // pred_fallthru
        _
      // Predicated region
      $region49: #{basic_block_forward.3} parent=43 // pred_check
        %p2233 = pneg %p134
      $region50: #{basic_block_forward.3} parent=43 // pred_check_branch
        %2235 = sbr.rel (%p2233) target = $region52
      $region51: #{basic_block_forward.3} parent=43 // pred_region
        %p2236 = scmp.lt.s32.totalorder %s17, 1
        %s2237 = scalar_select %p2236, %s17, 1
        %s2238 = smul.addr %s2237, 8
        %s2239 = scalar_lea.vmem %s4, %s2238
      $region52: #{basic_block_forward.3} parent=43 // pred_fallthru
        _
    $region44: #{basic_block_forward.3} parent=5 // pred_fallthru
      _
  $region6: #{basic_block_forward.3} parent=0 // loop_footer
    %s15 = sadd.s32 1, %s11
  $region7: #{basic_block_forward.3} parent=0 // loop_footer_branch
    %10 = sbr.rel target = $region3
  $region8: #{basic_block_forward.3} parent=0 // loop_exit
    _

// kernel: basic_block_forward.5
$region0: #{basic_block_forward.5}
  #allocation0 [shape = 'u32[]', space=smem, size = 0x4, offset = 0x4, fixed_abs, tag = 'smem constant byte address 0x4 - core index']
  #allocation1 [shape = 'u32[144,128]{1,0:T(1,128)}', space=vmem, size = 0x12000, scoped, tag = 'internal scratch']
  %s0 = inlined_call_operand.vmem [shape: bf16[2,80,128], index: 0, kind: input, shape index: {}]
  %s1 = inlined_call_operand.vmem [shape: bf16[2,80,128], index: 1, kind: input, shape index: {}]
  %s2 = inlined_call_operand.vmem [shape: f32[1,128], index: 2, kind: input, shape index: {}]
  %s3 = inlined_call_operand.vmem [shape: f32[1,128], index: 3, kind: input, shape index: {}]
  %s4 = inlined_call_operand.vmem [shape: f32[1,128], index: 4, kind: input, shape index: {}]
  %s5 = inlined_call_operand.vmem [shape: f32[1,128], index: 5, kind: input, shape index: {}]
  %s6 = inlined_call_operand.vmem [shape: f32[2,80,128], index: 6, kind: output, shape index: {}]
  %s7 = sld [smem:[#allocation0]]
  $region57: #{basic_block_forward.5} parent=0
    _
  %s9 = ssub.s32 1, %s7
  %s10 = scalar_select 0, %s9, %s7
  loop: start=0, step=1, limit=4
  $region2: #{basic_block_forward.5} parent=0 // loop_pre_header
    _
  $region3: #{basic_block_forward.5} parent=0 // loop_header
    %s12 = sphi 0, %s16
    %p13 = scmp.ge.s32.totalorder %s12, 4
    %s22 = sphi 0, %s24
    %s25 = sphi 0, %s22
    %s26 = sphi 0, %s25
    %s42 = sphi 0, %s26
    %s48 = sphi 0, %s50
    %s51 = sphi 0, %s48
    %s52 = sphi 0, %s51
    %s68 = sphi 0, %s52
    %s72 = sphi 0, %s72
    %s74 = sphi 0, %s72
    %s75 = sphi 0, %s74
    %s89 = sphi 0, %s75
    %s93 = sphi 0, %s93
    %s95 = sphi 0, %s93
    %s96 = sphi 0, %s95
    %s110 = sphi 0, %s96
    %s114 = sphi 0, %s114
    %s116 = sphi 0, %s114
    %s117 = sphi 0, %s116
    %s131 = sphi 0, %s117
    %s135 = sphi 0, %s135
    %s137 = sphi 0, %s135
    %s138 = sphi 0, %s137
    %s152 = sphi 0, %s138
    %s158 = sphi 0, %s160
    %s161 = sphi 0, %s158
    %s162 = sphi 0, %s161
    %s178 = sphi 0, %s162
  $region4: #{basic_block_forward.5} parent=0 // loop_header_branch
    %15 = sbr.rel (%p13) target = $region8
  $region5: #{basic_block_forward.5} parent=0 // loop_body
    %s17 = ssub.s32 %s12, 1
    %s18 = ssub.s32 %s12, 2
    %s19 = sadd.s32 %s12, 1
    %s20 = ssub.s32 %s12, %s19
    %p21 = scmp.eq.s32.totalorder %s20, 0
    %s23 = sadd.s32 %s22, 1
    %s24 = scalar_select %p21, %s22, %s23
    %p27 = pneg %p21
    %p28 = scmp.eq.s32.totalorder %s12, 1
    %p29 = por %p27, %p28
    %p30 = scmp.ne.s32.totalorder %s22, %s25
    %p31 = scmp.eq.s32.totalorder %s12, 0
    %p32 = por %p30, %p31
    %p33 = scmp.ne.s32.totalorder %s22, %s25
    %p34 = scmp.eq.s32.totalorder %s17, 1
    %p35 = por %p33, %p34
    %p36 = scmp.ne.s32.totalorder %s25, %s26
    %p37 = scmp.eq.s32.totalorder %s17, 0
    %p38 = por %p36, %p37
    %p39 = scmp.ne.s32.totalorder %s25, %s26
    %p40 = scmp.eq.s32.totalorder %s18, 1
    %p41 = por %p39, %p40
    %p43 = scmp.ne.s32.totalorder %s26, %s42
    %p44 = scmp.eq.s32.totalorder %s18, 0
    %p45 = por %p43, %p44
    %s46 = ssub.s32 %s12, %s19
    %p47 = scmp.eq.s32.totalorder %s46, 0
    %s49 = sadd.s32 %s48, 1
    %s50 = scalar_select %p47, %s48, %s49
    %p53 = pneg %p47
    %p54 = scmp.eq.s32.totalorder %s12, 1
    %p55 = por %p53, %p54
    %p56 = scmp.ne.s32.totalorder %s48, %s51
    %p57 = scmp.eq.s32.totalorder %s12, 0
    %p58 = por %p56, %p57
    %p59 = scmp.ne.s32.totalorder %s48, %s51
    %p60 = scmp.eq.s32.totalorder %s17, 1
    %p61 = por %p59, %p60
    %p62 = scmp.ne.s32.totalorder %s51, %s52
    %p63 = scmp.eq.s32.totalorder %s17, 0
    %p64 = por %p62, %p63
    %p65 = scmp.ne.s32.totalorder %s51, %s52
    %p66 = scmp.eq.s32.totalorder %s18, 1
    %p67 = por %p65, %p66
    %p69 = scmp.ne.s32.totalorder %s52, %s68
    %p70 = scmp.eq.s32.totalorder %s18, 0
    %p71 = por %p69, %p70
    %s73 = sadd.s32 %s72, 1
    %p76 = scmp.eq.s32.totalorder %s12, 1
    %p77 = scmp.ne.s32.totalorder %s72, %s74
    %p78 = scmp.eq.s32.totalorder %s12, 0
    %p79 = por %p77, %p78
    %p80 = scmp.ne.s32.totalorder %s72, %s74
    %p81 = scmp.eq.s32.totalorder %s17, 1
    %p82 = por %p80, %p81
    %p83 = scmp.ne.s32.totalorder %s74, %s75
    %p84 = scmp.eq.s32.totalorder %s17, 0
    %p85 = por %p83, %p84
    %p86 = scmp.ne.s32.totalorder %s74, %s75
    %p87 = scmp.eq.s32.totalorder %s18, 1
    %p88 = por %p86, %p87
    %p90 = scmp.ne.s32.totalorder %s75, %s89
    %p91 = scmp.eq.s32.totalorder %s18, 0
    %p92 = por %p90, %p91
    %s94 = sadd.s32 %s93, 1
    %p97 = scmp.eq.s32.totalorder %s12, 1
    %p98 = scmp.ne.s32.totalorder %s93, %s95
    %p99 = scmp.eq.s32.totalorder %s12, 0
    %p100 = por %p98, %p99
    %p101 = scmp.ne.s32.totalorder %s93, %s95
    %p102 = scmp.eq.s32.totalorder %s17, 1
    %p103 = por %p101, %p102
    %p104 = scmp.ne.s32.totalorder %s95, %s96
    %p105 = scmp.eq.s32.totalorder %s17, 0
    %p106 = por %p104, %p105
    %p107 = scmp.ne.s32.totalorder %s95, %s96
    %p108 = scmp.eq.s32.totalorder %s18, 1
    %p109 = por %p107, %p108
    %p111 = scmp.ne.s32.totalorder %s96, %s110
    %p112 = scmp.eq.s32.totalorder %s18, 0
    %p113 = por %p111, %p112
    %s115 = sadd.s32 %s114, 1
    %p118 = scmp.eq.s32.totalorder %s12, 1
    %p119 = scmp.ne.s32.totalorder %s114, %s116
    %p120 = scmp.eq.s32.totalorder %s12, 0
    %p121 = por %p119, %p120
    %p122 = scmp.ne.s32.totalorder %s114, %s116
    %p123 = scmp.eq.s32.totalorder %s17, 1
    %p124 = por %p122, %p123
    %p125 = scmp.ne.s32.totalorder %s116, %s117
    %p126 = scmp.eq.s32.totalorder %s17, 0
    %p127 = por %p125, %p126
    %p128 = scmp.ne.s32.totalorder %s116, %s117
    %p129 = scmp.eq.s32.totalorder %s18, 1
    %p130 = por %p128, %p129
    %p132 = scmp.ne.s32.totalorder %s117, %s131
    %p133 = scmp.eq.s32.totalorder %s18, 0
    %p134 = por %p132, %p133
    %s136 = sadd.s32 %s135, 1
    %p139 = scmp.eq.s32.totalorder %s12, 1
    %p140 = scmp.ne.s32.totalorder %s135, %s137
    %p141 = scmp.eq.s32.totalorder %s12, 0
    %p142 = por %p140, %p141
    %p143 = scmp.ne.s32.totalorder %s135, %s137
    %p144 = scmp.eq.s32.totalorder %s17, 1
    %p145 = por %p143, %p144
    %p146 = scmp.ne.s32.totalorder %s137, %s138
    %p147 = scmp.eq.s32.totalorder %s17, 0
    %p148 = por %p146, %p147
    %p149 = scmp.ne.s32.totalorder %s137, %s138
    %p150 = scmp.eq.s32.totalorder %s18, 1
    %p151 = por %p149, %p150
    %p153 = scmp.ne.s32.totalorder %s138, %s152
    %p154 = scmp.eq.s32.totalorder %s18, 0
    %p155 = por %p153, %p154
    %s156 = ssub.s32 %s12, %s19
    %p157 = scmp.eq.s32.totalorder %s156, 0
    %s159 = sadd.s32 %s158, 1
    %s160 = scalar_select %p157, %s158, %s159
    %p163 = pneg %p157
    %p164 = scmp.eq.s32.totalorder %s12, 1
    %p165 = por %p163, %p164
    %p166 = scmp.ne.s32.totalorder %s158, %s161
    %p167 = scmp.eq.s32.totalorder %s12, 0
    %p168 = por %p166, %p167
    %p169 = scmp.ne.s32.totalorder %s158, %s161
    %p170 = scmp.eq.s32.totalorder %s17, 1
    %p171 = por %p169, %p170
    %p172 = scmp.ne.s32.totalorder %s161, %s162
    %p173 = scmp.eq.s32.totalorder %s17, 0
    %p174 = por %p172, %p173
    %p175 = scmp.ne.s32.totalorder %s161, %s162
    %p176 = scmp.eq.s32.totalorder %s18, 1
    %p177 = por %p175, %p176
    %p179 = scmp.ne.s32.totalorder %s162, %s178
    %p180 = scmp.eq.s32.totalorder %s18, 0
    %p181 = por %p179, %p180
    %p182 = scmp.le.s32.totalorder 1, %s12
    %p183 = scmp.lt.s32.totalorder %s12, 3
    %p184 = pnand %p182, %p183
    %p185 = pneg %p184
    // Predicated region
    $region9: #{basic_block_forward.5} parent=5 // pred_check
      _
    $region10: #{basic_block_forward.5} parent=5 // pred_check_branch
      %187 = sbr.rel (%p184) target = $region12
    $region11: #{basic_block_forward.5} parent=5 // pred_region
      %s188 = ssub.s32 %s12, 1
      // Predicated region
      $region13: #{basic_block_forward.5} parent=11 // pred_check
        %p189 = pneg %p85
      $region14: #{basic_block_forward.5} parent=11 // pred_check_branch
        %191 = sbr.rel (%p189) target = $region16
      $region15: #{basic_block_forward.5} parent=11 // pred_region
        _
      $region16: #{basic_block_forward.5} parent=11 // pred_fallthru
        _
      // Predicated region
      $region17: #{basic_block_forward.5} parent=11 // pred_check
        %p192 = pneg %p106
      $region18: #{basic_block_forward.5} parent=11 // pred_check_branch
        %194 = sbr.rel (%p192) target = $region20
      $region19: #{basic_block_forward.5} parent=11 // pred_region
        _
      $region20: #{basic_block_forward.5} parent=11 // pred_fallthru
        _
      // Predicated region
      $region21: #{basic_block_forward.5} parent=11 // pred_check
        %p195 = pneg %p127
      $region22: #{basic_block_forward.5} parent=11 // pred_check_branch
        %197 = sbr.rel (%p195) target = $region24
      $region23: #{basic_block_forward.5} parent=11 // pred_region
        _
      $region24: #{basic_block_forward.5} parent=11 // pred_fallthru
        _
      // Predicated region
      $region25: #{basic_block_forward.5} parent=11 // pred_check
        %p198 = pneg %p148
      $region26: #{basic_block_forward.5} parent=11 // pred_check_branch
        %200 = sbr.rel (%p198) target = $region28
      $region27: #{basic_block_forward.5} parent=11 // pred_region
        _
      $region28: #{basic_block_forward.5} parent=11 // pred_fallthru
        _
    $region12: #{basic_block_forward.5} parent=5 // pred_fallthru
      _
    %p201 = scmp.lt.s32.totalorder %s12, 2
    // Predicated region
    $region29: #{basic_block_forward.5} parent=5 // pred_check
      %p202 = pneg %p201
    $region30: #{basic_block_forward.5} parent=5 // pred_check_branch
      %204 = sbr.rel (%p202) target = $region32
    $region31: #{basic_block_forward.5} parent=5 // pred_region
      // Predicated region
      $region33: #{basic_block_forward.5} parent=31 // pred_check
        %p205 = pneg %p32
      $region34: #{basic_block_forward.5} parent=31 // pred_check_branch
        %207 = sbr.rel (%p205) target = $region36
      $region35: #{basic_block_forward.5} parent=31 // pred_region
        %p208 = scmp.lt.s32.totalorder %s12, 1
        %s209 = scalar_select %p208, %s12, 1
        %s210 = smul.addr %s209, 10
        %s211 = smul.addr %s210, 4
        %s212 = scalar_lea.vmem %s0, %s211
      $region36: #{basic_block_forward.5} parent=31 // pred_fallthru
        _
      // Predicated region
      $region37: #{basic_block_forward.5} parent=31 // pred_check
        %p213 = pneg %p58
      $region38: #{basic_block_forward.5} parent=31 // pred_check_branch
        %215 = sbr.rel (%p213) target = $region40
      $region39: #{basic_block_forward.5} parent=31 // pred_region
        %p216 = scmp.lt.s32.totalorder %s12, 1
        %s217 = scalar_select %p216, %s12, 1
        %s218 = smul.addr %s217, 10
        %s219 = smul.addr %s218, 4
        %s220 = scalar_lea.vmem %s1, %s219
      $region40: #{basic_block_forward.5} parent=31 // pred_fallthru
        _
    $region32: #{basic_block_forward.5} parent=5 // pred_fallthru
      _
    %p221 = scmp.le.s32.totalorder 1, %s12
    %p222 = scmp.lt.s32.totalorder %s12, 3
    %p223 = pnand %p221, %p222
    %p224 = pneg %p223
    // Predicated region
    $region41: #{basic_block_forward.5} parent=5 // pred_check
      _
    $region42: #{basic_block_forward.5} parent=5 // pred_check_branch
      %226 = sbr.rel (%p223) target = $region44
    $region43: #{basic_block_forward.5} parent=5 // pred_region
      %s227 = ssub.s32 %s12, 1
      %p228 = scmp.lt.s32.totalorder %s17, 1
      %s229 = scalar_select %p228, %s17, 1
      %s230 = smul.addr %s229, 10
      %s231 = smul.addr %s230, 4
      %s232 = scalar_lea.vmem %s0, %s231
      %p233 = pneg %p38
      %p234 = pneg %p35
      %p235 = scmp.lt.s32.totalorder %s17, 1
      %s236 = scalar_select %p235, %s17, 1
      %s237 = smul.addr %s236, 10
      %s238 = smul.addr %s237, 4
      %s239 = scalar_lea.vmem %s1, %s238
      %p240 = pneg %p64
      %p241 = pneg %p61
      %p242 = pneg %p85
      %p243 = pneg %p82
      %p244 = pneg %p106
      %p245 = pneg %p103
      %p246 = pneg %p127
      %p247 = pneg %p124
      %p248 = pneg %p148
      %p249 = pneg %p145
      %p250 = pneg %p174
      %p251 = pneg %p171
      %p252 = scmp.lt.s32.totalorder %s17, 1
      %s253 = scalar_select %p252, %s17, 1
      %s254 = smul.addr %s253, 10
      %s255 = smul.addr %s254, 8
      %s256 = scalar_lea.vmem %s6, %s255
      %p257 = scmp.lt.s32.totalorder %s17, 1
      %s258 = scalar_select %p257, %s17, 1
      %s259 = smul.addr %s258, 10
      %s260 = smul.addr %s259, 4
      %s261 = scalar_lea.vmem %s0, %s260
      %p262 = scmp.lt.s32.totalorder %s17, 1
      %s263 = scalar_select %p262, %s17, 1
      %s264 = smul.addr %s263, 10
      %s265 = smul.addr %s264, 4
      %s266 = scalar_lea.vmem %s1, %s265
      %p267 = scmp.lt.s32.totalorder %s17, 1
      %s268 = scalar_select %p267, %s17, 1
      %s269 = smul.addr %s268, 10
      %s270 = smul.addr %s269, 8
      %s271 = scalar_lea.vmem %s6, %s270
      %v272 = vld [vmem:[%s261] sm:$0xf]
      %v273 = vld [vmem:[%s261 + $0x4] sm:$0xf]
      %v274 = vld [vmem:[%s261 + $0x8] sm:$0xf]
      %v275 = vld [vmem:[%s261 + $0xc] sm:$0xf]
      %v276 = vld [vmem:[%s261 + $0x10] sm:$0xf]
      %v277 = vld [vmem:[%s261 + $0x14] sm:$0xf]
      %v278 = vld [vmem:[%s261 + $0x18] sm:$0xf]
      %v279 = vld [vmem:[%s261 + $0x1c] sm:$0xf]
      %v280 = vld [vmem:[%s261 + $0x20] sm:$0xf]
      %v281 = vld [vmem:[%s261 + $0x24] sm:$0xf]
      %v282 = vunpack.c.l.bf16 %v272
      %v283 = vunpack.c.l.bf16 %v273
      %v284 = vunpack.c.l.bf16 %v274
      %v285 = vunpack.c.l.bf16 %v275
      %v286 = vunpack.c.l.bf16 %v276
      %v287 = vunpack.c.l.bf16 %v277
      %v288 = vunpack.c.l.bf16 %v278
      %v289 = vunpack.c.l.bf16 %v279
      %v290 = vunpack.c.l.bf16 %v280
      %v291 = vunpack.c.l.bf16 %v281
      %v292 = vld [vmem:[%s2] sm:$0x1]
      %v294 = vlaneseq
      %v295 = vshrl.u32 %v294, 7
      %v296 = vsub.s32 0, %v295
      %v297 = vrot.slane %v292, %v296
      %v299 = vmul.f32 %v282, %v297
      %v300 = vmul.f32 %v283, %v297
      %v301 = vmul.f32 %v284, %v297
      %v302 = vmul.f32 %v285, %v297
      %v303 = vmul.f32 %v286, %v297
      %v304 = vmul.f32 %v287, %v297
      %v305 = vmul.f32 %v288, %v297
      %v306 = vmul.f32 %v289, %v297
      %v307 = vmul.f32 %v290, %v297
      %v308 = vmul.f32 %v291, %v297
      %v309 = vld [vmem:[%s3] sm:$0x1]
      %v311 = vlaneseq
      %v312 = vshrl.u32 %v311, 7
      %v313 = vsub.s32 0, %v312
      %v314 = vrot.slane %v309, %v313
      %v316 = vadd.f32 %v299, %v314
      %v317 = vadd.f32 %v300, %v314
      %v318 = vadd.f32 %v301, %v314
      %v319 = vadd.f32 %v302, %v314
      %v320 = vadd.f32 %v303, %v314
      %v321 = vadd.f32 %v304, %v314
      %v322 = vadd.f32 %v305, %v314
      %v323 = vadd.f32 %v306, %v314
      %v324 = vadd.f32 %v307, %v314
      %v325 = vadd.f32 %v308, %v314
      %v326 = vld [vmem:[%s266] sm:$0xf]
      %v327 = vld [vmem:[%s266 + $0x4] sm:$0xf]
      %v328 = vld [vmem:[%s266 + $0x8] sm:$0xf]
      %v329 = vld [vmem:[%s266 + $0xc] sm:$0xf]
      %v330 = vld [vmem:[%s266 + $0x10] sm:$0xf]
      %v331 = vld [vmem:[%s266 + $0x14] sm:$0xf]
      %v332 = vld [vmem:[%s266 + $0x18] sm:$0xf]
      %v333 = vld [vmem:[%s266 + $0x1c] sm:$0xf]
      %v334 = vld [vmem:[%s266 + $0x20] sm:$0xf]
      %v335 = vld [vmem:[%s266 + $0x24] sm:$0xf]
      %v336 = vunpack.c.l.bf16 %v326
      %v337 = vunpack.c.l.bf16 %v327
      %v338 = vunpack.c.l.bf16 %v328
      %v339 = vunpack.c.l.bf16 %v329
      %v340 = vunpack.c.l.bf16 %v330
      %v341 = vunpack.c.l.bf16 %v331
      %v342 = vunpack.c.l.bf16 %v332
      %v343 = vunpack.c.l.bf16 %v333
      %v344 = vunpack.c.l.bf16 %v334
      %v345 = vunpack.c.l.bf16 %v335
      %v346 = vld [vmem:[%s4] sm:$0x1]
      %v348 = vlaneseq
      %v349 = vshrl.u32 %v348, 7
      %v350 = vsub.s32 0, %v349
      %v351 = vrot.slane %v346, %v350
      %v353 = vmul.f32 %v336, %v351
      %v354 = vmul.f32 %v337, %v351
      %v355 = vmul.f32 %v338, %v351
      %v356 = vmul.f32 %v339, %v351
      %v357 = vmul.f32 %v340, %v351
      %v358 = vmul.f32 %v341, %v351
      %v359 = vmul.f32 %v342, %v351
      %v360 = vmul.f32 %v343, %v351
      %v361 = vmul.f32 %v344, %v351
      %v362 = vmul.f32 %v345, %v351
      %v363 = vld [vmem:[%s5] sm:$0x1]
      %v365 = vlaneseq
      %v366 = vshrl.u32 %v365, 7
      %v367 = vsub.s32 0, %v366
      %v368 = vrot.slane %v363, %v367
      %v370 = vadd.f32 %v353, %v368
      %v371 = vadd.f32 %v354, %v368
      %v372 = vadd.f32 %v355, %v368
      %v373 = vadd.f32 %v356, %v368
      %v374 = vadd.f32 %v357, %v368
      %v375 = vadd.f32 %v358, %v368
      %v376 = vadd.f32 %v359, %v368
      %v377 = vadd.f32 %v360, %v368
      %v378 = vadd.f32 %v361, %v368
      %v379 = vadd.f32 %v362, %v368
      %v380 = vadd.f32 %v316, %v370
      %v381 = vadd.f32 %v317, %v371
      %v382 = vadd.f32 %v318, %v372
      %v383 = vadd.f32 %v319, %v373
      %v384 = vadd.f32 %v320, %v374
      %v385 = vadd.f32 %v321, %v375
      %v386 = vadd.f32 %v322, %v376
      %v387 = vadd.f32 %v323, %v377
      %v388 = vadd.f32 %v324, %v378
      %v389 = vadd.f32 %v325, %v379
      %v390 = vmax.f32 %v380, 0.0
      %v391 = vmax.f32 %v381, 0.0
      %v392 = vmax.f32 %v382, 0.0
      %v393 = vmax.f32 %v383, 0.0
      %v394 = vmax.f32 %v384, 0.0
      %v395 = vmax.f32 %v385, 0.0
      %v396 = vmax.f32 %v386, 0.0
      %v397 = vmax.f32 %v387, 0.0
      %v398 = vmax.f32 %v388, 0.0
      %v399 = vmax.f32 %v389, 0.0
      %400 = vst [vmem:[%s271] sm:$0xff] %v390
      %401 = vst [vmem:[%s271 + $0x8] sm:$0xff] %v391
      %402 = vst [vmem:[%s271 + $0x10] sm:$0xff] %v392
      %403 = vst [vmem:[%s271 + $0x18] sm:$0xff] %v393
      %404 = vst [vmem:[%s271 + $0x20] sm:$0xff] %v394
      %405 = vst [vmem:[%s271 + $0x28] sm:$0xff] %v395
      %406 = vst [vmem:[%s271 + $0x30] sm:$0xff] %v396
      %407 = vst [vmem:[%s271 + $0x38] sm:$0xff] %v397
      %408 = vst [vmem:[%s271 + $0x40] sm:$0xff] %v398
      %409 = vst [vmem:[%s271 + $0x48] sm:$0xff] %v399
      %p410 = scmp.lt.s32.totalorder %s17, 1
      %s411 = scalar_select %p410, %s17, 1
      %s412 = smul.addr %s411, 10
      %s413 = smul.addr %s412, 8
      %s414 = scalar_lea.vmem %s6, %s413
      // Predicated region
      $region45: #{basic_block_forward.5} parent=43 // pred_check
        %p415 = pneg %p171
      $region46: #{basic_block_forward.5} parent=43 // pred_check_branch
        %417 = sbr.rel (%p415) target = $region48
      $region47: #{basic_block_forward.5} parent=43 // pred_region
        _
      $region48: #{basic_block_forward.5} parent=43 // pred_fallthru
        _
    $region44: #{basic_block_forward.5} parent=5 // pred_fallthru
      _
    %p418 = scmp.le.s32.totalorder 2, %s12
    // Predicated region
    $region49: #{basic_block_forward.5} parent=5 // pred_check
      %p419 = pneg %p418
    $region50: #{basic_block_forward.5} parent=5 // pred_check_branch
      %421 = sbr.rel (%p419) target = $region52
    $region51: #{basic_block_forward.5} parent=5 // pred_region
      %s422 = ssub.s32 %s12, 2
      // Predicated region
      $region53: #{basic_block_forward.5} parent=51 // pred_check
        %p423 = pneg %p177
      $region54: #{basic_block_forward.5} parent=51 // pred_check_branch
        %425 = sbr.rel (%p423) target = $region56
      $region55: #{basic_block_forward.5} parent=51 // pred_region
        %p426 = scmp.lt.s32.totalorder %s18, 1
        %s427 = scalar_select %p426, %s18, 1
        %s428 = smul.addr %s427, 10
        %s429 = smul.addr %s428, 8
        %s430 = scalar_lea.vmem %s6, %s429
      $region56: #{basic_block_forward.5} parent=51 // pred_fallthru
        _
    $region52: #{basic_block_forward.5} parent=5 // pred_fallthru
      _
  $region6: #{basic_block_forward.5} parent=0 // loop_footer
    %s16 = sadd.s32 1, %s12
  $region7: #{basic_block_forward.5} parent=0 // loop_footer_branch
    %11 = sbr.rel target = $region3
  $region8: #{basic_block_forward.5} parent=0 // loop_exit
    _

// kernel: basic_block_forward.4
$region0: #{basic_block_forward.4}
  #allocation0 [shape = 'u32[]', space=smem, size = 0x4, offset = 0x4, fixed_abs, tag = 'smem constant byte address 0x4 - core index']
  #allocation1 [shape = 'u32[144,128]{1,0:T(1,128)}', space=vmem, size = 0x12000, scoped, tag = 'internal scratch']
  #allocation2 [shape = 'bf16[110,128]{1,0:T(8,128)(2,1)}', space=vmem, size = 0x7000, scoped, tag = 'scratch operand']
  %s0 = inlined_call_operand.vmem [shape: bf16[2,80,128], index: 0, kind: input, shape index: {}]
  %s1 = inlined_call_operand.vmem [shape: f32[1,128], index: 1, kind: input, shape index: {}]
  %s2 = inlined_call_operand.vmem [shape: f32[1,128], index: 2, kind: input, shape index: {}]
  %s3 = inlined_call_operand.vmem [shape: bf16[9,128,128], index: 3, kind: input, shape index: {}]
  %s4 = inlined_call_operand.vmem [shape: bf16[2,80,128], index: 4, kind: input, shape index: {}]
  %s5 = inlined_call_operand.vmem [shape: bf16[128,128], index: 5, kind: input, shape index: {}]
  %s6 = inlined_call_operand.vmem [shape: f32[80,1], index: 6, kind: input, shape index: {}]
  %s7 = inlined_call_operand.vmem [shape: bf16[2,80,128], index: 7, kind: output, shape index: {0}]
  %s8 = inlined_call_operand.vmem [shape: bf16[2,80,128], index: 8, kind: output, shape index: {1}]
  %s9 = inlined_call_operand.vmem [shape: f32[2,8,128], index: 9, kind: output, shape index: {2}]
  %10 = xla_tuple %s7, %s8, %s9
  %s11 = sld [smem:[#allocation0]]
  $region77: #{basic_block_forward.4} parent=0
    _
  %s13 = ssub.s32 1, %s11
  %s14 = scalar_select 0, %s13, %s11
  loop: start=0, step=1, limit=4
  $region2: #{basic_block_forward.4} parent=0 // loop_pre_header
    _
  $region3: #{basic_block_forward.4} parent=0 // loop_header
    %s16 = sphi 0, %s20
    %p17 = scmp.ge.s32.totalorder %s16, 4
    %s26 = sphi 0, %s28
    %s29 = sphi 0, %s26
    %s30 = sphi 0, %s29
    %s46 = sphi 0, %s30
    %s50 = sphi 0, %s50
    %s52 = sphi 0, %s50
    %s53 = sphi 0, %s52
    %s67 = sphi 0, %s53
    %s71 = sphi 0, %s71
    %s73 = sphi 0, %s71
    %s74 = sphi 0, %s73
    %s88 = sphi 0, %s74
    %s92 = sphi 0, %s92
    %s94 = sphi 0, %s92
    %s95 = sphi 0, %s94
    %s109 = sphi 0, %s95
    %s115 = sphi 0, %s117
    %s118 = sphi 0, %s115
    %s119 = sphi 0, %s118
    %s135 = sphi 0, %s119
    %s139 = sphi 0, %s139
    %s141 = sphi 0, %s139
    %s142 = sphi 0, %s141
    %s156 = sphi 0, %s142
    %s160 = sphi 0, %s160
    %s162 = sphi 0, %s160
    %s163 = sphi 0, %s162
    %s177 = sphi 0, %s163
    %s183 = sphi 0, %s185
    %s186 = sphi 0, %s183
    %s187 = sphi 0, %s186
    %s203 = sphi 0, %s187
    %s209 = sphi 0, %s211
    %s212 = sphi 0, %s209
    %s213 = sphi 0, %s212
    %s229 = sphi 0, %s213
    %s235 = sphi 0, %s237
    %s238 = sphi 0, %s235
    %s239 = sphi 0, %s238
    %s255 = sphi 0, %s239
  $region4: #{basic_block_forward.4} parent=0 // loop_header_branch
    %19 = sbr.rel (%p17) target = $region8
  $region5: #{basic_block_forward.4} parent=0 // loop_body
    %s21 = ssub.s32 %s16, 1
    %s22 = ssub.s32 %s16, 2
    %s23 = sadd.s32 %s16, 1
    %s24 = ssub.s32 %s16, %s23
    %p25 = scmp.eq.s32.totalorder %s24, 0
    %s27 = sadd.s32 %s26, 1
    %s28 = scalar_select %p25, %s26, %s27
    %p31 = pneg %p25
    %p32 = scmp.eq.s32.totalorder %s16, 1
    %p33 = por %p31, %p32
    %p34 = scmp.ne.s32.totalorder %s26, %s29
    %p35 = scmp.eq.s32.totalorder %s16, 0
    %p36 = por %p34, %p35
    %p37 = scmp.ne.s32.totalorder %s26, %s29
    %p38 = scmp.eq.s32.totalorder %s21, 1
    %p39 = por %p37, %p38
    %p40 = scmp.ne.s32.totalorder %s29, %s30
    %p41 = scmp.eq.s32.totalorder %s21, 0
    %p42 = por %p40, %p41
    %p43 = scmp.ne.s32.totalorder %s29, %s30
    %p44 = scmp.eq.s32.totalorder %s22, 1
    %p45 = por %p43, %p44
    %p47 = scmp.ne.s32.totalorder %s30, %s46
    %p48 = scmp.eq.s32.totalorder %s22, 0
    %p49 = por %p47, %p48
    %s51 = sadd.s32 %s50, 1
    %p54 = scmp.eq.s32.totalorder %s16, 1
    %p55 = scmp.ne.s32.totalorder %s50, %s52
    %p56 = scmp.eq.s32.totalorder %s16, 0
    %p57 = por %p55, %p56
    %p58 = scmp.ne.s32.totalorder %s50, %s52
    %p59 = scmp.eq.s32.totalorder %s21, 1
    %p60 = por %p58, %p59
    %p61 = scmp.ne.s32.totalorder %s52, %s53
    %p62 = scmp.eq.s32.totalorder %s21, 0
    %p63 = por %p61, %p62
    %p64 = scmp.ne.s32.totalorder %s52, %s53
    %p65 = scmp.eq.s32.totalorder %s22, 1
    %p66 = por %p64, %p65
    %p68 = scmp.ne.s32.totalorder %s53, %s67
    %p69 = scmp.eq.s32.totalorder %s22, 0
    %p70 = por %p68, %p69
    %s72 = sadd.s32 %s71, 1
    %p75 = scmp.eq.s32.totalorder %s16, 1
    %p76 = scmp.ne.s32.totalorder %s71, %s73
    %p77 = scmp.eq.s32.totalorder %s16, 0
    %p78 = por %p76, %p77
    %p79 = scmp.ne.s32.totalorder %s71, %s73
    %p80 = scmp.eq.s32.totalorder %s21, 1
    %p81 = por %p79, %p80
    %p82 = scmp.ne.s32.totalorder %s73, %s74
    %p83 = scmp.eq.s32.totalorder %s21, 0
    %p84 = por %p82, %p83
    %p85 = scmp.ne.s32.totalorder %s73, %s74
    %p86 = scmp.eq.s32.totalorder %s22, 1
    %p87 = por %p85, %p86
    %p89 = scmp.ne.s32.totalorder %s74, %s88
    %p90 = scmp.eq.s32.totalorder %s22, 0
    %p91 = por %p89, %p90
    %s93 = sadd.s32 %s92, 1
    %p96 = scmp.eq.s32.totalorder %s16, 1
    %p97 = scmp.ne.s32.totalorder %s92, %s94
    %p98 = scmp.eq.s32.totalorder %s16, 0
    %p99 = por %p97, %p98
    %p100 = scmp.ne.s32.totalorder %s92, %s94
    %p101 = scmp.eq.s32.totalorder %s21, 1
    %p102 = por %p100, %p101
    %p103 = scmp.ne.s32.totalorder %s94, %s95
    %p104 = scmp.eq.s32.totalorder %s21, 0
    %p105 = por %p103, %p104
    %p106 = scmp.ne.s32.totalorder %s94, %s95
    %p107 = scmp.eq.s32.totalorder %s22, 1
    %p108 = por %p106, %p107
    %p110 = scmp.ne.s32.totalorder %s95, %s109
    %p111 = scmp.eq.s32.totalorder %s22, 0
    %p112 = por %p110, %p111
    %s113 = ssub.s32 %s16, %s23
    %p114 = scmp.eq.s32.totalorder %s113, 0
    %s116 = sadd.s32 %s115, 1
    %s117 = scalar_select %p114, %s115, %s116
    %p120 = pneg %p114
    %p121 = scmp.eq.s32.totalorder %s16, 1
    %p122 = por %p120, %p121
    %p123 = scmp.ne.s32.totalorder %s115, %s118
    %p124 = scmp.eq.s32.totalorder %s16, 0
    %p125 = por %p123, %p124
    %p126 = scmp.ne.s32.totalorder %s115, %s118
    %p127 = scmp.eq.s32.totalorder %s21, 1
    %p128 = por %p126, %p127
    %p129 = scmp.ne.s32.totalorder %s118, %s119
    %p130 = scmp.eq.s32.totalorder %s21, 0
    %p131 = por %p129, %p130
    %p132 = scmp.ne.s32.totalorder %s118, %s119
    %p133 = scmp.eq.s32.totalorder %s22, 1
    %p134 = por %p132, %p133
    %p136 = scmp.ne.s32.totalorder %s119, %s135
    %p137 = scmp.eq.s32.totalorder %s22, 0
    %p138 = por %p136, %p137
    %s140 = sadd.s32 %s139, 1
    %p143 = scmp.eq.s32.totalorder %s16, 1
    %p144 = scmp.ne.s32.totalorder %s139, %s141
    %p145 = scmp.eq.s32.totalorder %s16, 0
    %p146 = por %p144, %p145
    %p147 = scmp.ne.s32.totalorder %s139, %s141
    %p148 = scmp.eq.s32.totalorder %s21, 1
    %p149 = por %p147, %p148
    %p150 = scmp.ne.s32.totalorder %s141, %s142
    %p151 = scmp.eq.s32.totalorder %s21, 0
    %p152 = por %p150, %p151
    %p153 = scmp.ne.s32.totalorder %s141, %s142
    %p154 = scmp.eq.s32.totalorder %s22, 1
    %p155 = por %p153, %p154
    %p157 = scmp.ne.s32.totalorder %s142, %s156
    %p158 = scmp.eq.s32.totalorder %s22, 0
    %p159 = por %p157, %p158
    %s161 = sadd.s32 %s160, 1
    %p164 = scmp.eq.s32.totalorder %s16, 1
    %p165 = scmp.ne.s32.totalorder %s160, %s162
    %p166 = scmp.eq.s32.totalorder %s16, 0
    %p167 = por %p165, %p166
    %p168 = scmp.ne.s32.totalorder %s160, %s162
    %p169 = scmp.eq.s32.totalorder %s21, 1
    %p170 = por %p168, %p169
    %p171 = scmp.ne.s32.totalorder %s162, %s163
    %p172 = scmp.eq.s32.totalorder %s21, 0
    %p173 = por %p171, %p172
    %p174 = scmp.ne.s32.totalorder %s162, %s163
    %p175 = scmp.eq.s32.totalorder %s22, 1
    %p176 = por %p174, %p175
    %p178 = scmp.ne.s32.totalorder %s163, %s177
    %p179 = scmp.eq.s32.totalorder %s22, 0
    %p180 = por %p178, %p179
    %s181 = ssub.s32 %s16, %s23
    %p182 = scmp.eq.s32.totalorder %s181, 0
    %s184 = sadd.s32 %s183, 1
    %s185 = scalar_select %p182, %s183, %s184
    %p188 = pneg %p182
    %p189 = scmp.eq.s32.totalorder %s16, 1
    %p190 = por %p188, %p189
    %p191 = scmp.ne.s32.totalorder %s183, %s186
    %p192 = scmp.eq.s32.totalorder %s16, 0
    %p193 = por %p191, %p192
    %p194 = scmp.ne.s32.totalorder %s183, %s186
    %p195 = scmp.eq.s32.totalorder %s21, 1
    %p196 = por %p194, %p195
    %p197 = scmp.ne.s32.totalorder %s186, %s187
    %p198 = scmp.eq.s32.totalorder %s21, 0
    %p199 = por %p197, %p198
    %p200 = scmp.ne.s32.totalorder %s186, %s187
    %p201 = scmp.eq.s32.totalorder %s22, 1
    %p202 = por %p200, %p201
    %p204 = scmp.ne.s32.totalorder %s187, %s203
    %p205 = scmp.eq.s32.totalorder %s22, 0
    %p206 = por %p204, %p205
    %s207 = ssub.s32 %s16, %s23
    %p208 = scmp.eq.s32.totalorder %s207, 0
    %s210 = sadd.s32 %s209, 1
    %s211 = scalar_select %p208, %s209, %s210
    %p214 = pneg %p208
    %p215 = scmp.eq.s32.totalorder %s16, 1
    %p216 = por %p214, %p215
    %p217 = scmp.ne.s32.totalorder %s209, %s212
    %p218 = scmp.eq.s32.totalorder %s16, 0
    %p219 = por %p217, %p218
    %p220 = scmp.ne.s32.totalorder %s209, %s212
    %p221 = scmp.eq.s32.totalorder %s21, 1
    %p222 = por %p220, %p221
    %p223 = scmp.ne.s32.totalorder %s212, %s213
    %p224 = scmp.eq.s32.totalorder %s21, 0
    %p225 = por %p223, %p224
    %p226 = scmp.ne.s32.totalorder %s212, %s213
    %p227 = scmp.eq.s32.totalorder %s22, 1
    %p228 = por %p226, %p227
    %p230 = scmp.ne.s32.totalorder %s213, %s229
    %p231 = scmp.eq.s32.totalorder %s22, 0
    %p232 = por %p230, %p231
    %s233 = ssub.s32 %s16, %s23
    %p234 = scmp.eq.s32.totalorder %s233, 0
    %s236 = sadd.s32 %s235, 1
    %s237 = scalar_select %p234, %s235, %s236
    %p240 = pneg %p234
    %p241 = scmp.eq.s32.totalorder %s16, 1
    %p242 = por %p240, %p241
    %p243 = scmp.ne.s32.totalorder %s235, %s238
    %p244 = scmp.eq.s32.totalorder %s16, 0
    %p245 = por %p243, %p244
    %p246 = scmp.ne.s32.totalorder %s235, %s238
    %p247 = scmp.eq.s32.totalorder %s21, 1
    %p248 = por %p246, %p247
    %p249 = scmp.ne.s32.totalorder %s238, %s239
    %p250 = scmp.eq.s32.totalorder %s21, 0
    %p251 = por %p249, %p250
    %p252 = scmp.ne.s32.totalorder %s238, %s239
    %p253 = scmp.eq.s32.totalorder %s22, 1
    %p254 = por %p252, %p253
    %p256 = scmp.ne.s32.totalorder %s239, %s255
    %p257 = scmp.eq.s32.totalorder %s22, 0
    %p258 = por %p256, %p257
    %p259 = scmp.le.s32.totalorder 1, %s16
    %p260 = scmp.lt.s32.totalorder %s16, 3
    %p261 = pnand %p259, %p260
    %p262 = pneg %p261
    // Predicated region
    $region9: #{basic_block_forward.4} parent=5 // pred_check
      _
    $region10: #{basic_block_forward.4} parent=5 // pred_check_branch
      %264 = sbr.rel (%p261) target = $region12
    $region11: #{basic_block_forward.4} parent=5 // pred_region
      %s265 = ssub.s32 %s16, 1
      // Predicated region
      $region13: #{basic_block_forward.4} parent=11 // pred_check
        %p266 = pneg %p63
      $region14: #{basic_block_forward.4} parent=11 // pred_check_branch
        %268 = sbr.rel (%p266) target = $region16
      $region15: #{basic_block_forward.4} parent=11 // pred_region
        _
      $region16: #{basic_block_forward.4} parent=11 // pred_fallthru
        _
      // Predicated region
      $region17: #{basic_block_forward.4} parent=11 // pred_check
        %p269 = pneg %p84
      $region18: #{basic_block_forward.4} parent=11 // pred_check_branch
        %271 = sbr.rel (%p269) target = $region20
      $region19: #{basic_block_forward.4} parent=11 // pred_region
        _
      $region20: #{basic_block_forward.4} parent=11 // pred_fallthru
        _
      // Predicated region
      $region21: #{basic_block_forward.4} parent=11 // pred_check
        %p272 = pneg %p105
      $region22: #{basic_block_forward.4} parent=11 // pred_check_branch
        %274 = sbr.rel (%p272) target = $region24
      $region23: #{basic_block_forward.4} parent=11 // pred_region
        _
      $region24: #{basic_block_forward.4} parent=11 // pred_fallthru
        _
      // Predicated region
      $region25: #{basic_block_forward.4} parent=11 // pred_check
        %p275 = pneg %p152
      $region26: #{basic_block_forward.4} parent=11 // pred_check_branch
        %277 = sbr.rel (%p275) target = $region28
      $region27: #{basic_block_forward.4} parent=11 // pred_region
        _
      $region28: #{basic_block_forward.4} parent=11 // pred_fallthru
        _
      // Predicated region
      $region29: #{basic_block_forward.4} parent=11 // pred_check
        %p278 = pneg %p173
      $region30: #{basic_block_forward.4} parent=11 // pred_check_branch
        %280 = sbr.rel (%p278) target = $region32
      $region31: #{basic_block_forward.4} parent=11 // pred_region
        _
      $region32: #{basic_block_forward.4} parent=11 // pred_fallthru
        _
    $region12: #{basic_block_forward.4} parent=5 // pred_fallthru
      _
    %p281 = scmp.lt.s32.totalorder %s16, 2
    // Predicated region
    $region33: #{basic_block_forward.4} parent=5 // pred_check
      %p282 = pneg %p281
    $region34: #{basic_block_forward.4} parent=5 // pred_check_branch
      %284 = sbr.rel (%p282) target = $region36
    $region35: #{basic_block_forward.4} parent=5 // pred_region
      // Predicated region
      $region37: #{basic_block_forward.4} parent=35 // pred_check
        %p285 = pneg %p36
      $region38: #{basic_block_forward.4} parent=35 // pred_check_branch
        %287 = sbr.rel (%p285) target = $region40
      $region39: #{basic_block_forward.4} parent=35 // pred_region
        %p288 = scmp.lt.s32.totalorder %s16, 1
        %s289 = scalar_select %p288, %s16, 1
        %s290 = smul.addr %s289, 10
        %s291 = smul.addr %s290, 4
        %s292 = scalar_lea.vmem %s0, %s291
      $region40: #{basic_block_forward.4} parent=35 // pred_fallthru
        _
      // Predicated region
      $region41: #{basic_block_forward.4} parent=35 // pred_check
        %p293 = pneg %p125
      $region42: #{basic_block_forward.4} parent=35 // pred_check_branch
        %295 = sbr.rel (%p293) target = $region44
      $region43: #{basic_block_forward.4} parent=35 // pred_region
        %p296 = scmp.lt.s32.totalorder %s16, 1
        %s297 = scalar_select %p296, %s16, 1
        %s298 = smul.addr %s297, 10
        %s299 = smul.addr %s298, 4
        %s300 = scalar_lea.vmem %s4, %s299
      $region44: #{basic_block_forward.4} parent=35 // pred_fallthru
        _
    $region36: #{basic_block_forward.4} parent=5 // pred_fallthru
      _
    %p301 = scmp.le.s32.totalorder 1, %s16
    %p302 = scmp.lt.s32.totalorder %s16, 3
    %p303 = pnand %p301, %p302
    %p304 = pneg %p303
    // Predicated region
    $region45: #{basic_block_forward.4} parent=5 // pred_check
      _
    $region46: #{basic_block_forward.4} parent=5 // pred_check_branch
      %306 = sbr.rel (%p303) target = $region48
    $region47: #{basic_block_forward.4} parent=5 // pred_region
      %s307 = ssub.s32 %s16, 1
      %p308 = scmp.lt.s32.totalorder %s21, 1
      %s309 = scalar_select %p308, %s21, 1
      %s310 = smul.addr %s309, 10
      %s311 = smul.addr %s310, 4
      %s312 = scalar_lea.vmem %s0, %s311
      %p313 = pneg %p42
      %p314 = pneg %p39
      %p315 = pneg %p63
      %p316 = pneg %p60
      %p317 = pneg %p84
      %p318 = pneg %p81
      %p319 = pneg %p105
      %p320 = pneg %p102
      %p321 = scmp.lt.s32.totalorder %s21, 1
      %s322 = scalar_select %p321, %s21, 1
      %s323 = smul.addr %s322, 10
      %s324 = smul.addr %s323, 4
      %s325 = scalar_lea.vmem %s4, %s324
      %p326 = pneg %p131
      %p327 = pneg %p128
      %p328 = pneg %p152
      %p329 = pneg %p149
      %p330 = pneg %p173
      %p331 = pneg %p170
      %p332 = pneg %p199
      %p333 = pneg %p196
      %p334 = scmp.lt.s32.totalorder %s21, 1
      %s335 = scalar_select %p334, %s21, 1
      %s336 = smul.addr %s335, 10
      %s337 = smul.addr %s336, 4
      %s338 = scalar_lea.vmem %s7, %s337
      %p339 = pneg %p225
      %p340 = pneg %p222
      %p341 = scmp.lt.s32.totalorder %s21, 1
      %s342 = scalar_select %p341, %s21, 1
      %s343 = smul.addr %s342, 10
      %s344 = smul.addr %s343, 4
      %s345 = scalar_lea.vmem %s8, %s344
      %p346 = pneg %p251
      %p347 = pneg %p248
      %p348 = scmp.lt.s32.totalorder %s21, 1
      %s349 = scalar_select %p348, %s21, 1
      %s350 = smul.addr %s349, 8
      %s351 = scalar_lea.vmem %s9, %s350
      %p352 = scmp.lt.s32.totalorder %s21, 1
      %s353 = scalar_select %p352, %s21, 1
      %s354 = smul.addr %s353, 10
      %s355 = smul.addr %s354, 4
      %s356 = scalar_lea.vmem %s0, %s355
      %p357 = scmp.lt.s32.totalorder %s21, 1
      %s358 = scalar_select %p357, %s21, 1
      %s359 = smul.addr %s358, 10
      %s360 = smul.addr %s359, 4
      %s361 = scalar_lea.vmem %s4, %s360
      %p362 = scmp.lt.s32.totalorder %s21, 1
      %s363 = scalar_select %p362, %s21, 1
      %s364 = smul.addr %s363, 10
      %s365 = smul.addr %s364, 4
      %s366 = scalar_lea.vmem %s7, %s365
      %p367 = scmp.lt.s32.totalorder %s21, 1
      %s368 = scalar_select %p367, %s21, 1
      %s369 = smul.addr %s368, 10
      %s370 = smul.addr %s369, 4
      %s371 = scalar_lea.vmem %s8, %s370
      %p372 = scmp.lt.s32.totalorder %s21, 1
      %s373 = scalar_select %p372, %s21, 1
      %s374 = smul.addr %s373, 8
      %s375 = scalar_lea.vmem %s9, %s374
      %377 = vst [vmem:[#allocation2] sm:$0xf] 0
      %378 = vst [vmem:[#allocation2 + $0x4] sm:$0xf] 0
      %379 = vst [vmem:[#allocation2 + $0x8] sm:$0xf] 0
      %380 = vst [vmem:[#allocation2 + $0xc] sm:$0xf] 0
      %381 = vst [vmem:[#allocation2 + $0x10] sm:$0xf] 0
      %382 = vst [vmem:[#allocation2 + $0x14] sm:$0xf] 0
      %383 = vst [vmem:[#allocation2 + $0x18] sm:$0xf] 0
      %384 = vst [vmem:[#allocation2 + $0x1c] sm:$0xf] 0
      %385 = vst [vmem:[#allocation2 + $0x20] sm:$0xf] 0
      %386 = vst [vmem:[#allocation2 + $0x24] sm:$0xf] 0
      %387 = vst [vmem:[#allocation2 + $0x28] sm:$0xf] 0
      %388 = vst [vmem:[#allocation2 + $0x2c] sm:$0xf] 0
      %389 = vst [vmem:[#allocation2 + $0x30] sm:$0xf] 0
      %390 = vst [vmem:[#allocation2 + $0x34] sm:$0x7] 0
      %v391 = vld [vmem:[%s356] sm:$0xf]
      %v392 = vld [vmem:[%s356 + $0x4] sm:$0xf]
      %v393 = vld [vmem:[%s356 + $0x8] sm:$0xf]
      %v394 = vld [vmem:[%s356 + $0xc] sm:$0xf]
      %v395 = vld [vmem:[%s356 + $0x10] sm:$0xf]
      %v396 = vld [vmem:[%s356 + $0x14] sm:$0xf]
      %v397 = vld [vmem:[%s356 + $0x18] sm:$0xf]
      %v398 = vld [vmem:[%s356 + $0x1c] sm:$0xf]
      %v399 = vld [vmem:[%s356 + $0x20] sm:$0xf]
      %v400 = vld [vmem:[%s356 + $0x24] sm:$0xf]
      %v401 = vunpack.c.l.bf16 %v391
      %v402 = vunpack.c.l.bf16 %v392
      %v403 = vunpack.c.l.bf16 %v393
      %v404 = vunpack.c.l.bf16 %v394
      %v405 = vunpack.c.l.bf16 %v395
      %v406 = vunpack.c.l.bf16 %v396
      %v407 = vunpack.c.l.bf16 %v397
      %v408 = vunpack.c.l.bf16 %v398
      %v409 = vunpack.c.l.bf16 %v399
      %v410 = vunpack.c.l.bf16 %v400
      %v411 = vld [vmem:[%s1] sm:$0x1]
      %v413 = vlaneseq
      %v414 = vshrl.u32 %v413, 7
      %v415 = vsub.s32 0, %v414
      %v416 = vrot.slane %v411, %v415
      %v418 = vmul.f32 %v401, %v416
      %v419 = vmul.f32 %v402, %v416
      %v420 = vmul.f32 %v403, %v416
      %v421 = vmul.f32 %v404, %v416
      %v422 = vmul.f32 %v405, %v416
      %v423 = vmul.f32 %v406, %v416
      %v424 = vmul.f32 %v407, %v416
      %v425 = vmul.f32 %v408, %v416
      %v426 = vmul.f32 %v409, %v416
      %v427 = vmul.f32 %v410, %v416
      %v428 = vld [vmem:[%s2] sm:$0x1]
      %v430 = vlaneseq
      %v431 = vshrl.u32 %v430, 7
      %v432 = vsub.s32 0, %v431
      %v433 = vrot.slane %v428, %v432
      %v435 = vadd.f32 %v418, %v433
      %v436 = vadd.f32 %v419, %v433
      %v437 = vadd.f32 %v420, %v433
      %v438 = vadd.f32 %v421, %v433
      %v439 = vadd.f32 %v422, %v433
      %v440 = vadd.f32 %v423, %v433
      %v441 = vadd.f32 %v424, %v433
      %v442 = vadd.f32 %v425, %v433
      %v443 = vadd.f32 %v426, %v433
      %v444 = vadd.f32 %v427, %v433
      %v445 = vmax.f32 %v435, 0.0
      %v446 = vmax.f32 %v436, 0.0
      %v447 = vmax.f32 %v437, 0.0
      %v448 = vmax.f32 %v438, 0.0
      %v449 = vmax.f32 %v439, 0.0
      %v450 = vmax.f32 %v440, 0.0
      %v451 = vmax.f32 %v441, 0.0
      %v452 = vmax.f32 %v442, 0.0
      %v453 = vmax.f32 %v443, 0.0
      %v454 = vmax.f32 %v444, 0.0
      %v455 = vld [vmem:[%s6] sm:$0xff]
      %v456 = vld [vmem:[%s6 + $0x8] sm:$0xff]
      %v457 = vld [vmem:[%s6 + $0x10] sm:$0xff]
      %v458 = vld [vmem:[%s6 + $0x18] sm:$0xff]
      %v459 = vld [vmem:[%s6 + $0x20] sm:$0xff]
      %v460 = vld [vmem:[%s6 + $0x28] sm:$0xff]
      %v461 = vld [vmem:[%s6 + $0x30] sm:$0xff]
      %v462 = vld [vmem:[%s6 + $0x38] sm:$0xff]
      %v463 = vld [vmem:[%s6 + $0x40] sm:$0xff]
      %v464 = vld [vmem:[%s6 + $0x48] sm:$0xff]
      %466 = vset.pattern.permute.xlu0 0
      %467 = vperm.xlu0 %466, %v455
      %v468 = vpop.permute.xlu0 %467
      %471 = vset.pattern.permute.xlu0 0
      %472 = vperm.xlu0 %471, %v456
      %v473 = vpop.permute.xlu0 %472
      %476 = vset.pattern.permute.xlu0 0
      %477 = vperm.xlu0 %476, %v457
      %v478 = vpop.permute.xlu0 %477
      %481 = vset.pattern.permute.xlu0 0
      %482 = vperm.xlu0 %481, %v458
      %v483 = vpop.permute.xlu0 %482
      %486 = vset.pattern.permute.xlu0 0
      %487 = vperm.xlu0 %486, %v459
      %v488 = vpop.permute.xlu0 %487
      %491 = vset.pattern.permute.xlu0 0
      %492 = vperm.xlu0 %491, %v460
      %v493 = vpop.permute.xlu0 %492
      %496 = vset.pattern.permute.xlu0 0
      %497 = vperm.xlu0 %496, %v461
      %v498 = vpop.permute.xlu0 %497
      %501 = vset.pattern.permute.xlu0 0
      %502 = vperm.xlu0 %501, %v462
      %v503 = vpop.permute.xlu0 %502
      %506 = vset.pattern.permute.xlu0 0
      %507 = vperm.xlu0 %506, %v463
      %v508 = vpop.permute.xlu0 %507
      %511 = vset.pattern.permute.xlu0 0
      %512 = vperm.xlu0 %511, %v464
      %v513 = vpop.permute.xlu0 %512
      %v515 = vmul.f32 %v445, %v468
      %v516 = vmul.f32 %v446, %v473
      %v517 = vmul.f32 %v447, %v478
      %v518 = vmul.f32 %v448, %v483
      %v519 = vmul.f32 %v449, %v488
      %v520 = vmul.f32 %v450, %v493
      %v521 = vmul.f32 %v451, %v498
      %v522 = vmul.f32 %v452, %v503
      %v523 = vmul.f32 %v453, %v508
      %v524 = vmul.f32 %v454, %v513
      %v525 = vpack.c.bf16 %v516, %v515
      %v526 = vpack.c.bf16 %v518, %v517
      %v527 = vpack.c.bf16 %v520, %v519
      %v528 = vpack.c.bf16 %v522, %v521
      %v529 = vpack.c.bf16 %v524, %v523
      %v535 = vunpack.c.l.b16 %v525
      %v536 = vunpack.c.h.b16 %v525
      %v537 = vunpack.c.l.b16 %v526
      %v538 = vunpack.c.h.b16 %v526
      %v539 = vunpack.c.l.b16 %v527
      %v540 = vunpack.c.h.b16 %v527
      %v541 = vunpack.c.l.b16 %v528
      %v542 = vunpack.c.h.b16 %v528
      %v543 = vunpack.c.l.b16 %v529
      %v544 = vunpack.c.h.b16 %v529
      %v545 = vpack.c.b16 %v535, %v535
      %v546 = vpack.c.b16 %v536, %v536
      %v547 = vpack.c.b16 %v537, %v537
      %v548 = vpack.c.b16 %v538, %v538
      %v549 = vpack.c.b16 %v539, %v539
      %v550 = vpack.c.b16 %v540, %v540
      %v551 = vpack.c.b16 %v541, %v541
      %v552 = vpack.c.b16 %v542, %v542
      %v553 = vpack.c.b16 %v543, %v543
      %v554 = vpack.c.b16 %v544, %v544
      %vm555 = vsmask.f32 1280
      %vm556 = vsmask.f32 5392
      %vm557 = vmor %vm555, %vm556
      %v559 = vshrl.u32 %v545, 16
      %v561 = vrot.slane %v559, 6
      %v562 = vshll.u32 %v545, 16
      %v564 = vrot.slane %v562, 7
      %v565 = vor.u32 %v561, %v564
      %v566 = vrot.slane %v565, 4
      %v568 = vshrl.u32 %v546, 16
      %v570 = vrot.slane %v568, 6
      %v571 = vshll.u32 %v546, 16
      %v573 = vrot.slane %v571, 7
      %v574 = vor.u32 %v570, %v573
      %v575 = vsel %vm557, %v566, %v574
      %v576 = vrot.slane %v574, 4
      %v578 = vshrl.u32 %v547, 16
      %v580 = vrot.slane %v578, 6
      %v581 = vshll.u32 %v547, 16
      %v583 = vrot.slane %v581, 7
      %v584 = vor.u32 %v580, %v583
      %v585 = vsel %vm557, %v576, %v584
      %v586 = vrot.slane %v584, 4
      %v588 = vshrl.u32 %v548, 16
      %v590 = vrot.slane %v588, 6
      %v591 = vshll.u32 %v548, 16
      %v593 = vrot.slane %v591, 7
      %v594 = vor.u32 %v590, %v593
      %v595 = vsel %vm557, %v586, %v594
      %v596 = vrot.slane %v594, 4
      %v598 = vshrl.u32 %v549, 16
      %v600 = vrot.slane %v598, 6
      %v601 = vshll.u32 %v549, 16
      %v603 = vrot.slane %v601, 7
      %v604 = vor.u32 %v600, %v603
      %v605 = vsel %vm557, %v596, %v604
      %v606 = vrot.slane %v604, 4
      %v608 = vshrl.u32 %v550, 16
      %v610 = vrot.slane %v608, 6
      %v611 = vshll.u32 %v550, 16
      %v613 = vrot.slane %v611, 7
      %v614 = vor.u32 %v610, %v613
      %v615 = vsel %vm557, %v606, %v614
      %v616 = vrot.slane %v614, 4
      %v618 = vshrl.u32 %v551, 16
      %v620 = vrot.slane %v618, 6
      %v621 = vshll.u32 %v551, 16
      %v623 = vrot.slane %v621, 7
      %v624 = vor.u32 %v620, %v623
      %v625 = vsel %vm557, %v616, %v624
      %v626 = vrot.slane %v624, 4
      %v628 = vshrl.u32 %v552, 16
      %v630 = vrot.slane %v628, 6
      %v631 = vshll.u32 %v552, 16
      %v633 = vrot.slane %v631, 7
      %v634 = vor.u32 %v630, %v633
      %v635 = vsel %vm557, %v626, %v634
      %v636 = vrot.slane %v634, 4
      %v638 = vshrl.u32 %v553, 16
      %v640 = vrot.slane %v638, 6
      %v641 = vshll.u32 %v553, 16
      %v643 = vrot.slane %v641, 7
      %v644 = vor.u32 %v640, %v643
      %v645 = vsel %vm557, %v636, %v644
      %v646 = vrot.slane %v644, 4
      %v648 = vshrl.u32 %v554, 16
      %v650 = vrot.slane %v648, 6
      %v651 = vshll.u32 %v554, 16
      %v653 = vrot.slane %v651, 7
      %v654 = vor.u32 %v650, %v653
      %v655 = vsel %vm557, %v646, %v654
      %v656 = vrot.slane %v654, 4
      %vm668 = vcmask 1043457
      %vm669 = vsmask.f32 7942
      %vm670 = vmand %vm668, %vm669
      %v671 = vld [vmem:[#allocation2 + $0x4] sm:$0xe]
      %v672 = vsel %vm670, %v565, %v671
      %673 = vst [vmem:[#allocation2 + $0x4] sm:$0xe] %v672
      %674 = vst [vmem:[#allocation2 + $0x8] sm:$0xf] %v575
      %675 = vst [vmem:[#allocation2 + $0xc] sm:$0xf] %v585
      %676 = vst [vmem:[#allocation2 + $0x10] sm:$0xf] %v595
      %677 = vst [vmem:[#allocation2 + $0x14] sm:$0xf] %v605
      %678 = vst [vmem:[#allocation2 + $0x18] sm:$0xf] %v615
      %679 = vst [vmem:[#allocation2 + $0x1c] sm:$0xf] %v625
      %680 = vst [vmem:[#allocation2 + $0x20] sm:$0xf] %v635
      %681 = vst [vmem:[#allocation2 + $0x24] sm:$0xf] %v645
      %682 = vst [vmem:[#allocation2 + $0x28] sm:$0xf] %v655
      %vm683 = vcmask 1041408
      %vm684 = vmand %vm683, %vm555
      %v685 = vld [vmem:[#allocation2 + $0x2c] sm:$0x3]
      %v686 = vsel %vm684, %v656, %v685
      %687 = vst [vmem:[#allocation2 + $0x2c] sm:$0x3] %v686
      %v688 = vld [vmem:[#allocation2] sm:$0xf]
      %v689 = vld [vmem:[#allocation2 + $0x4] sm:$0xf]
      %v690 = vld [vmem:[#allocation2 + $0x8] sm:$0xf]
      %v691 = vld [vmem:[#allocation2 + $0xc] sm:$0xf]
      %v692 = vld [vmem:[#allocation2 + $0x10] sm:$0xf]
      %v693 = vld [vmem:[#allocation2 + $0x14] sm:$0xf]
      %v694 = vld [vmem:[#allocation2 + $0x18] sm:$0xf]
      %v695 = vld [vmem:[#allocation2 + $0x1c] sm:$0xf]
      %v696 = vld [vmem:[#allocation2 + $0x20] sm:$0xf]
      %v697 = vld [vmem:[#allocation2 + $0x24] sm:$0xf]
      %v698 = vld [vmem:[%s3] sm:$0xf]
      %v699 = vld [vmem:[%s3 + $0x4] sm:$0xf]
      %v700 = vld [vmem:[%s3 + $0x8] sm:$0xf]
      %v701 = vld [vmem:[%s3 + $0xc] sm:$0xf]
      %v702 = vld [vmem:[%s3 + $0x10] sm:$0xf]
      %v703 = vld [vmem:[%s3 + $0x14] sm:$0xf]
      %v704 = vld [vmem:[%s3 + $0x18] sm:$0xf]
      %v705 = vld [vmem:[%s3 + $0x1c] sm:$0xf]
      %v706 = vld [vmem:[%s3 + $0x20] sm:$0xf]
      %v707 = vld [vmem:[%s3 + $0x24] sm:$0xf]
      %v708 = vld [vmem:[%s3 + $0x28] sm:$0xf]
      %v709 = vld [vmem:[%s3 + $0x2c] sm:$0xf]
      %v710 = vld [vmem:[%s3 + $0x30] sm:$0xf]
      %v711 = vld [vmem:[%s3 + $0x34] sm:$0xf]
      %v712 = vld [vmem:[%s3 + $0x38] sm:$0xf]
      %v713 = vld [vmem:[%s3 + $0x3c] sm:$0xf]
      %v714 = vld [vmem:[#allocation2 + $0x28] sm:$0x1]
      %s715 = scalar_lea.vmem %s3, 64
      %v716 = vld [vmem:[%s715] sm:$0xf]
      %v717 = vld [vmem:[%s715 + $0x4] sm:$0xf]
      %v718 = vld [vmem:[%s715 + $0x8] sm:$0xf]
      %v719 = vld [vmem:[%s715 + $0xc] sm:$0xf]
      %v720 = vld [vmem:[%s715 + $0x10] sm:$0xf]
      %v721 = vld [vmem:[%s715 + $0x14] sm:$0xf]
      %v722 = vld [vmem:[%s715 + $0x18] sm:$0xf]
      %v723 = vld [vmem:[%s715 + $0x1c] sm:$0xf]
      %v724 = vld [vmem:[%s715 + $0x20] sm:$0xf]
      %v725 = vld [vmem:[%s715 + $0x24] sm:$0xf]
      %v726 = vld [vmem:[%s715 + $0x28] sm:$0xf]
      %v727 = vld [vmem:[%s715 + $0x2c] sm:$0xf]
      %v728 = vld [vmem:[%s715 + $0x30] sm:$0xf]
      %v729 = vld [vmem:[%s715 + $0x34] sm:$0xf]
      %v730 = vld [vmem:[%s715 + $0x38] sm:$0xf]
      %v731 = vld [vmem:[%s715 + $0x3c] sm:$0xf]
      %v743 = vunpack.c.l.b16 %v688
      %v744 = vunpack.c.l.b16 %v689
      %v745 = vunpack.c.l.b16 %v690
      %v746 = vunpack.c.l.b16 %v691
      %v747 = vunpack.c.l.b16 %v692
      %v748 = vunpack.c.l.b16 %v693
      %v749 = vunpack.c.l.b16 %v694
      %v750 = vunpack.c.l.b16 %v695
      %v751 = vunpack.c.l.b16 %v696
      %v752 = vunpack.c.l.b16 %v697
      %v753 = vunpack.c.l.b16 %v714
      %v754 = vpack.c.b16 %v744, %v743
      %v755 = vpack.c.b16 %v746, %v745
      %v756 = vpack.c.b16 %v748, %v747
      %v757 = vpack.c.b16 %v750, %v749
      %v758 = vpack.c.b16 %v752, %v751
      %v759 = vpack.c.b16 %v753, %v753
      %vm760 = vsmask.f32 7424
      %v762 = vshrl.u32 %v754, 16
      %v764 = vshll.u32 %v754, 16
      %v766 = vrot.slane %v764, 1
      %v767 = vor.u32 %v762, %v766
      %v769 = vshll.u32 %v755, 16
      %v771 = vrot.slane %v769, 1
      %v772 = vsel %vm760, %v767, %v771
      %v773 = vshrl.u32 %v755, 16
      %v775 = vor.u32 %v773, %v771
      %v777 = vshll.u32 %v756, 16
      %v779 = vrot.slane %v777, 1
      %v780 = vsel %vm760, %v775, %v779
      %v781 = vshrl.u32 %v756, 16
      %v783 = vor.u32 %v781, %v779
      %v785 = vshll.u32 %v757, 16
      %v787 = vrot.slane %v785, 1
      %v788 = vsel %vm760, %v783, %v787
      %v789 = vshrl.u32 %v757, 16
      %v791 = vor.u32 %v789, %v787
      %v793 = vshll.u32 %v758, 16
      %v795 = vrot.slane %v793, 1
      %v796 = vsel %vm760, %v791, %v795
      %v797 = vshrl.u32 %v758, 16
      %v799 = vor.u32 %v797, %v795
      %v801 = vshll.u32 %v759, 16
      %v803 = vrot.slane %v801, 1
      %v804 = vsel %vm760, %v799, %v803
      %v826 = vunpack.c.l.b16 %v716
      %v827 = vunpack.c.l.b16 %v717
      %v828 = vunpack.c.l.b16 %v718
      %v829 = vunpack.c.l.b16 %v719
      %v830 = vunpack.c.l.b16 %v720
      %v831 = vunpack.c.l.b16 %v721
      %v832 = vunpack.c.l.b16 %v722
      %v833 = vunpack.c.l.b16 %v723
      %v834 = vunpack.c.l.b16 %v724
      %v835 = vunpack.c.l.b16 %v725
      %v836 = vunpack.c.l.b16 %v726
      %v837 = vunpack.c.l.b16 %v727
      %v838 = vunpack.c.l.b16 %v728
      %v839 = vunpack.c.l.b16 %v729
      %v840 = vunpack.c.l.b16 %v730
      %v841 = vunpack.c.l.b16 %v731
      %v842 = vpack.c.b16 %v827, %v826
      %v843 = vpack.c.b16 %v829, %v828
      %v844 = vpack.c.b16 %v831, %v830
      %v845 = vpack.c.b16 %v833, %v832
      %v846 = vpack.c.b16 %v835, %v834
      %v847 = vpack.c.b16 %v837, %v836
      %v848 = vpack.c.b16 %v839, %v838
      %v849 = vpack.c.b16 %v841, %v840
      %858 = vmatprep.subr.bf16.mxu0 0
      %859 = vmatpush1.bf16.msra.mxu0 %v849
      %860 = vmatprep.subr.bf16.mxu0 0
      %861 = vmatpush1.bf16.msra.mxu0 %v848
      %862 = vmatprep.subr.bf16.mxu0 0
      %863 = vmatpush1.bf16.msra.mxu0 %v847
      %864 = vmatprep.subr.bf16.mxu0 0
      %865 = vmatpush1.bf16.msra.mxu0 %v846
      %866 = vmatprep.subr.bf16.mxu0 0
      %867 = vmatpush1.bf16.msra.mxu0 %v845
      %868 = vmatprep.subr.bf16.mxu0 0
      %869 = vmatpush1.bf16.msra.mxu0 %v844
      %870 = vmatprep.subr.bf16.mxu0 0
      %871 = vmatpush1.bf16.msra.mxu0 %v843
      %872 = vmatprep.subr.bf16.mxu0 0
      %873 = vmatpush1.bf16.msra.mxu0 %v842
      %874 = vmatprep.subr.bf16.mxu0 0
      %875 = vmatpush2.bf16.msra.mxu0 0
      %876 = vmatprep.subr.bf16.mxu0 0
      %877 = vmatpush2.bf16.msra.mxu0 0
      %878 = vmatprep.subr.bf16.mxu0 0
      %879 = vmatpush2.bf16.msra.mxu0 0
      %880 = vmatprep.subr.bf16.mxu0 0
      %881 = vmatpush2.bf16.msra.mxu0 0
      %882 = vmatprep.subr.bf16.mxu0 0
      %883 = vmatpush2.bf16.msra.mxu0 0
      %884 = vmatprep.subr.bf16.mxu0 0
      %885 = vmatpush2.bf16.msra.mxu0 0
      %886 = vmatprep.subr.bf16.mxu0 0
      %887 = vmatpush2.bf16.msra.mxu0 0
      %888 = vmatprep.subr.bf16.mxu0 0
      %889 = vmatpush2.bf16.msra.mxu0 0
      %890 = vmatprep.mubr.bf16.mxu0 0
      %891 = vmatmul.mubr.bf16.gmra.mxu0 %v772
      %v892 = vpop.f32.mrf.mxu0
      %v893 = vadd.f32 0.0, %v892
      %v894 = vpop.f32.mrf.mxu0
      %v895 = vpop.f32.mrf.mxu0
      %v896 = vadd.f32 0.0, %v895
      %v897 = vpop.f32.mrf.mxu0
      %898 = vmatprep.mubr.bf16.mxu0 0
      %899 = vmatmul.mubr.bf16.gmra.mxu0 %v780
      %v900 = vpop.f32.mrf.mxu0
      %v901 = vadd.f32 0.0, %v900
      %v902 = vpop.f32.mrf.mxu0
      %v903 = vpop.f32.mrf.mxu0
      %v904 = vadd.f32 0.0, %v903
      %v905 = vpop.f32.mrf.mxu0
      %906 = vmatprep.mubr.bf16.mxu0 0
      %907 = vmatmul.mubr.bf16.gmra.mxu0 %v788
      %v908 = vpop.f32.mrf.mxu0
      %v909 = vadd.f32 0.0, %v908
      %v910 = vpop.f32.mrf.mxu0
      %v911 = vpop.f32.mrf.mxu0
      %v912 = vadd.f32 0.0, %v911
      %v913 = vpop.f32.mrf.mxu0
      %914 = vmatprep.mubr.bf16.mxu0 0
      %915 = vmatmul.mubr.bf16.gmra.mxu0 %v796
      %v916 = vpop.f32.mrf.mxu0
      %v917 = vadd.f32 0.0, %v916
      %v918 = vpop.f32.mrf.mxu0
      %v919 = vpop.f32.mrf.mxu0
      %v920 = vadd.f32 0.0, %v919
      %v921 = vpop.f32.mrf.mxu0
      %922 = vmatprep.mubr.bf16.mxu0 0
      %923 = vmatmul.mubr.bf16.gmra.mxu0 %v804
      %v924 = vpop.f32.mrf.mxu0
      %v925 = vadd.f32 0.0, %v924
      %v926 = vpop.f32.mrf.mxu0
      %v927 = vpop.f32.mrf.mxu0
      %v928 = vadd.f32 0.0, %v927
      %v929 = vpop.f32.mrf.mxu0
      %930 = vdwg.mxu0
      %v952 = vunpack.c.l.b16 %v698
      %v953 = vunpack.c.l.b16 %v699
      %v954 = vunpack.c.l.b16 %v700
      %v955 = vunpack.c.l.b16 %v701
      %v956 = vunpack.c.l.b16 %v702
      %v957 = vunpack.c.l.b16 %v703
      %v958 = vunpack.c.l.b16 %v704
      %v959 = vunpack.c.l.b16 %v705
      %v960 = vunpack.c.l.b16 %v706
      %v961 = vunpack.c.l.b16 %v707
      %v962 = vunpack.c.l.b16 %v708
      %v963 = vunpack.c.l.b16 %v709
      %v964 = vunpack.c.l.b16 %v710
      %v965 = vunpack.c.l.b16 %v711
      %v966 = vunpack.c.l.b16 %v712
      %v967 = vunpack.c.l.b16 %v713
      %v968 = vpack.c.b16 %v953, %v952
      %v969 = vpack.c.b16 %v955, %v954
      %v970 = vpack.c.b16 %v957, %v956
      %v971 = vpack.c.b16 %v959, %v958
      %v972 = vpack.c.b16 %v961, %v960
      %v973 = vpack.c.b16 %v963, %v962
      %v974 = vpack.c.b16 %v965, %v964
      %v975 = vpack.c.b16 %v967, %v966
      %984 = vmatprep.subr.bf16.mxu0 0
      %985 = vmatpush1.bf16.msra.mxu0 %v975
      %986 = vmatprep.subr.bf16.mxu0 0
      %987 = vmatpush1.bf16.msra.mxu0 %v974
      %988 = vmatprep.subr.bf16.mxu0 0
      %989 = vmatpush1.bf16.msra.mxu0 %v973
      %990 = vmatprep.subr.bf16.mxu0 0
      %991 = vmatpush1.bf16.msra.mxu0 %v972
      %992 = vmatprep.subr.bf16.mxu0 0
      %993 = vmatpush1.bf16.msra.mxu0 %v971
      %994 = vmatprep.subr.bf16.mxu0 0
      %995 = vmatpush1.bf16.msra.mxu0 %v970
      %996 = vmatprep.subr.bf16.mxu0 0
      %997 = vmatpush1.bf16.msra.mxu0 %v969
      %998 = vmatprep.subr.bf16.mxu0 0
      %999 = vmatpush1.bf16.msra.mxu0 %v968
      %1000 = vmatprep.subr.bf16.mxu0 0
      %1001 = vmatpush2.bf16.msra.mxu0 0
      %1002 = vmatprep.subr.bf16.mxu0 0
      %1003 = vmatpush2.bf16.msra.mxu0 0
      %1004 = vmatprep.subr.bf16.mxu0 0
      %1005 = vmatpush2.bf16.msra.mxu0 0
      %1006 = vmatprep.subr.bf16.mxu0 0
      %1007 = vmatpush2.bf16.msra.mxu0 0
      %1008 = vmatprep.subr.bf16.mxu0 0
      %1009 = vmatpush2.bf16.msra.mxu0 0
      %1010 = vmatprep.subr.bf16.mxu0 0
      %1011 = vmatpush2.bf16.msra.mxu0 0
      %1012 = vmatprep.subr.bf16.mxu0 0
      %1013 = vmatpush2.bf16.msra.mxu0 0
      %1014 = vmatprep.subr.bf16.mxu0 0
      %1015 = vmatpush2.bf16.msra.mxu0 0
      %1016 = vmatprep.mubr.bf16.mxu0 0
      %1017 = vmatmul.mubr.bf16.gmra.mxu0 %v754
      %v1018 = vpop.f32.mrf.mxu0
      %v1019 = vadd.f32 %v893, %v1018
      %v1020 = vpop.f32.mrf.mxu0
      %v1021 = vpop.f32.mrf.mxu0
      %v1022 = vadd.f32 %v896, %v1021
      %v1023 = vpop.f32.mrf.mxu0
      %1024 = vmatprep.mubr.bf16.mxu0 0
      %1025 = vmatmul.mubr.bf16.gmra.mxu0 %v755
      %v1026 = vpop.f32.mrf.mxu0
      %v1027 = vadd.f32 %v901, %v1026
      %v1028 = vpop.f32.mrf.mxu0
      %v1029 = vpop.f32.mrf.mxu0
      %v1030 = vadd.f32 %v904, %v1029
      %v1031 = vpop.f32.mrf.mxu0
      %1032 = vmatprep.mubr.bf16.mxu0 0
      %1033 = vmatmul.mubr.bf16.gmra.mxu0 %v756
      %v1034 = vpop.f32.mrf.mxu0
      %v1035 = vadd.f32 %v909, %v1034
      %v1036 = vpop.f32.mrf.mxu0
      %v1037 = vpop.f32.mrf.mxu0
      %v1038 = vadd.f32 %v912, %v1037
      %v1039 = vpop.f32.mrf.mxu0
      %1040 = vmatprep.mubr.bf16.mxu0 0
      %1041 = vmatmul.mubr.bf16.gmra.mxu0 %v757
      %v1042 = vpop.f32.mrf.mxu0
      %v1043 = vadd.f32 %v917, %v1042
      %v1044 = vpop.f32.mrf.mxu0
      %v1045 = vpop.f32.mrf.mxu0
      %v1046 = vadd.f32 %v920, %v1045
      %v1047 = vpop.f32.mrf.mxu0
      %1048 = vmatprep.mubr.bf16.mxu0 0
      %1049 = vmatmul.mubr.bf16.gmra.mxu0 %v758
      %v1050 = vpop.f32.mrf.mxu0
      %v1051 = vadd.f32 %v925, %v1050
      %v1052 = vpop.f32.mrf.mxu0
      %v1053 = vpop.f32.mrf.mxu0
      %v1054 = vadd.f32 %v928, %v1053
      %v1055 = vpop.f32.mrf.mxu0
      %1056 = vdwg.mxu0
      %v1057 = vld [vmem:[#allocation2] sm:$0xe]
      %s1058 = scalar_lea.vmem %s3, 128
      %v1059 = vld [vmem:[%s1058] sm:$0xf]
      %v1060 = vld [vmem:[%s1058 + $0x4] sm:$0xf]
      %v1061 = vld [vmem:[%s1058 + $0x8] sm:$0xf]
      %v1062 = vld [vmem:[%s1058 + $0xc] sm:$0xf]
      %v1063 = vld [vmem:[%s1058 + $0x10] sm:$0xf]
      %v1064 = vld [vmem:[%s1058 + $0x14] sm:$0xf]
      %v1065 = vld [vmem:[%s1058 + $0x18] sm:$0xf]
      %v1066 = vld [vmem:[%s1058 + $0x1c] sm:$0xf]
      %v1067 = vld [vmem:[%s1058 + $0x20] sm:$0xf]
      %v1068 = vld [vmem:[%s1058 + $0x24] sm:$0xf]
      %v1069 = vld [vmem:[%s1058 + $0x28] sm:$0xf]
      %v1070 = vld [vmem:[%s1058 + $0x2c] sm:$0xf]
      %v1071 = vld [vmem:[%s1058 + $0x30] sm:$0xf]
      %v1072 = vld [vmem:[%s1058 + $0x34] sm:$0xf]
      %v1073 = vld [vmem:[%s1058 + $0x38] sm:$0xf]
      %v1074 = vld [vmem:[%s1058 + $0x3c] sm:$0xf]
      %v1076 = vunpack.c.l.b16 %v1057
      %v1077 = vpack.c.b16 %v744, %v1076
      %vm1078 = vcmask 1046528
      %v1079 = vrot.slane %v1077, 1
      %v1080 = vrot.slane %v755, 1
      %v1081 = vsel %vm1078, %v1079, %v1080
      %v1082 = vrot.slane %v756, 1
      %v1083 = vsel %vm1078, %v1080, %v1082
      %v1084 = vrot.slane %v757, 1
      %v1085 = vsel %vm1078, %v1082, %v1084
      %v1086 = vrot.slane %v758, 1
      %v1087 = vsel %vm1078, %v1084, %v1086
      %v1088 = vrot.slane %v759, 1
      %v1089 = vsel %vm1078, %v1086, %v1088
      %v1111 = vunpack.c.l.b16 %v1059
      %v1112 = vunpack.c.l.b16 %v1060
      %v1113 = vunpack.c.l.b16 %v1061
      %v1114 = vunpack.c.l.b16 %v1062
      %v1115 = vunpack.c.l.b16 %v1063
      %v1116 = vunpack.c.l.b16 %v1064
      %v1117 = vunpack.c.l.b16 %v1065
      %v1118 = vunpack.c.l.b16 %v1066
      %v1119 = vunpack.c.l.b16 %v1067
      %v1120 = vunpack.c.l.b16 %v1068
      %v1121 = vunpack.c.l.b16 %v1069
      %v1122 = vunpack.c.l.b16 %v1070
      %v1123 = vunpack.c.l.b16 %v1071
      %v1124 = vunpack.c.l.b16 %v1072
      %v1125 = vunpack.c.l.b16 %v1073
      %v1126 = vunpack.c.l.b16 %v1074
      %v1127 = vpack.c.b16 %v1112, %v1111
      %v1128 = vpack.c.b16 %v1114, %v1113
      %v1129 = vpack.c.b16 %v1116, %v1115
      %v1130 = vpack.c.b16 %v1118, %v1117
      %v1131 = vpack.c.b16 %v1120, %v1119
      %v1132 = vpack.c.b16 %v1122, %v1121
      %v1133 = vpack.c.b16 %v1124, %v1123
      %v1134 = vpack.c.b16 %v1126, %v1125
      %1143 = vmatprep.subr.bf16.mxu0 0
      %1144 = vmatpush1.bf16.msra.mxu0 %v1134
      %1145 = vmatprep.subr.bf16.mxu0 0
      %1146 = vmatpush1.bf16.msra.mxu0 %v1133
      %1147 = vmatprep.subr.bf16.mxu0 0
      %1148 = vmatpush1.bf16.msra.mxu0 %v1132
      %1149 = vmatprep.subr.bf16.mxu0 0
      %1150 = vmatpush1.bf16.msra.mxu0 %v1131
      %1151 = vmatprep.subr.bf16.mxu0 0
      %1152 = vmatpush1.bf16.msra.mxu0 %v1130
      %1153 = vmatprep.subr.bf16.mxu0 0
      %1154 = vmatpush1.bf16.msra.mxu0 %v1129
      %1155 = vmatprep.subr.bf16.mxu0 0
      %1156 = vmatpush1.bf16.msra.mxu0 %v1128
      %1157 = vmatprep.subr.bf16.mxu0 0
      %1158 = vmatpush1.bf16.msra.mxu0 %v1127
      %1159 = vmatprep.subr.bf16.mxu0 0
      %1160 = vmatpush2.bf16.msra.mxu0 0
      %1161 = vmatprep.subr.bf16.mxu0 0
      %1162 = vmatpush2.bf16.msra.mxu0 0
      %1163 = vmatprep.subr.bf16.mxu0 0
      %1164 = vmatpush2.bf16.msra.mxu0 0
      %1165 = vmatprep.subr.bf16.mxu0 0
      %1166 = vmatpush2.bf16.msra.mxu0 0
      %1167 = vmatprep.subr.bf16.mxu0 0
      %1168 = vmatpush2.bf16.msra.mxu0 0
      %1169 = vmatprep.subr.bf16.mxu0 0
      %1170 = vmatpush2.bf16.msra.mxu0 0
      %1171 = vmatprep.subr.bf16.mxu0 0
      %1172 = vmatpush2.bf16.msra.mxu0 0
      %1173 = vmatprep.subr.bf16.mxu0 0
      %1174 = vmatpush2.bf16.msra.mxu0 0
      %1175 = vmatprep.mubr.bf16.mxu0 0
      %1176 = vmatmul.mubr.bf16.gmra.mxu0 %v1081
      %v1177 = vpop.f32.mrf.mxu0
      %v1178 = vadd.f32 0.0, %v1177
      %v1179 = vpop.f32.mrf.mxu0
      %v1180 = vpop.f32.mrf.mxu0
      %v1181 = vadd.f32 0.0, %v1180
      %v1182 = vpop.f32.mrf.mxu0
      %1183 = vmatprep.mubr.bf16.mxu0 0
      %1184 = vmatmul.mubr.bf16.gmra.mxu0 %v1083
      %v1185 = vpop.f32.mrf.mxu0
      %v1186 = vadd.f32 0.0, %v1185
      %v1187 = vpop.f32.mrf.mxu0
      %v1188 = vpop.f32.mrf.mxu0
      %v1189 = vadd.f32 0.0, %v1188
      %v1190 = vpop.f32.mrf.mxu0
      %1191 = vmatprep.mubr.bf16.mxu0 0
      %1192 = vmatmul.mubr.bf16.gmra.mxu0 %v1085
      %v1193 = vpop.f32.mrf.mxu0
      %v1194 = vadd.f32 0.0, %v1193
      %v1195 = vpop.f32.mrf.mxu0
      %v1196 = vpop.f32.mrf.mxu0
      %v1197 = vadd.f32 0.0, %v1196
      %v1198 = vpop.f32.mrf.mxu0
      %1199 = vmatprep.mubr.bf16.mxu0 0
      %1200 = vmatmul.mubr.bf16.gmra.mxu0 %v1087
      %v1201 = vpop.f32.mrf.mxu0
      %v1202 = vadd.f32 0.0, %v1201
      %v1203 = vpop.f32.mrf.mxu0
      %v1204 = vpop.f32.mrf.mxu0
      %v1205 = vadd.f32 0.0, %v1204
      %v1206 = vpop.f32.mrf.mxu0
      %1207 = vmatprep.mubr.bf16.mxu0 0
      %1208 = vmatmul.mubr.bf16.gmra.mxu0 %v1089
      %v1209 = vpop.f32.mrf.mxu0
      %v1210 = vadd.f32 0.0, %v1209
      %v1211 = vpop.f32.mrf.mxu0
      %v1212 = vpop.f32.mrf.mxu0
      %v1213 = vadd.f32 0.0, %v1212
      %v1214 = vpop.f32.mrf.mxu0
      %1215 = vdwg.mxu0
      %v1216 = vadd.f32 %v1019, %v1178
      %v1217 = vadd.f32 %v1022, %v1181
      %v1218 = vadd.f32 %v1027, %v1186
      %v1219 = vadd.f32 %v1030, %v1189
      %v1220 = vadd.f32 %v1035, %v1194
      %v1221 = vadd.f32 %v1038, %v1197
      %v1222 = vadd.f32 %v1043, %v1202
      %v1223 = vadd.f32 %v1046, %v1205
      %v1224 = vadd.f32 %v1051, %v1210
      %v1225 = vadd.f32 %v1054, %v1213
      %v1226 = vld [vmem:[#allocation2 + $0x4] sm:$0xe]
      %v1227 = vld [vmem:[#allocation2 + $0x8] sm:$0xf]
      %v1228 = vld [vmem:[#allocation2 + $0xc] sm:$0xf]
      %v1229 = vld [vmem:[#allocation2 + $0x10] sm:$0xf]
      %v1230 = vld [vmem:[#allocation2 + $0x14] sm:$0xf]
      %v1231 = vld [vmem:[#allocation2 + $0x18] sm:$0xf]
      %v1232 = vld [vmem:[#allocation2 + $0x1c] sm:$0xf]
      %v1233 = vld [vmem:[#allocation2 + $0x20] sm:$0xf]
      %v1234 = vld [vmem:[#allocation2 + $0x24] sm:$0xf]
      %v1235 = vld [vmem:[#allocation2 + $0x28] sm:$0xf]
      %v1236 = vld [vmem:[#allocation2 + $0x2c] sm:$0x1]
      %s1237 = scalar_lea.vmem %s3, 192
      %v1238 = vld [vmem:[%s1237] sm:$0xf]
      %v1239 = vld [vmem:[%s1237 + $0x4] sm:$0xf]
      %v1240 = vld [vmem:[%s1237 + $0x8] sm:$0xf]
      %v1241 = vld [vmem:[%s1237 + $0xc] sm:$0xf]
      %v1242 = vld [vmem:[%s1237 + $0x10] sm:$0xf]
      %v1243 = vld [vmem:[%s1237 + $0x14] sm:$0xf]
      %v1244 = vld [vmem:[%s1237 + $0x18] sm:$0xf]
      %v1245 = vld [vmem:[%s1237 + $0x1c] sm:$0xf]
      %v1246 = vld [vmem:[%s1237 + $0x20] sm:$0xf]
      %v1247 = vld [vmem:[%s1237 + $0x24] sm:$0xf]
      %v1248 = vld [vmem:[%s1237 + $0x28] sm:$0xf]
      %v1249 = vld [vmem:[%s1237 + $0x2c] sm:$0xf]
      %v1250 = vld [vmem:[%s1237 + $0x30] sm:$0xf]
      %v1251 = vld [vmem:[%s1237 + $0x34] sm:$0xf]
      %v1252 = vld [vmem:[%s1237 + $0x38] sm:$0xf]
      %v1253 = vld [vmem:[%s1237 + $0x3c] sm:$0xf]
      %v1265 = vunpack.c.l.b16 %v1226
      %v1266 = vunpack.c.l.b16 %v1227
      %v1267 = vunpack.c.l.b16 %v1228
      %v1268 = vunpack.c.l.b16 %v1229
      %v1269 = vunpack.c.l.b16 %v1230
      %v1270 = vunpack.c.l.b16 %v1231
      %v1271 = vunpack.c.l.b16 %v1232
      %v1272 = vunpack.c.l.b16 %v1233
      %v1273 = vunpack.c.l.b16 %v1234
      %v1274 = vunpack.c.l.b16 %v1235
      %v1275 = vunpack.c.l.b16 %v1236
      %v1276 = vpack.c.b16 %v1266, %v1265
      %v1277 = vpack.c.b16 %v1268, %v1267
      %v1278 = vpack.c.b16 %v1270, %v1269
      %v1279 = vpack.c.b16 %v1272, %v1271
      %v1280 = vpack.c.b16 %v1274, %v1273
      %v1281 = vpack.c.b16 %v1275, %v1275
      %v1282 = vrot.slane %v1276, 1
      %v1283 = vrot.slane %v1277, 1
      %v1284 = vsel %vm1078, %v1282, %v1283
      %v1285 = vrot.slane %v1278, 1
      %v1286 = vsel %vm1078, %v1283, %v1285
      %v1287 = vrot.slane %v1279, 1
      %v1288 = vsel %vm1078, %v1285, %v1287
      %v1289 = vrot.slane %v1280, 1
      %v1290 = vsel %vm1078, %v1287, %v1289
      %v1291 = vrot.slane %v1281, 1
      %v1292 = vsel %vm1078, %v1289, %v1291
      %v1314 = vunpack.c.l.b16 %v1238
      %v1315 = vunpack.c.l.b16 %v1239
      %v1316 = vunpack.c.l.b16 %v1240
      %v1317 = vunpack.c.l.b16 %v1241
      %v1318 = vunpack.c.l.b16 %v1242
      %v1319 = vunpack.c.l.b16 %v1243
      %v1320 = vunpack.c.l.b16 %v1244
      %v1321 = vunpack.c.l.b16 %v1245
      %v1322 = vunpack.c.l.b16 %v1246
      %v1323 = vunpack.c.l.b16 %v1247
      %v1324 = vunpack.c.l.b16 %v1248
      %v1325 = vunpack.c.l.b16 %v1249
      %v1326 = vunpack.c.l.b16 %v1250
      %v1327 = vunpack.c.l.b16 %v1251
      %v1328 = vunpack.c.l.b16 %v1252
      %v1329 = vunpack.c.l.b16 %v1253
      %v1330 = vpack.c.b16 %v1315, %v1314
      %v1331 = vpack.c.b16 %v1317, %v1316
      %v1332 = vpack.c.b16 %v1319, %v1318
      %v1333 = vpack.c.b16 %v1321, %v1320
      %v1334 = vpack.c.b16 %v1323, %v1322
      %v1335 = vpack.c.b16 %v1325, %v1324
      %v1336 = vpack.c.b16 %v1327, %v1326
      %v1337 = vpack.c.b16 %v1329, %v1328
      %1346 = vmatprep.subr.bf16.mxu0 0
      %1347 = vmatpush1.bf16.msra.mxu0 %v1337
      %1348 = vmatprep.subr.bf16.mxu0 0
      %1349 = vmatpush1.bf16.msra.mxu0 %v1336
      %1350 = vmatprep.subr.bf16.mxu0 0
      %1351 = vmatpush1.bf16.msra.mxu0 %v1335
      %1352 = vmatprep.subr.bf16.mxu0 0
      %1353 = vmatpush1.bf16.msra.mxu0 %v1334
      %1354 = vmatprep.subr.bf16.mxu0 0
      %1355 = vmatpush1.bf16.msra.mxu0 %v1333
      %1356 = vmatprep.subr.bf16.mxu0 0
      %1357 = vmatpush1.bf16.msra.mxu0 %v1332
      %1358 = vmatprep.subr.bf16.mxu0 0
      %1359 = vmatpush1.bf16.msra.mxu0 %v1331
      %1360 = vmatprep.subr.bf16.mxu0 0
      %1361 = vmatpush1.bf16.msra.mxu0 %v1330
      %1362 = vmatprep.subr.bf16.mxu0 0
      %1363 = vmatpush2.bf16.msra.mxu0 0
      %1364 = vmatprep.subr.bf16.mxu0 0
      %1365 = vmatpush2.bf16.msra.mxu0 0
      %1366 = vmatprep.subr.bf16.mxu0 0
      %1367 = vmatpush2.bf16.msra.mxu0 0
      %1368 = vmatprep.subr.bf16.mxu0 0
      %1369 = vmatpush2.bf16.msra.mxu0 0
      %1370 = vmatprep.subr.bf16.mxu0 0
      %1371 = vmatpush2.bf16.msra.mxu0 0
      %1372 = vmatprep.subr.bf16.mxu0 0
      %1373 = vmatpush2.bf16.msra.mxu0 0
      %1374 = vmatprep.subr.bf16.mxu0 0
      %1375 = vmatpush2.bf16.msra.mxu0 0
      %1376 = vmatprep.subr.bf16.mxu0 0
      %1377 = vmatpush2.bf16.msra.mxu0 0
      %1378 = vmatprep.mubr.bf16.mxu0 0
      %1379 = vmatmul.mubr.bf16.gmra.mxu0 %v1284
      %v1380 = vpop.f32.mrf.mxu0
      %v1381 = vadd.f32 0.0, %v1380
      %v1382 = vpop.f32.mrf.mxu0
      %v1383 = vpop.f32.mrf.mxu0
      %v1384 = vadd.f32 0.0, %v1383
      %v1385 = vpop.f32.mrf.mxu0
      %1386 = vmatprep.mubr.bf16.mxu0 0
      %1387 = vmatmul.mubr.bf16.gmra.mxu0 %v1286
      %v1388 = vpop.f32.mrf.mxu0
      %v1389 = vadd.f32 0.0, %v1388
      %v1390 = vpop.f32.mrf.mxu0
      %v1391 = vpop.f32.mrf.mxu0
      %v1392 = vadd.f32 0.0, %v1391
      %v1393 = vpop.f32.mrf.mxu0
      %1394 = vmatprep.mubr.bf16.mxu0 0
      %1395 = vmatmul.mubr.bf16.gmra.mxu0 %v1288
      %v1396 = vpop.f32.mrf.mxu0
      %v1397 = vadd.f32 0.0, %v1396
      %v1398 = vpop.f32.mrf.mxu0
      %v1399 = vpop.f32.mrf.mxu0
      %v1400 = vadd.f32 0.0, %v1399
      %v1401 = vpop.f32.mrf.mxu0
      %1402 = vmatprep.mubr.bf16.mxu0 0
      %1403 = vmatmul.mubr.bf16.gmra.mxu0 %v1290
      %v1404 = vpop.f32.mrf.mxu0
      %v1405 = vadd.f32 0.0, %v1404
      %v1406 = vpop.f32.mrf.mxu0
      %v1407 = vpop.f32.mrf.mxu0
      %v1408 = vadd.f32 0.0, %v1407
      %v1409 = vpop.f32.mrf.mxu0
      %1410 = vmatprep.mubr.bf16.mxu0 0
      %1411 = vmatmul.mubr.bf16.gmra.mxu0 %v1292
      %v1412 = vpop.f32.mrf.mxu0
      %v1413 = vadd.f32 0.0, %v1412
      %v1414 = vpop.f32.mrf.mxu0
      %v1415 = vpop.f32.mrf.mxu0
      %v1416 = vadd.f32 0.0, %v1415
      %v1417 = vpop.f32.mrf.mxu0
      %1418 = vdwg.mxu0
      %v1419 = vadd.f32 %v1216, %v1381
      %v1420 = vadd.f32 %v1217, %v1384
      %v1421 = vadd.f32 %v1218, %v1389
      %v1422 = vadd.f32 %v1219, %v1392
      %v1423 = vadd.f32 %v1220, %v1397
      %v1424 = vadd.f32 %v1221, %v1400
      %v1425 = vadd.f32 %v1222, %v1405
      %v1426 = vadd.f32 %v1223, %v1408
      %v1427 = vadd.f32 %v1224, %v1413
      %v1428 = vadd.f32 %v1225, %v1416
      %v1429 = vld [vmem:[#allocation2 + $0x2c] sm:$0x3]
      %s1430 = scalar_lea.vmem %s3, 256
      %v1431 = vld [vmem:[%s1430] sm:$0xf]
      %v1432 = vld [vmem:[%s1430 + $0x4] sm:$0xf]
      %v1433 = vld [vmem:[%s1430 + $0x8] sm:$0xf]
      %v1434 = vld [vmem:[%s1430 + $0xc] sm:$0xf]
      %v1435 = vld [vmem:[%s1430 + $0x10] sm:$0xf]
      %v1436 = vld [vmem:[%s1430 + $0x14] sm:$0xf]
      %v1437 = vld [vmem:[%s1430 + $0x18] sm:$0xf]
      %v1438 = vld [vmem:[%s1430 + $0x1c] sm:$0xf]
      %v1439 = vld [vmem:[%s1430 + $0x20] sm:$0xf]
      %v1440 = vld [vmem:[%s1430 + $0x24] sm:$0xf]
      %v1441 = vld [vmem:[%s1430 + $0x28] sm:$0xf]
      %v1442 = vld [vmem:[%s1430 + $0x2c] sm:$0xf]
      %v1443 = vld [vmem:[%s1430 + $0x30] sm:$0xf]
      %v1444 = vld [vmem:[%s1430 + $0x34] sm:$0xf]
      %v1445 = vld [vmem:[%s1430 + $0x38] sm:$0xf]
      %v1446 = vld [vmem:[%s1430 + $0x3c] sm:$0xf]
      %v1448 = vunpack.c.l.b16 %v1429
      %v1449 = vpack.c.b16 %v1448, %v1448
      %vm1450 = vsmask.f32 6400
      %v1452 = vshrl.u32 %v1276, 16
      %v1454 = vrot.slane %v1452, 1
      %v1455 = vshll.u32 %v1276, 16
      %v1457 = vrot.slane %v1455, 2
      %v1458 = vor.u32 %v1454, %v1457
      %v1460 = vshrl.u32 %v1277, 16
      %v1462 = vrot.slane %v1460, 1
      %v1463 = vshll.u32 %v1277, 16
      %v1465 = vrot.slane %v1463, 2
      %v1466 = vor.u32 %v1462, %v1465
      %v1467 = vsel %vm1450, %v1458, %v1466
      %v1469 = vshrl.u32 %v1278, 16
      %v1471 = vrot.slane %v1469, 1
      %v1472 = vshll.u32 %v1278, 16
      %v1474 = vrot.slane %v1472, 2
      %v1475 = vor.u32 %v1471, %v1474
      %v1476 = vsel %vm1450, %v1466, %v1475
      %v1478 = vshrl.u32 %v1279, 16
      %v1480 = vrot.slane %v1478, 1
      %v1481 = vshll.u32 %v1279, 16
      %v1483 = vrot.slane %v1481, 2
      %v1484 = vor.u32 %v1480, %v1483
      %v1485 = vsel %vm1450, %v1475, %v1484
      %v1487 = vshrl.u32 %v1280, 16
      %v1489 = vrot.slane %v1487, 1
      %v1490 = vshll.u32 %v1280, 16
      %v1492 = vrot.slane %v1490, 2
      %v1493 = vor.u32 %v1489, %v1492
      %v1494 = vsel %vm1450, %v1484, %v1493
      %v1496 = vshrl.u32 %v1449, 16
      %v1498 = vrot.slane %v1496, 1
      %v1499 = vshll.u32 %v1449, 16
      %v1501 = vrot.slane %v1499, 2
      %v1502 = vor.u32 %v1498, %v1501
      %v1503 = vsel %vm1450, %v1493, %v1502
      %v1525 = vunpack.c.l.b16 %v1431
      %v1526 = vunpack.c.l.b16 %v1432
      %v1527 = vunpack.c.l.b16 %v1433
      %v1528 = vunpack.c.l.b16 %v1434
      %v1529 = vunpack.c.l.b16 %v1435
      %v1530 = vunpack.c.l.b16 %v1436
      %v1531 = vunpack.c.l.b16 %v1437
      %v1532 = vunpack.c.l.b16 %v1438
      %v1533 = vunpack.c.l.b16 %v1439
      %v1534 = vunpack.c.l.b16 %v1440
      %v1535 = vunpack.c.l.b16 %v1441
      %v1536 = vunpack.c.l.b16 %v1442
      %v1537 = vunpack.c.l.b16 %v1443
      %v1538 = vunpack.c.l.b16 %v1444
      %v1539 = vunpack.c.l.b16 %v1445
      %v1540 = vunpack.c.l.b16 %v1446
      %v1541 = vpack.c.b16 %v1526, %v1525
      %v1542 = vpack.c.b16 %v1528, %v1527
      %v1543 = vpack.c.b16 %v1530, %v1529
      %v1544 = vpack.c.b16 %v1532, %v1531
      %v1545 = vpack.c.b16 %v1534, %v1533
      %v1546 = vpack.c.b16 %v1536, %v1535
      %v1547 = vpack.c.b16 %v1538, %v1537
      %v1548 = vpack.c.b16 %v1540, %v1539
      %1557 = vmatprep.subr.bf16.mxu0 0
      %1558 = vmatpush1.bf16.msra.mxu0 %v1548
      %1559 = vmatprep.subr.bf16.mxu0 0
      %1560 = vmatpush1.bf16.msra.mxu0 %v1547
      %1561 = vmatprep.subr.bf16.mxu0 0
      %1562 = vmatpush1.bf16.msra.mxu0 %v1546
      %1563 = vmatprep.subr.bf16.mxu0 0
      %1564 = vmatpush1.bf16.msra.mxu0 %v1545
      %1565 = vmatprep.subr.bf16.mxu0 0
      %1566 = vmatpush1.bf16.msra.mxu0 %v1544
      %1567 = vmatprep.subr.bf16.mxu0 0
      %1568 = vmatpush1.bf16.msra.mxu0 %v1543
      %1569 = vmatprep.subr.bf16.mxu0 0
      %1570 = vmatpush1.bf16.msra.mxu0 %v1542
      %1571 = vmatprep.subr.bf16.mxu0 0
      %1572 = vmatpush1.bf16.msra.mxu0 %v1541
      %1573 = vmatprep.subr.bf16.mxu0 0
      %1574 = vmatpush2.bf16.msra.mxu0 0
      %1575 = vmatprep.subr.bf16.mxu0 0
      %1576 = vmatpush2.bf16.msra.mxu0 0
      %1577 = vmatprep.subr.bf16.mxu0 0
      %1578 = vmatpush2.bf16.msra.mxu0 0
      %1579 = vmatprep.subr.bf16.mxu0 0
      %1580 = vmatpush2.bf16.msra.mxu0 0
      %1581 = vmatprep.subr.bf16.mxu0 0
      %1582 = vmatpush2.bf16.msra.mxu0 0
      %1583 = vmatprep.subr.bf16.mxu0 0
      %1584 = vmatpush2.bf16.msra.mxu0 0
      %1585 = vmatprep.subr.bf16.mxu0 0
      %1586 = vmatpush2.bf16.msra.mxu0 0
      %1587 = vmatprep.subr.bf16.mxu0 0
      %1588 = vmatpush2.bf16.msra.mxu0 0
      %1589 = vmatprep.mubr.bf16.mxu0 0
      %1590 = vmatmul.mubr.bf16.gmra.mxu0 %v1467
      %v1591 = vpop.f32.mrf.mxu0
      %v1592 = vadd.f32 0.0, %v1591
      %v1593 = vpop.f32.mrf.mxu0
      %v1594 = vpop.f32.mrf.mxu0
      %v1595 = vadd.f32 0.0, %v1594
      %v1596 = vpop.f32.mrf.mxu0
      %1597 = vmatprep.mubr.bf16.mxu0 0
      %1598 = vmatmul.mubr.bf16.gmra.mxu0 %v1476
      %v1599 = vpop.f32.mrf.mxu0
      %v1600 = vadd.f32 0.0, %v1599
      %v1601 = vpop.f32.mrf.mxu0
      %v1602 = vpop.f32.mrf.mxu0
      %v1603 = vadd.f32 0.0, %v1602
      %v1604 = vpop.f32.mrf.mxu0
      %1605 = vmatprep.mubr.bf16.mxu0 0
      %1606 = vmatmul.mubr.bf16.gmra.mxu0 %v1485
      %v1607 = vpop.f32.mrf.mxu0
      %v1608 = vadd.f32 0.0, %v1607
      %v1609 = vpop.f32.mrf.mxu0
      %v1610 = vpop.f32.mrf.mxu0
      %v1611 = vadd.f32 0.0, %v1610
      %v1612 = vpop.f32.mrf.mxu0
      %1613 = vmatprep.mubr.bf16.mxu0 0
      %1614 = vmatmul.mubr.bf16.gmra.mxu0 %v1494
      %v1615 = vpop.f32.mrf.mxu0
      %v1616 = vadd.f32 0.0, %v1615
      %v1617 = vpop.f32.mrf.mxu0
      %v1618 = vpop.f32.mrf.mxu0
      %v1619 = vadd.f32 0.0, %v1618
      %v1620 = vpop.f32.mrf.mxu0
      %1621 = vmatprep.mubr.bf16.mxu0 0
      %1622 = vmatmul.mubr.bf16.gmra.mxu0 %v1503
      %v1623 = vpop.f32.mrf.mxu0
      %v1624 = vadd.f32 0.0, %v1623
      %v1625 = vpop.f32.mrf.mxu0
      %v1626 = vpop.f32.mrf.mxu0
      %v1627 = vadd.f32 0.0, %v1626
      %v1628 = vpop.f32.mrf.mxu0
      %1629 = vdwg.mxu0
      %v1630 = vadd.f32 %v1419, %v1592
      %v1631 = vadd.f32 %v1420, %v1595
      %v1632 = vadd.f32 %v1421, %v1600
      %v1633 = vadd.f32 %v1422, %v1603
      %v1634 = vadd.f32 %v1423, %v1608
      %v1635 = vadd.f32 %v1424, %v1611
      %v1636 = vadd.f32 %v1425, %v1616
      %v1637 = vadd.f32 %v1426, %v1619
      %v1638 = vadd.f32 %v1427, %v1624
      %v1639 = vadd.f32 %v1428, %v1627
      %v1640 = vld [vmem:[#allocation2 + $0x4] sm:$0xc]
      %s1641 = scalar_lea.vmem %s3, 320
      %v1642 = vld [vmem:[%s1641] sm:$0xf]
      %v1643 = vld [vmem:[%s1641 + $0x4] sm:$0xf]
      %v1644 = vld [vmem:[%s1641 + $0x8] sm:$0xf]
      %v1645 = vld [vmem:[%s1641 + $0xc] sm:$0xf]
      %v1646 = vld [vmem:[%s1641 + $0x10] sm:$0xf]
      %v1647 = vld [vmem:[%s1641 + $0x14] sm:$0xf]
      %v1648 = vld [vmem:[%s1641 + $0x18] sm:$0xf]
      %v1649 = vld [vmem:[%s1641 + $0x1c] sm:$0xf]
      %v1650 = vld [vmem:[%s1641 + $0x20] sm:$0xf]
      %v1651 = vld [vmem:[%s1641 + $0x24] sm:$0xf]
      %v1652 = vld [vmem:[%s1641 + $0x28] sm:$0xf]
      %v1653 = vld [vmem:[%s1641 + $0x2c] sm:$0xf]
      %v1654 = vld [vmem:[%s1641 + $0x30] sm:$0xf]
      %v1655 = vld [vmem:[%s1641 + $0x34] sm:$0xf]
      %v1656 = vld [vmem:[%s1641 + $0x38] sm:$0xf]
      %v1657 = vld [vmem:[%s1641 + $0x3c] sm:$0xf]
      %v1659 = vunpack.c.l.b16 %v1640
      %v1660 = vpack.c.b16 %v1266, %v1659
      %vm1661 = vcmask 1045504
      %v1662 = vrot.slane %v1660, 2
      %v1663 = vrot.slane %v1277, 2
      %v1664 = vsel %vm1661, %v1662, %v1663
      %v1665 = vrot.slane %v1278, 2
      %v1666 = vsel %vm1661, %v1663, %v1665
      %v1667 = vrot.slane %v1279, 2
      %v1668 = vsel %vm1661, %v1665, %v1667
      %v1669 = vrot.slane %v1280, 2
      %v1670 = vsel %vm1661, %v1667, %v1669
      %v1671 = vrot.slane %v1449, 2
      %v1672 = vsel %vm1661, %v1669, %v1671
      %v1694 = vunpack.c.l.b16 %v1642
      %v1695 = vunpack.c.l.b16 %v1643
      %v1696 = vunpack.c.l.b16 %v1644
      %v1697 = vunpack.c.l.b16 %v1645
      %v1698 = vunpack.c.l.b16 %v1646
      %v1699 = vunpack.c.l.b16 %v1647
      %v1700 = vunpack.c.l.b16 %v1648
      %v1701 = vunpack.c.l.b16 %v1649
      %v1702 = vunpack.c.l.b16 %v1650
      %v1703 = vunpack.c.l.b16 %v1651
      %v1704 = vunpack.c.l.b16 %v1652
      %v1705 = vunpack.c.l.b16 %v1653
      %v1706 = vunpack.c.l.b16 %v1654
      %v1707 = vunpack.c.l.b16 %v1655
      %v1708 = vunpack.c.l.b16 %v1656
      %v1709 = vunpack.c.l.b16 %v1657
      %v1710 = vpack.c.b16 %v1695, %v1694
      %v1711 = vpack.c.b16 %v1697, %v1696
      %v1712 = vpack.c.b16 %v1699, %v1698
      %v1713 = vpack.c.b16 %v1701, %v1700
      %v1714 = vpack.c.b16 %v1703, %v1702
      %v1715 = vpack.c.b16 %v1705, %v1704
      %v1716 = vpack.c.b16 %v1707, %v1706
      %v1717 = vpack.c.b16 %v1709, %v1708
      %1726 = vmatprep.subr.bf16.mxu0 0
      %1727 = vmatpush1.bf16.msra.mxu0 %v1717
      %1728 = vmatprep.subr.bf16.mxu0 0
      %1729 = vmatpush1.bf16.msra.mxu0 %v1716
      %1730 = vmatprep.subr.bf16.mxu0 0
      %1731 = vmatpush1.bf16.msra.mxu0 %v1715
      %1732 = vmatprep.subr.bf16.mxu0 0
      %1733 = vmatpush1.bf16.msra.mxu0 %v1714
      %1734 = vmatprep.subr.bf16.mxu0 0
      %1735 = vmatpush1.bf16.msra.mxu0 %v1713
      %1736 = vmatprep.subr.bf16.mxu0 0
      %1737 = vmatpush1.bf16.msra.mxu0 %v1712
      %1738 = vmatprep.subr.bf16.mxu0 0
      %1739 = vmatpush1.bf16.msra.mxu0 %v1711
      %1740 = vmatprep.subr.bf16.mxu0 0
      %1741 = vmatpush1.bf16.msra.mxu0 %v1710
      %1742 = vmatprep.subr.bf16.mxu0 0
      %1743 = vmatpush2.bf16.msra.mxu0 0
      %1744 = vmatprep.subr.bf16.mxu0 0
      %1745 = vmatpush2.bf16.msra.mxu0 0
      %1746 = vmatprep.subr.bf16.mxu0 0
      %1747 = vmatpush2.bf16.msra.mxu0 0
      %1748 = vmatprep.subr.bf16.mxu0 0
      %1749 = vmatpush2.bf16.msra.mxu0 0
      %1750 = vmatprep.subr.bf16.mxu0 0
      %1751 = vmatpush2.bf16.msra.mxu0 0
      %1752 = vmatprep.subr.bf16.mxu0 0
      %1753 = vmatpush2.bf16.msra.mxu0 0
      %1754 = vmatprep.subr.bf16.mxu0 0
      %1755 = vmatpush2.bf16.msra.mxu0 0
      %1756 = vmatprep.subr.bf16.mxu0 0
      %1757 = vmatpush2.bf16.msra.mxu0 0
      %1758 = vmatprep.mubr.bf16.mxu0 0
      %1759 = vmatmul.mubr.bf16.gmra.mxu0 %v1664
      %v1760 = vpop.f32.mrf.mxu0
      %v1761 = vadd.f32 0.0, %v1760
      %v1762 = vpop.f32.mrf.mxu0
      %v1763 = vpop.f32.mrf.mxu0
      %v1764 = vadd.f32 0.0, %v1763
      %v1765 = vpop.f32.mrf.mxu0
      %1766 = vmatprep.mubr.bf16.mxu0 0
      %1767 = vmatmul.mubr.bf16.gmra.mxu0 %v1666
      %v1768 = vpop.f32.mrf.mxu0
      %v1769 = vadd.f32 0.0, %v1768
      %v1770 = vpop.f32.mrf.mxu0
      %v1771 = vpop.f32.mrf.mxu0
      %v1772 = vadd.f32 0.0, %v1771
      %v1773 = vpop.f32.mrf.mxu0
      %1774 = vmatprep.mubr.bf16.mxu0 0
      %1775 = vmatmul.mubr.bf16.gmra.mxu0 %v1668
      %v1776 = vpop.f32.mrf.mxu0
      %v1777 = vadd.f32 0.0, %v1776
      %v1778 = vpop.f32.mrf.mxu0
      %v1779 = vpop.f32.mrf.mxu0
      %v1780 = vadd.f32 0.0, %v1779
      %v1781 = vpop.f32.mrf.mxu0
      %1782 = vmatprep.mubr.bf16.mxu0 0
      %1783 = vmatmul.mubr.bf16.gmra.mxu0 %v1670
      %v1784 = vpop.f32.mrf.mxu0
      %v1785 = vadd.f32 0.0, %v1784
      %v1786 = vpop.f32.mrf.mxu0
      %v1787 = vpop.f32.mrf.mxu0
      %v1788 = vadd.f32 0.0, %v1787
      %v1789 = vpop.f32.mrf.mxu0
      %1790 = vmatprep.mubr.bf16.mxu0 0
      %1791 = vmatmul.mubr.bf16.gmra.mxu0 %v1672
      %v1792 = vpop.f32.mrf.mxu0
      %v1793 = vadd.f32 0.0, %v1792
      %v1794 = vpop.f32.mrf.mxu0
      %v1795 = vpop.f32.mrf.mxu0
      %v1796 = vadd.f32 0.0, %v1795
      %v1797 = vpop.f32.mrf.mxu0
      %1798 = vdwg.mxu0
      %v1799 = vadd.f32 %v1630, %v1761
      %v1800 = vadd.f32 %v1631, %v1764
      %v1801 = vadd.f32 %v1632, %v1769
      %v1802 = vadd.f32 %v1633, %v1772
      %v1803 = vadd.f32 %v1634, %v1777
      %v1804 = vadd.f32 %v1635, %v1780
      %v1805 = vadd.f32 %v1636, %v1785
      %v1806 = vadd.f32 %v1637, %v1788
      %v1807 = vadd.f32 %v1638, %v1793
      %v1808 = vadd.f32 %v1639, %v1796
      %v1809 = vld [vmem:[#allocation2 + $0x8] sm:$0xc]
      %v1810 = vld [vmem:[#allocation2 + $0xc] sm:$0xf]
      %v1811 = vld [vmem:[#allocation2 + $0x10] sm:$0xf]
      %v1812 = vld [vmem:[#allocation2 + $0x14] sm:$0xf]
      %v1813 = vld [vmem:[#allocation2 + $0x18] sm:$0xf]
      %v1814 = vld [vmem:[#allocation2 + $0x1c] sm:$0xf]
      %v1815 = vld [vmem:[#allocation2 + $0x20] sm:$0xf]
      %v1816 = vld [vmem:[#allocation2 + $0x24] sm:$0xf]
      %v1817 = vld [vmem:[#allocation2 + $0x28] sm:$0xf]
      %v1818 = vld [vmem:[#allocation2 + $0x2c] sm:$0xf]
      %v1819 = vld [vmem:[#allocation2 + $0x30] sm:$0x3]
      %s1820 = scalar_lea.vmem %s3, 384
      %v1821 = vld [vmem:[%s1820] sm:$0xf]
      %v1822 = vld [vmem:[%s1820 + $0x4] sm:$0xf]
      %v1823 = vld [vmem:[%s1820 + $0x8] sm:$0xf]
      %v1824 = vld [vmem:[%s1820 + $0xc] sm:$0xf]
      %v1825 = vld [vmem:[%s1820 + $0x10] sm:$0xf]
      %v1826 = vld [vmem:[%s1820 + $0x14] sm:$0xf]
      %v1827 = vld [vmem:[%s1820 + $0x18] sm:$0xf]
      %v1828 = vld [vmem:[%s1820 + $0x1c] sm:$0xf]
      %v1829 = vld [vmem:[%s1820 + $0x20] sm:$0xf]
      %v1830 = vld [vmem:[%s1820 + $0x24] sm:$0xf]
      %v1831 = vld [vmem:[%s1820 + $0x28] sm:$0xf]
      %v1832 = vld [vmem:[%s1820 + $0x2c] sm:$0xf]
      %v1833 = vld [vmem:[%s1820 + $0x30] sm:$0xf]
      %v1834 = vld [vmem:[%s1820 + $0x34] sm:$0xf]
      %v1835 = vld [vmem:[%s1820 + $0x38] sm:$0xf]
      %v1836 = vld [vmem:[%s1820 + $0x3c] sm:$0xf]
      %v1848 = vunpack.c.l.b16 %v1809
      %v1849 = vunpack.c.l.b16 %v1810
      %v1850 = vunpack.c.l.b16 %v1811
      %v1851 = vunpack.c.l.b16 %v1812
      %v1852 = vunpack.c.l.b16 %v1813
      %v1853 = vunpack.c.l.b16 %v1814
      %v1854 = vunpack.c.l.b16 %v1815
      %v1855 = vunpack.c.l.b16 %v1816
      %v1856 = vunpack.c.l.b16 %v1817
      %v1857 = vunpack.c.l.b16 %v1818
      %v1858 = vunpack.c.l.b16 %v1819
      %v1859 = vpack.c.b16 %v1849, %v1848
      %v1860 = vpack.c.b16 %v1851, %v1850
      %v1861 = vpack.c.b16 %v1853, %v1852
      %v1862 = vpack.c.b16 %v1855, %v1854
      %v1863 = vpack.c.b16 %v1857, %v1856
      %v1864 = vpack.c.b16 %v1858, %v1858
      %v1865 = vrot.slane %v1859, 2
      %v1866 = vrot.slane %v1860, 2
      %v1867 = vsel %vm1661, %v1865, %v1866
      %v1868 = vrot.slane %v1861, 2
      %v1869 = vsel %vm1661, %v1866, %v1868
      %v1870 = vrot.slane %v1862, 2
      %v1871 = vsel %vm1661, %v1868, %v1870
      %v1872 = vrot.slane %v1863, 2
      %v1873 = vsel %vm1661, %v1870, %v1872
      %v1874 = vrot.slane %v1864, 2
      %v1875 = vsel %vm1661, %v1872, %v1874
      %v1897 = vunpack.c.l.b16 %v1821
      %v1898 = vunpack.c.l.b16 %v1822
      %v1899 = vunpack.c.l.b16 %v1823
      %v1900 = vunpack.c.l.b16 %v1824
      %v1901 = vunpack.c.l.b16 %v1825
      %v1902 = vunpack.c.l.b16 %v1826
      %v1903 = vunpack.c.l.b16 %v1827
      %v1904 = vunpack.c.l.b16 %v1828
      %v1905 = vunpack.c.l.b16 %v1829
      %v1906 = vunpack.c.l.b16 %v1830
      %v1907 = vunpack.c.l.b16 %v1831
      %v1908 = vunpack.c.l.b16 %v1832
      %v1909 = vunpack.c.l.b16 %v1833
      %v1910 = vunpack.c.l.b16 %v1834
      %v1911 = vunpack.c.l.b16 %v1835
      %v1912 = vunpack.c.l.b16 %v1836
      %v1913 = vpack.c.b16 %v1898, %v1897
      %v1914 = vpack.c.b16 %v1900, %v1899
      %v1915 = vpack.c.b16 %v1902, %v1901
      %v1916 = vpack.c.b16 %v1904, %v1903
      %v1917 = vpack.c.b16 %v1906, %v1905
      %v1918 = vpack.c.b16 %v1908, %v1907
      %v1919 = vpack.c.b16 %v1910, %v1909
      %v1920 = vpack.c.b16 %v1912, %v1911
      %1929 = vmatprep.subr.bf16.mxu0 0
      %1930 = vmatpush1.bf16.msra.mxu0 %v1920
      %1931 = vmatprep.subr.bf16.mxu0 0
      %1932 = vmatpush1.bf16.msra.mxu0 %v1919
      %1933 = vmatprep.subr.bf16.mxu0 0
      %1934 = vmatpush1.bf16.msra.mxu0 %v1918
      %1935 = vmatprep.subr.bf16.mxu0 0
      %1936 = vmatpush1.bf16.msra.mxu0 %v1917
      %1937 = vmatprep.subr.bf16.mxu0 0
      %1938 = vmatpush1.bf16.msra.mxu0 %v1916
      %1939 = vmatprep.subr.bf16.mxu0 0
      %1940 = vmatpush1.bf16.msra.mxu0 %v1915
      %1941 = vmatprep.subr.bf16.mxu0 0
      %1942 = vmatpush1.bf16.msra.mxu0 %v1914
      %1943 = vmatprep.subr.bf16.mxu0 0
      %1944 = vmatpush1.bf16.msra.mxu0 %v1913
      %1945 = vmatprep.subr.bf16.mxu0 0
      %1946 = vmatpush2.bf16.msra.mxu0 0
      %1947 = vmatprep.subr.bf16.mxu0 0
      %1948 = vmatpush2.bf16.msra.mxu0 0
      %1949 = vmatprep.subr.bf16.mxu0 0
      %1950 = vmatpush2.bf16.msra.mxu0 0
      %1951 = vmatprep.subr.bf16.mxu0 0
      %1952 = vmatpush2.bf16.msra.mxu0 0
      %1953 = vmatprep.subr.bf16.mxu0 0
      %1954 = vmatpush2.bf16.msra.mxu0 0
      %1955 = vmatprep.subr.bf16.mxu0 0
      %1956 = vmatpush2.bf16.msra.mxu0 0
      %1957 = vmatprep.subr.bf16.mxu0 0
      %1958 = vmatpush2.bf16.msra.mxu0 0
      %1959 = vmatprep.subr.bf16.mxu0 0
      %1960 = vmatpush2.bf16.msra.mxu0 0
      %1961 = vmatprep.mubr.bf16.mxu0 0
      %1962 = vmatmul.mubr.bf16.gmra.mxu0 %v1867
      %v1963 = vpop.f32.mrf.mxu0
      %v1964 = vadd.f32 0.0, %v1963
      %v1965 = vpop.f32.mrf.mxu0
      %v1966 = vpop.f32.mrf.mxu0
      %v1967 = vadd.f32 0.0, %v1966
      %v1968 = vpop.f32.mrf.mxu0
      %1969 = vmatprep.mubr.bf16.mxu0 0
      %1970 = vmatmul.mubr.bf16.gmra.mxu0 %v1869
      %v1971 = vpop.f32.mrf.mxu0
      %v1972 = vadd.f32 0.0, %v1971
      %v1973 = vpop.f32.mrf.mxu0
      %v1974 = vpop.f32.mrf.mxu0
      %v1975 = vadd.f32 0.0, %v1974
      %v1976 = vpop.f32.mrf.mxu0
      %1977 = vmatprep.mubr.bf16.mxu0 0
      %1978 = vmatmul.mubr.bf16.gmra.mxu0 %v1871
      %v1979 = vpop.f32.mrf.mxu0
      %v1980 = vadd.f32 0.0, %v1979
      %v1981 = vpop.f32.mrf.mxu0
      %v1982 = vpop.f32.mrf.mxu0
      %v1983 = vadd.f32 0.0, %v1982
      %v1984 = vpop.f32.mrf.mxu0
      %1985 = vmatprep.mubr.bf16.mxu0 0
      %1986 = vmatmul.mubr.bf16.gmra.mxu0 %v1873
      %v1987 = vpop.f32.mrf.mxu0
      %v1988 = vadd.f32 0.0, %v1987
      %v1989 = vpop.f32.mrf.mxu0
      %v1990 = vpop.f32.mrf.mxu0
      %v1991 = vadd.f32 0.0, %v1990
      %v1992 = vpop.f32.mrf.mxu0
      %1993 = vmatprep.mubr.bf16.mxu0 0
      %1994 = vmatmul.mubr.bf16.gmra.mxu0 %v1875
      %v1995 = vpop.f32.mrf.mxu0
      %v1996 = vadd.f32 0.0, %v1995
      %v1997 = vpop.f32.mrf.mxu0
      %v1998 = vpop.f32.mrf.mxu0
      %v1999 = vadd.f32 0.0, %v1998
      %v2000 = vpop.f32.mrf.mxu0
      %2001 = vdwg.mxu0
      %v2002 = vadd.f32 %v1799, %v1964
      %v2003 = vadd.f32 %v1800, %v1967
      %v2004 = vadd.f32 %v1801, %v1972
      %v2005 = vadd.f32 %v1802, %v1975
      %v2006 = vadd.f32 %v1803, %v1980
      %v2007 = vadd.f32 %v1804, %v1983
      %v2008 = vadd.f32 %v1805, %v1988
      %v2009 = vadd.f32 %v1806, %v1991
      %v2010 = vadd.f32 %v1807, %v1996
      %v2011 = vadd.f32 %v1808, %v1999
      %v2012 = vld [vmem:[#allocation2 + $0x30] sm:$0x7]
      %s2013 = scalar_lea.vmem %s3, 448
      %v2014 = vld [vmem:[%s2013] sm:$0xf]
      %v2015 = vld [vmem:[%s2013 + $0x4] sm:$0xf]
      %v2016 = vld [vmem:[%s2013 + $0x8] sm:$0xf]
      %v2017 = vld [vmem:[%s2013 + $0xc] sm:$0xf]
      %v2018 = vld [vmem:[%s2013 + $0x10] sm:$0xf]
      %v2019 = vld [vmem:[%s2013 + $0x14] sm:$0xf]
      %v2020 = vld [vmem:[%s2013 + $0x18] sm:$0xf]
      %v2021 = vld [vmem:[%s2013 + $0x1c] sm:$0xf]
      %v2022 = vld [vmem:[%s2013 + $0x20] sm:$0xf]
      %v2023 = vld [vmem:[%s2013 + $0x24] sm:$0xf]
      %v2024 = vld [vmem:[%s2013 + $0x28] sm:$0xf]
      %v2025 = vld [vmem:[%s2013 + $0x2c] sm:$0xf]
      %v2026 = vld [vmem:[%s2013 + $0x30] sm:$0xf]
      %v2027 = vld [vmem:[%s2013 + $0x34] sm:$0xf]
      %v2028 = vld [vmem:[%s2013 + $0x38] sm:$0xf]
      %v2029 = vld [vmem:[%s2013 + $0x3c] sm:$0xf]
      %v2031 = vunpack.c.l.b16 %v2012
      %v2032 = vpack.c.b16 %v2031, %v2031
      %vm2033 = vsmask.f32 5376
      %v2035 = vshrl.u32 %v1859, 16
      %v2037 = vrot.slane %v2035, 2
      %v2038 = vshll.u32 %v1859, 16
      %v2040 = vrot.slane %v2038, 3
      %v2041 = vor.u32 %v2037, %v2040
      %v2043 = vshrl.u32 %v1860, 16
      %v2045 = vrot.slane %v2043, 2
      %v2046 = vshll.u32 %v1860, 16
      %v2048 = vrot.slane %v2046, 3
      %v2049 = vor.u32 %v2045, %v2048
      %v2050 = vsel %vm2033, %v2041, %v2049
      %v2052 = vshrl.u32 %v1861, 16
      %v2054 = vrot.slane %v2052, 2
      %v2055 = vshll.u32 %v1861, 16
      %v2057 = vrot.slane %v2055, 3
      %v2058 = vor.u32 %v2054, %v2057
      %v2059 = vsel %vm2033, %v2049, %v2058
      %v2061 = vshrl.u32 %v1862, 16
      %v2063 = vrot.slane %v2061, 2
      %v2064 = vshll.u32 %v1862, 16
      %v2066 = vrot.slane %v2064, 3
      %v2067 = vor.u32 %v2063, %v2066
      %v2068 = vsel %vm2033, %v2058, %v2067
      %v2070 = vshrl.u32 %v1863, 16
      %v2072 = vrot.slane %v2070, 2
      %v2073 = vshll.u32 %v1863, 16
      %v2075 = vrot.slane %v2073, 3
      %v2076 = vor.u32 %v2072, %v2075
      %v2077 = vsel %vm2033, %v2067, %v2076
      %v2079 = vshrl.u32 %v2032, 16
      %v2081 = vrot.slane %v2079, 2
      %v2082 = vshll.u32 %v2032, 16
      %v2084 = vrot.slane %v2082, 3
      %v2085 = vor.u32 %v2081, %v2084
      %v2086 = vsel %vm2033, %v2076, %v2085
      %v2108 = vunpack.c.l.b16 %v2014
      %v2109 = vunpack.c.l.b16 %v2015
      %v2110 = vunpack.c.l.b16 %v2016
      %v2111 = vunpack.c.l.b16 %v2017
      %v2112 = vunpack.c.l.b16 %v2018
      %v2113 = vunpack.c.l.b16 %v2019
      %v2114 = vunpack.c.l.b16 %v2020
      %v2115 = vunpack.c.l.b16 %v2021
      %v2116 = vunpack.c.l.b16 %v2022
      %v2117 = vunpack.c.l.b16 %v2023
      %v2118 = vunpack.c.l.b16 %v2024
      %v2119 = vunpack.c.l.b16 %v2025
      %v2120 = vunpack.c.l.b16 %v2026
      %v2121 = vunpack.c.l.b16 %v2027
      %v2122 = vunpack.c.l.b16 %v2028
      %v2123 = vunpack.c.l.b16 %v2029
      %v2124 = vpack.c.b16 %v2109, %v2108
      %v2125 = vpack.c.b16 %v2111, %v2110
      %v2126 = vpack.c.b16 %v2113, %v2112
      %v2127 = vpack.c.b16 %v2115, %v2114
      %v2128 = vpack.c.b16 %v2117, %v2116
      %v2129 = vpack.c.b16 %v2119, %v2118
      %v2130 = vpack.c.b16 %v2121, %v2120
      %v2131 = vpack.c.b16 %v2123, %v2122
      %2140 = vmatprep.subr.bf16.mxu0 0
      %2141 = vmatpush1.bf16.msra.mxu0 %v2131
      %2142 = vmatprep.subr.bf16.mxu0 0
      %2143 = vmatpush1.bf16.msra.mxu0 %v2130
      %2144 = vmatprep.subr.bf16.mxu0 0
      %2145 = vmatpush1.bf16.msra.mxu0 %v2129
      %2146 = vmatprep.subr.bf16.mxu0 0
      %2147 = vmatpush1.bf16.msra.mxu0 %v2128
      %2148 = vmatprep.subr.bf16.mxu0 0
      %2149 = vmatpush1.bf16.msra.mxu0 %v2127
      %2150 = vmatprep.subr.bf16.mxu0 0
      %2151 = vmatpush1.bf16.msra.mxu0 %v2126
      %2152 = vmatprep.subr.bf16.mxu0 0
      %2153 = vmatpush1.bf16.msra.mxu0 %v2125
      %2154 = vmatprep.subr.bf16.mxu0 0
      %2155 = vmatpush1.bf16.msra.mxu0 %v2124
      %2156 = vmatprep.subr.bf16.mxu0 0
      %2157 = vmatpush2.bf16.msra.mxu0 0
      %2158 = vmatprep.subr.bf16.mxu0 0
      %2159 = vmatpush2.bf16.msra.mxu0 0
      %2160 = vmatprep.subr.bf16.mxu0 0
      %2161 = vmatpush2.bf16.msra.mxu0 0
      %2162 = vmatprep.subr.bf16.mxu0 0
      %2163 = vmatpush2.bf16.msra.mxu0 0
      %2164 = vmatprep.subr.bf16.mxu0 0
      %2165 = vmatpush2.bf16.msra.mxu0 0
      %2166 = vmatprep.subr.bf16.mxu0 0
      %2167 = vmatpush2.bf16.msra.mxu0 0
      %2168 = vmatprep.subr.bf16.mxu0 0
      %2169 = vmatpush2.bf16.msra.mxu0 0
      %2170 = vmatprep.subr.bf16.mxu0 0
      %2171 = vmatpush2.bf16.msra.mxu0 0
      %2172 = vmatprep.mubr.bf16.mxu0 0
      %2173 = vmatmul.mubr.bf16.gmra.mxu0 %v2050
      %v2174 = vpop.f32.mrf.mxu0
      %v2175 = vadd.f32 0.0, %v2174
      %v2176 = vpop.f32.mrf.mxu0
      %v2177 = vpop.f32.mrf.mxu0
      %v2178 = vadd.f32 0.0, %v2177
      %v2179 = vpop.f32.mrf.mxu0
      %2180 = vmatprep.mubr.bf16.mxu0 0
      %2181 = vmatmul.mubr.bf16.gmra.mxu0 %v2059
      %v2182 = vpop.f32.mrf.mxu0
      %v2183 = vadd.f32 0.0, %v2182
      %v2184 = vpop.f32.mrf.mxu0
      %v2185 = vpop.f32.mrf.mxu0
      %v2186 = vadd.f32 0.0, %v2185
      %v2187 = vpop.f32.mrf.mxu0
      %2188 = vmatprep.mubr.bf16.mxu0 0
      %2189 = vmatmul.mubr.bf16.gmra.mxu0 %v2068
      %v2190 = vpop.f32.mrf.mxu0
      %v2191 = vadd.f32 0.0, %v2190
      %v2192 = vpop.f32.mrf.mxu0
      %v2193 = vpop.f32.mrf.mxu0
      %v2194 = vadd.f32 0.0, %v2193
      %v2195 = vpop.f32.mrf.mxu0
      %2196 = vmatprep.mubr.bf16.mxu0 0
      %2197 = vmatmul.mubr.bf16.gmra.mxu0 %v2077
      %v2198 = vpop.f32.mrf.mxu0
      %v2199 = vadd.f32 0.0, %v2198
      %v2200 = vpop.f32.mrf.mxu0
      %v2201 = vpop.f32.mrf.mxu0
      %v2202 = vadd.f32 0.0, %v2201
      %v2203 = vpop.f32.mrf.mxu0
      %2204 = vmatprep.mubr.bf16.mxu0 0
      %2205 = vmatmul.mubr.bf16.gmra.mxu0 %v2086
      %v2206 = vpop.f32.mrf.mxu0
      %v2207 = vadd.f32 0.0, %v2206
      %v2208 = vpop.f32.mrf.mxu0
      %v2209 = vpop.f32.mrf.mxu0
      %v2210 = vadd.f32 0.0, %v2209
      %v2211 = vpop.f32.mrf.mxu0
      %2212 = vdwg.mxu0
      %v2213 = vadd.f32 %v2002, %v2175
      %v2214 = vadd.f32 %v2003, %v2178
      %v2215 = vadd.f32 %v2004, %v2183
      %v2216 = vadd.f32 %v2005, %v2186
      %v2217 = vadd.f32 %v2006, %v2191
      %v2218 = vadd.f32 %v2007, %v2194
      %v2219 = vadd.f32 %v2008, %v2199
      %v2220 = vadd.f32 %v2009, %v2202
      %v2221 = vadd.f32 %v2010, %v2207
      %v2222 = vadd.f32 %v2011, %v2210
      %v2223 = vld [vmem:[#allocation2 + $0x8] sm:$0x8]
      %s2224 = scalar_lea.vmem %s3, 512
      %v2225 = vld [vmem:[%s2224] sm:$0xf]
      %v2226 = vld [vmem:[%s2224 + $0x4] sm:$0xf]
      %v2227 = vld [vmem:[%s2224 + $0x8] sm:$0xf]
      %v2228 = vld [vmem:[%s2224 + $0xc] sm:$0xf]
      %v2229 = vld [vmem:[%s2224 + $0x10] sm:$0xf]
      %v2230 = vld [vmem:[%s2224 + $0x14] sm:$0xf]
      %v2231 = vld [vmem:[%s2224 + $0x18] sm:$0xf]
      %v2232 = vld [vmem:[%s2224 + $0x1c] sm:$0xf]
      %v2233 = vld [vmem:[%s2224 + $0x20] sm:$0xf]
      %v2234 = vld [vmem:[%s2224 + $0x24] sm:$0xf]
      %v2235 = vld [vmem:[%s2224 + $0x28] sm:$0xf]
      %v2236 = vld [vmem:[%s2224 + $0x2c] sm:$0xf]
      %v2237 = vld [vmem:[%s2224 + $0x30] sm:$0xf]
      %v2238 = vld [vmem:[%s2224 + $0x34] sm:$0xf]
      %v2239 = vld [vmem:[%s2224 + $0x38] sm:$0xf]
      %v2240 = vld [vmem:[%s2224 + $0x3c] sm:$0xf]
      %v2242 = vunpack.c.l.b16 %v2223
      %v2243 = vpack.c.b16 %v1849, %v2242
      %vm2244 = vcmask 1044480
      %v2245 = vrot.slane %v2243, 3
      %v2246 = vrot.slane %v1860, 3
      %v2247 = vsel %vm2244, %v2245, %v2246
      %v2248 = vrot.slane %v1861, 3
      %v2249 = vsel %vm2244, %v2246, %v2248
      %v2250 = vrot.slane %v1862, 3
      %v2251 = vsel %vm2244, %v2248, %v2250
      %v2252 = vrot.slane %v1863, 3
      %v2253 = vsel %vm2244, %v2250, %v2252
      %v2254 = vrot.slane %v2032, 3
      %v2255 = vsel %vm2244, %v2252, %v2254
      %v2277 = vunpack.c.l.b16 %v2225
      %v2278 = vunpack.c.l.b16 %v2226
      %v2279 = vunpack.c.l.b16 %v2227
      %v2280 = vunpack.c.l.b16 %v2228
      %v2281 = vunpack.c.l.b16 %v2229
      %v2282 = vunpack.c.l.b16 %v2230
      %v2283 = vunpack.c.l.b16 %v2231
      %v2284 = vunpack.c.l.b16 %v2232
      %v2285 = vunpack.c.l.b16 %v2233
      %v2286 = vunpack.c.l.b16 %v2234
      %v2287 = vunpack.c.l.b16 %v2235
      %v2288 = vunpack.c.l.b16 %v2236
      %v2289 = vunpack.c.l.b16 %v2237
      %v2290 = vunpack.c.l.b16 %v2238
      %v2291 = vunpack.c.l.b16 %v2239
      %v2292 = vunpack.c.l.b16 %v2240
      %v2293 = vpack.c.b16 %v2278, %v2277
      %v2294 = vpack.c.b16 %v2280, %v2279
      %v2295 = vpack.c.b16 %v2282, %v2281
      %v2296 = vpack.c.b16 %v2284, %v2283
      %v2297 = vpack.c.b16 %v2286, %v2285
      %v2298 = vpack.c.b16 %v2288, %v2287
      %v2299 = vpack.c.b16 %v2290, %v2289
      %v2300 = vpack.c.b16 %v2292, %v2291
      %2309 = vmatprep.subr.bf16.mxu0 0
      %2310 = vmatpush1.bf16.msra.mxu0 %v2300
      %2311 = vmatprep.subr.bf16.mxu0 0
      %2312 = vmatpush1.bf16.msra.mxu0 %v2299
      %2313 = vmatprep.subr.bf16.mxu0 0
      %2314 = vmatpush1.bf16.msra.mxu0 %v2298
      %2315 = vmatprep.subr.bf16.mxu0 0
      %2316 = vmatpush1.bf16.msra.mxu0 %v2297
      %2317 = vmatprep.subr.bf16.mxu0 0
      %2318 = vmatpush1.bf16.msra.mxu0 %v2296
      %2319 = vmatprep.subr.bf16.mxu0 0
      %2320 = vmatpush1.bf16.msra.mxu0 %v2295
      %2321 = vmatprep.subr.bf16.mxu0 0
      %2322 = vmatpush1.bf16.msra.mxu0 %v2294
      %2323 = vmatprep.subr.bf16.mxu0 0
      %2324 = vmatpush1.bf16.msra.mxu0 %v2293
      %2325 = vmatprep.subr.bf16.mxu0 0
      %2326 = vmatpush2.bf16.msra.mxu0 0
      %2327 = vmatprep.subr.bf16.mxu0 0
      %2328 = vmatpush2.bf16.msra.mxu0 0
      %2329 = vmatprep.subr.bf16.mxu0 0
      %2330 = vmatpush2.bf16.msra.mxu0 0
      %2331 = vmatprep.subr.bf16.mxu0 0
      %2332 = vmatpush2.bf16.msra.mxu0 0
      %2333 = vmatprep.subr.bf16.mxu0 0
      %2334 = vmatpush2.bf16.msra.mxu0 0
      %2335 = vmatprep.subr.bf16.mxu0 0
      %2336 = vmatpush2.bf16.msra.mxu0 0
      %2337 = vmatprep.subr.bf16.mxu0 0
      %2338 = vmatpush2.bf16.msra.mxu0 0
      %2339 = vmatprep.subr.bf16.mxu0 0
      %2340 = vmatpush2.bf16.msra.mxu0 0
      %2341 = vmatprep.mubr.bf16.mxu0 0
      %2342 = vmatmul.mubr.bf16.gmra.mxu0 %v2247
      %v2343 = vpop.f32.mrf.mxu0
      %v2344 = vadd.f32 0.0, %v2343
      %v2345 = vpop.f32.mrf.mxu0
      %v2346 = vpop.f32.mrf.mxu0
      %v2347 = vadd.f32 0.0, %v2346
      %v2348 = vpop.f32.mrf.mxu0
      %2349 = vmatprep.mubr.bf16.mxu0 0
      %2350 = vmatmul.mubr.bf16.gmra.mxu0 %v2249
      %v2351 = vpop.f32.mrf.mxu0
      %v2352 = vadd.f32 0.0, %v2351
      %v2353 = vpop.f32.mrf.mxu0
      %v2354 = vpop.f32.mrf.mxu0
      %v2355 = vadd.f32 0.0, %v2354
      %v2356 = vpop.f32.mrf.mxu0
      %2357 = vmatprep.mubr.bf16.mxu0 0
      %2358 = vmatmul.mubr.bf16.gmra.mxu0 %v2251
      %v2359 = vpop.f32.mrf.mxu0
      %v2360 = vadd.f32 0.0, %v2359
      %v2361 = vpop.f32.mrf.mxu0
      %v2362 = vpop.f32.mrf.mxu0
      %v2363 = vadd.f32 0.0, %v2362
      %v2364 = vpop.f32.mrf.mxu0
      %2365 = vmatprep.mubr.bf16.mxu0 0
      %2366 = vmatmul.mubr.bf16.gmra.mxu0 %v2253
      %v2367 = vpop.f32.mrf.mxu0
      %v2368 = vadd.f32 0.0, %v2367
      %v2369 = vpop.f32.mrf.mxu0
      %v2370 = vpop.f32.mrf.mxu0
      %v2371 = vadd.f32 0.0, %v2370
      %v2372 = vpop.f32.mrf.mxu0
      %2373 = vmatprep.mubr.bf16.mxu0 0
      %2374 = vmatmul.mubr.bf16.gmra.mxu0 %v2255
      %v2375 = vpop.f32.mrf.mxu0
      %v2376 = vadd.f32 0.0, %v2375
      %v2377 = vpop.f32.mrf.mxu0
      %v2378 = vpop.f32.mrf.mxu0
      %v2379 = vadd.f32 0.0, %v2378
      %v2380 = vpop.f32.mrf.mxu0
      %2381 = vdwg.mxu0
      %v2382 = vadd.f32 %v2213, %v2344
      %v2383 = vadd.f32 %v2214, %v2347
      %v2384 = vadd.f32 %v2215, %v2352
      %v2385 = vadd.f32 %v2216, %v2355
      %v2386 = vadd.f32 %v2217, %v2360
      %v2387 = vadd.f32 %v2218, %v2363
      %v2388 = vadd.f32 %v2219, %v2368
      %v2389 = vadd.f32 %v2220, %v2371
      %v2390 = vadd.f32 %v2221, %v2376
      %v2391 = vadd.f32 %v2222, %v2379
      %v2392 = vld [vmem:[%s6] sm:$0xff]
      %v2393 = vld [vmem:[%s6 + $0x8] sm:$0xff]
      %v2394 = vld [vmem:[%s6 + $0x10] sm:$0xff]
      %v2395 = vld [vmem:[%s6 + $0x18] sm:$0xff]
      %v2396 = vld [vmem:[%s6 + $0x20] sm:$0xff]
      %v2397 = vld [vmem:[%s6 + $0x28] sm:$0xff]
      %v2398 = vld [vmem:[%s6 + $0x30] sm:$0xff]
      %v2399 = vld [vmem:[%s6 + $0x38] sm:$0xff]
      %v2400 = vld [vmem:[%s6 + $0x40] sm:$0xff]
      %v2401 = vld [vmem:[%s6 + $0x48] sm:$0xff]
      %2403 = vset.pattern.permute.xlu0 0
      %2404 = vperm.xlu0 %2403, %v2392
      %v2405 = vpop.permute.xlu0 %2404
      %2408 = vset.pattern.permute.xlu0 0
      %2409 = vperm.xlu0 %2408, %v2393
      %v2410 = vpop.permute.xlu0 %2409
      %2413 = vset.pattern.permute.xlu0 0
      %2414 = vperm.xlu0 %2413, %v2394
      %v2415 = vpop.permute.xlu0 %2414
      %2418 = vset.pattern.permute.xlu0 0
      %2419 = vperm.xlu0 %2418, %v2395
      %v2420 = vpop.permute.xlu0 %2419
      %2423 = vset.pattern.permute.xlu0 0
      %2424 = vperm.xlu0 %2423, %v2396
      %v2425 = vpop.permute.xlu0 %2424
      %2428 = vset.pattern.permute.xlu0 0
      %2429 = vperm.xlu0 %2428, %v2397
      %v2430 = vpop.permute.xlu0 %2429
      %2433 = vset.pattern.permute.xlu0 0
      %2434 = vperm.xlu0 %2433, %v2398
      %v2435 = vpop.permute.xlu0 %2434
      %2438 = vset.pattern.permute.xlu0 0
      %2439 = vperm.xlu0 %2438, %v2399
      %v2440 = vpop.permute.xlu0 %2439
      %2443 = vset.pattern.permute.xlu0 0
      %2444 = vperm.xlu0 %2443, %v2400
      %v2445 = vpop.permute.xlu0 %2444
      %2448 = vset.pattern.permute.xlu0 0
      %2449 = vperm.xlu0 %2448, %v2401
      %v2450 = vpop.permute.xlu0 %2449
      %v2452 = vmul.f32 %v2382, %v2405
      %v2453 = vmul.f32 %v2383, %v2410
      %v2454 = vmul.f32 %v2384, %v2415
      %v2455 = vmul.f32 %v2385, %v2420
      %v2456 = vmul.f32 %v2386, %v2425
      %v2457 = vmul.f32 %v2387, %v2430
      %v2458 = vmul.f32 %v2388, %v2435
      %v2459 = vmul.f32 %v2389, %v2440
      %v2460 = vmul.f32 %v2390, %v2445
      %v2461 = vmul.f32 %v2391, %v2450
      %v2462 = vld [vmem:[%s361] sm:$0xf]
      %v2463 = vld [vmem:[%s361 + $0x4] sm:$0xf]
      %v2464 = vld [vmem:[%s361 + $0x8] sm:$0xf]
      %v2465 = vld [vmem:[%s361 + $0xc] sm:$0xf]
      %v2466 = vld [vmem:[%s361 + $0x10] sm:$0xf]
      %v2467 = vld [vmem:[%s361 + $0x14] sm:$0xf]
      %v2468 = vld [vmem:[%s361 + $0x18] sm:$0xf]
      %v2469 = vld [vmem:[%s361 + $0x1c] sm:$0xf]
      %v2470 = vld [vmem:[%s361 + $0x20] sm:$0xf]
      %v2471 = vld [vmem:[%s361 + $0x24] sm:$0xf]
      %v2472 = vld [vmem:[%s5] sm:$0xf]
      %v2473 = vld [vmem:[%s5 + $0x4] sm:$0xf]
      %v2474 = vld [vmem:[%s5 + $0x8] sm:$0xf]
      %v2475 = vld [vmem:[%s5 + $0xc] sm:$0xf]
      %v2476 = vld [vmem:[%s5 + $0x10] sm:$0xf]
      %v2477 = vld [vmem:[%s5 + $0x14] sm:$0xf]
      %v2478 = vld [vmem:[%s5 + $0x18] sm:$0xf]
      %v2479 = vld [vmem:[%s5 + $0x1c] sm:$0xf]
      %v2480 = vld [vmem:[%s5 + $0x20] sm:$0xf]
      %v2481 = vld [vmem:[%s5 + $0x24] sm:$0xf]
      %v2482 = vld [vmem:[%s5 + $0x28] sm:$0xf]
      %v2483 = vld [vmem:[%s5 + $0x2c] sm:$0xf]
      %v2484 = vld [vmem:[%s5 + $0x30] sm:$0xf]
      %v2485 = vld [vmem:[%s5 + $0x34] sm:$0xf]
      %v2486 = vld [vmem:[%s5 + $0x38] sm:$0xf]
      %v2487 = vld [vmem:[%s5 + $0x3c] sm:$0xf]
      %v2498 = vunpack.c.l.b16 %v2462
      %v2499 = vunpack.c.l.b16 %v2463
      %v2500 = vunpack.c.l.b16 %v2464
      %v2501 = vunpack.c.l.b16 %v2465
      %v2502 = vunpack.c.l.b16 %v2466
      %v2503 = vunpack.c.l.b16 %v2467
      %v2504 = vunpack.c.l.b16 %v2468
      %v2505 = vunpack.c.l.b16 %v2469
      %v2506 = vunpack.c.l.b16 %v2470
      %v2507 = vunpack.c.l.b16 %v2471
      %v2508 = vpack.c.b16 %v2499, %v2498
      %v2509 = vpack.c.b16 %v2501, %v2500
      %v2510 = vpack.c.b16 %v2503, %v2502
      %v2511 = vpack.c.b16 %v2505, %v2504
      %v2512 = vpack.c.b16 %v2507, %v2506
      %v2534 = vunpack.c.l.b16 %v2472
      %v2535 = vunpack.c.l.b16 %v2473
      %v2536 = vunpack.c.l.b16 %v2474
      %v2537 = vunpack.c.l.b16 %v2475
      %v2538 = vunpack.c.l.b16 %v2476
      %v2539 = vunpack.c.l.b16 %v2477
      %v2540 = vunpack.c.l.b16 %v2478
      %v2541 = vunpack.c.l.b16 %v2479
      %v2542 = vunpack.c.l.b16 %v2480
      %v2543 = vunpack.c.l.b16 %v2481
      %v2544 = vunpack.c.l.b16 %v2482
      %v2545 = vunpack.c.l.b16 %v2483
      %v2546 = vunpack.c.l.b16 %v2484
      %v2547 = vunpack.c.l.b16 %v2485
      %v2548 = vunpack.c.l.b16 %v2486
      %v2549 = vunpack.c.l.b16 %v2487
      %v2550 = vpack.c.b16 %v2535, %v2534
      %v2551 = vpack.c.b16 %v2537, %v2536
      %v2552 = vpack.c.b16 %v2539, %v2538
      %v2553 = vpack.c.b16 %v2541, %v2540
      %v2554 = vpack.c.b16 %v2543, %v2542
      %v2555 = vpack.c.b16 %v2545, %v2544
      %v2556 = vpack.c.b16 %v2547, %v2546
      %v2557 = vpack.c.b16 %v2549, %v2548
      %2566 = vmatprep.subr.bf16.mxu0 0
      %2567 = vmatpush1.bf16.msra.mxu0 %v2557
      %2568 = vmatprep.subr.bf16.mxu0 0
      %2569 = vmatpush1.bf16.msra.mxu0 %v2556
      %2570 = vmatprep.subr.bf16.mxu0 0
      %2571 = vmatpush1.bf16.msra.mxu0 %v2555
      %2572 = vmatprep.subr.bf16.mxu0 0
      %2573 = vmatpush1.bf16.msra.mxu0 %v2554
      %2574 = vmatprep.subr.bf16.mxu0 0
      %2575 = vmatpush1.bf16.msra.mxu0 %v2553
      %2576 = vmatprep.subr.bf16.mxu0 0
      %2577 = vmatpush1.bf16.msra.mxu0 %v2552
      %2578 = vmatprep.subr.bf16.mxu0 0
      %2579 = vmatpush1.bf16.msra.mxu0 %v2551
      %2580 = vmatprep.subr.bf16.mxu0 0
      %2581 = vmatpush1.bf16.msra.mxu0 %v2550
      %2582 = vmatprep.subr.bf16.mxu0 0
      %2583 = vmatpush2.bf16.msra.mxu0 0
      %2584 = vmatprep.subr.bf16.mxu0 0
      %2585 = vmatpush2.bf16.msra.mxu0 0
      %2586 = vmatprep.subr.bf16.mxu0 0
      %2587 = vmatpush2.bf16.msra.mxu0 0
      %2588 = vmatprep.subr.bf16.mxu0 0
      %2589 = vmatpush2.bf16.msra.mxu0 0
      %2590 = vmatprep.subr.bf16.mxu0 0
      %2591 = vmatpush2.bf16.msra.mxu0 0
      %2592 = vmatprep.subr.bf16.mxu0 0
      %2593 = vmatpush2.bf16.msra.mxu0 0
      %2594 = vmatprep.subr.bf16.mxu0 0
      %2595 = vmatpush2.bf16.msra.mxu0 0
      %2596 = vmatprep.subr.bf16.mxu0 0
      %2597 = vmatpush2.bf16.msra.mxu0 0
      %2598 = vmatprep.mubr.bf16.mxu0 0
      %2599 = vmatmul.mubr.bf16.gmra.mxu0 %v2508
      %v2600 = vpop.f32.mrf.mxu0
      %v2601 = vadd.f32 0.0, %v2600
      %v2602 = vpop.f32.mrf.mxu0
      %v2603 = vpop.f32.mrf.mxu0
      %v2604 = vadd.f32 0.0, %v2603
      %v2605 = vpop.f32.mrf.mxu0
      %2606 = vmatprep.mubr.bf16.mxu0 0
      %2607 = vmatmul.mubr.bf16.gmra.mxu0 %v2509
      %v2608 = vpop.f32.mrf.mxu0
      %v2609 = vadd.f32 0.0, %v2608
      %v2610 = vpop.f32.mrf.mxu0
      %v2611 = vpop.f32.mrf.mxu0
      %v2612 = vadd.f32 0.0, %v2611
      %v2613 = vpop.f32.mrf.mxu0
      %2614 = vmatprep.mubr.bf16.mxu0 0
      %2615 = vmatmul.mubr.bf16.gmra.mxu0 %v2510
      %v2616 = vpop.f32.mrf.mxu0
      %v2617 = vadd.f32 0.0, %v2616
      %v2618 = vpop.f32.mrf.mxu0
      %v2619 = vpop.f32.mrf.mxu0
      %v2620 = vadd.f32 0.0, %v2619
      %v2621 = vpop.f32.mrf.mxu0
      %2622 = vmatprep.mubr.bf16.mxu0 0
      %2623 = vmatmul.mubr.bf16.gmra.mxu0 %v2511
      %v2624 = vpop.f32.mrf.mxu0
      %v2625 = vadd.f32 0.0, %v2624
      %v2626 = vpop.f32.mrf.mxu0
      %v2627 = vpop.f32.mrf.mxu0
      %v2628 = vadd.f32 0.0, %v2627
      %v2629 = vpop.f32.mrf.mxu0
      %2630 = vmatprep.mubr.bf16.mxu0 0
      %2631 = vmatmul.mubr.bf16.gmra.mxu0 %v2512
      %v2632 = vpop.f32.mrf.mxu0
      %v2633 = vadd.f32 0.0, %v2632
      %v2634 = vpop.f32.mrf.mxu0
      %v2635 = vpop.f32.mrf.mxu0
      %v2636 = vadd.f32 0.0, %v2635
      %v2637 = vpop.f32.mrf.mxu0
      %2638 = vdwg.mxu0
      %v2639 = vpack.c.bf16 %v2453, %v2452
      %v2640 = vpack.c.bf16 %v2455, %v2454
      %v2641 = vpack.c.bf16 %v2457, %v2456
      %v2642 = vpack.c.bf16 %v2459, %v2458
      %v2643 = vpack.c.bf16 %v2461, %v2460
      %v2649 = vunpack.c.l.b16 %v2639
      %v2650 = vunpack.c.h.b16 %v2639
      %v2651 = vunpack.c.l.b16 %v2640
      %v2652 = vunpack.c.h.b16 %v2640
      %v2653 = vunpack.c.l.b16 %v2641
      %v2654 = vunpack.c.h.b16 %v2641
      %v2655 = vunpack.c.l.b16 %v2642
      %v2656 = vunpack.c.h.b16 %v2642
      %v2657 = vunpack.c.l.b16 %v2643
      %v2658 = vunpack.c.h.b16 %v2643
      %v2659 = vpack.c.b16 %v2649, %v2649
      %v2660 = vpack.c.b16 %v2650, %v2650
      %v2661 = vpack.c.b16 %v2651, %v2651
      %v2662 = vpack.c.b16 %v2652, %v2652
      %v2663 = vpack.c.b16 %v2653, %v2653
      %v2664 = vpack.c.b16 %v2654, %v2654
      %v2665 = vpack.c.b16 %v2655, %v2655
      %v2666 = vpack.c.b16 %v2656, %v2656
      %v2667 = vpack.c.b16 %v2657, %v2657
      %v2668 = vpack.c.b16 %v2658, %v2658
      %2679 = vst [vmem:[%s366] sm:$0xf] %v2659
      %2680 = vst [vmem:[%s366 + $0x4] sm:$0xf] %v2660
      %2681 = vst [vmem:[%s366 + $0x8] sm:$0xf] %v2661
      %2682 = vst [vmem:[%s366 + $0xc] sm:$0xf] %v2662
      %2683 = vst [vmem:[%s366 + $0x10] sm:$0xf] %v2663
      %2684 = vst [vmem:[%s366 + $0x14] sm:$0xf] %v2664
      %2685 = vst [vmem:[%s366 + $0x18] sm:$0xf] %v2665
      %2686 = vst [vmem:[%s366 + $0x1c] sm:$0xf] %v2666
      %2687 = vst [vmem:[%s366 + $0x20] sm:$0xf] %v2667
      %2688 = vst [vmem:[%s366 + $0x24] sm:$0xf] %v2668
      %v2689 = vpack.c.bf16 %v2604, %v2601
      %v2690 = vpack.c.bf16 %v2612, %v2609
      %v2691 = vpack.c.bf16 %v2620, %v2617
      %v2692 = vpack.c.bf16 %v2628, %v2625
      %v2693 = vpack.c.bf16 %v2636, %v2633
      %v2699 = vunpack.c.l.b16 %v2689
      %v2700 = vunpack.c.h.b16 %v2689
      %v2701 = vunpack.c.l.b16 %v2690
      %v2702 = vunpack.c.h.b16 %v2690
      %v2703 = vunpack.c.l.b16 %v2691
      %v2704 = vunpack.c.h.b16 %v2691
      %v2705 = vunpack.c.l.b16 %v2692
      %v2706 = vunpack.c.h.b16 %v2692
      %v2707 = vunpack.c.l.b16 %v2693
      %v2708 = vunpack.c.h.b16 %v2693
      %v2709 = vpack.c.b16 %v2699, %v2699
      %v2710 = vpack.c.b16 %v2700, %v2700
      %v2711 = vpack.c.b16 %v2701, %v2701
      %v2712 = vpack.c.b16 %v2702, %v2702
      %v2713 = vpack.c.b16 %v2703, %v2703
      %v2714 = vpack.c.b16 %v2704, %v2704
      %v2715 = vpack.c.b16 %v2705, %v2705
      %v2716 = vpack.c.b16 %v2706, %v2706
      %v2717 = vpack.c.b16 %v2707, %v2707
      %v2718 = vpack.c.b16 %v2708, %v2708
      %2729 = vst [vmem:[%s371] sm:$0xf] %v2709
      %2730 = vst [vmem:[%s371 + $0x4] sm:$0xf] %v2710
      %2731 = vst [vmem:[%s371 + $0x8] sm:$0xf] %v2711
      %2732 = vst [vmem:[%s371 + $0xc] sm:$0xf] %v2712
      %2733 = vst [vmem:[%s371 + $0x10] sm:$0xf] %v2713
      %2734 = vst [vmem:[%s371 + $0x14] sm:$0xf] %v2714
      %2735 = vst [vmem:[%s371 + $0x18] sm:$0xf] %v2715
      %2736 = vst [vmem:[%s371 + $0x1c] sm:$0xf] %v2716
      %2737 = vst [vmem:[%s371 + $0x20] sm:$0xf] %v2717
      %2738 = vst [vmem:[%s371 + $0x24] sm:$0xf] %v2718
      %v2739 = vadd.f32 %v2452, %v2453
      %v2740 = vadd.f32 %v2739, %v2454
      %v2741 = vadd.f32 %v2740, %v2455
      %v2742 = vadd.f32 %v2741, %v2456
      %v2743 = vadd.f32 %v2742, %v2457
      %v2744 = vadd.f32 %v2743, %v2458
      %v2745 = vadd.f32 %v2744, %v2459
      %v2746 = vadd.f32 %v2745, %v2460
      %v2747 = vadd.f32 %v2746, %v2461
      %v2748 = vrot.slane %v2747, 4
      %v2749 = vadd.f32 %v2747, %v2748
      %v2750 = vrot.slane %v2749, 2
      %v2751 = vadd.f32 %v2749, %v2750
      %v2752 = vrot.slane %v2751, 1
      %v2753 = vadd.f32 %v2751, %v2752
      %v2754 = vmul.f32 %v2452, %v2452
      %v2755 = vmul.f32 %v2453, %v2453
      %v2756 = vmul.f32 %v2454, %v2454
      %v2757 = vmul.f32 %v2455, %v2455
      %v2758 = vmul.f32 %v2456, %v2456
      %v2759 = vmul.f32 %v2457, %v2457
      %v2760 = vmul.f32 %v2458, %v2458
      %v2761 = vmul.f32 %v2459, %v2459
      %v2762 = vmul.f32 %v2460, %v2460
      %v2763 = vmul.f32 %v2461, %v2461
      %v2764 = vadd.f32 %v2754, %v2755
      %v2765 = vadd.f32 %v2764, %v2756
      %v2766 = vadd.f32 %v2765, %v2757
      %v2767 = vadd.f32 %v2766, %v2758
      %v2768 = vadd.f32 %v2767, %v2759
      %v2769 = vadd.f32 %v2768, %v2760
      %v2770 = vadd.f32 %v2769, %v2761
      %v2771 = vadd.f32 %v2770, %v2762
      %v2772 = vadd.f32 %v2771, %v2763
      %v2773 = vrot.slane %v2772, 4
      %v2774 = vadd.f32 %v2772, %v2773
      %v2775 = vrot.slane %v2774, 2
      %v2776 = vadd.f32 %v2774, %v2775
      %v2777 = vrot.slane %v2776, 1
      %v2778 = vadd.f32 %v2776, %v2777
      %v2779 = vadd.f32 %v2601, %v2604
      %v2780 = vadd.f32 %v2779, %v2609
      %v2781 = vadd.f32 %v2780, %v2612
      %v2782 = vadd.f32 %v2781, %v2617
      %v2783 = vadd.f32 %v2782, %v2620
      %v2784 = vadd.f32 %v2783, %v2625
      %v2785 = vadd.f32 %v2784, %v2628
      %v2786 = vadd.f32 %v2785, %v2633
      %v2787 = vadd.f32 %v2786, %v2636
      %v2788 = vrot.slane %v2787, 4
      %v2789 = vadd.f32 %v2787, %v2788
      %v2790 = vrot.slane %v2789, 2
      %v2791 = vadd.f32 %v2789, %v2790
      %v2792 = vrot.slane %v2791, 1
      %v2793 = vadd.f32 %v2791, %v2792
      %v2794 = vmul.f32 %v2601, %v2601
      %v2795 = vmul.f32 %v2604, %v2604
      %v2796 = vmul.f32 %v2609, %v2609
      %v2797 = vmul.f32 %v2612, %v2612
      %v2798 = vmul.f32 %v2617, %v2617
      %v2799 = vmul.f32 %v2620, %v2620
      %v2800 = vmul.f32 %v2625, %v2625
      %v2801 = vmul.f32 %v2628, %v2628
      %v2802 = vmul.f32 %v2633, %v2633
      %v2803 = vmul.f32 %v2636, %v2636
      %v2804 = vadd.f32 %v2794, %v2795
      %v2805 = vadd.f32 %v2804, %v2796
      %v2806 = vadd.f32 %v2805, %v2797
      %v2807 = vadd.f32 %v2806, %v2798
      %v2808 = vadd.f32 %v2807, %v2799
      %v2809 = vadd.f32 %v2808, %v2800
      %v2810 = vadd.f32 %v2809, %v2801
      %v2811 = vadd.f32 %v2810, %v2802
      %v2812 = vadd.f32 %v2811, %v2803
      %v2813 = vrot.slane %v2812, 4
      %v2814 = vadd.f32 %v2812, %v2813
      %v2815 = vrot.slane %v2814, 2
      %v2816 = vadd.f32 %v2814, %v2815
      %v2817 = vrot.slane %v2816, 1
      %v2818 = vadd.f32 %v2816, %v2817
      %vm2819 = vcmask 1040384
      %v2820 = vsel %vm2819, %v2753, %v2778
      %vm2821 = vcmask 1041408
      %v2822 = vsel %vm2821, %v2820, %v2793
      %vm2823 = vcmask 1042432
      %v2824 = vsel %vm2823, %v2822, %v2818
      %vm2825 = vcmask 1043456
      %v2826 = vsel %vm2825, %v2824, 0.0
      %2827 = vst [vmem:[%s375] sm:$0xff] %v2826
      %p2828 = scmp.lt.s32.totalorder %s21, 1
      %s2829 = scalar_select %p2828, %s21, 1
      %s2830 = smul.addr %s2829, 10
      %s2831 = smul.addr %s2830, 4
      %s2832 = scalar_lea.vmem %s7, %s2831
      %p2833 = scmp.lt.s32.totalorder %s21, 1
      %s2834 = scalar_select %p2833, %s21, 1
      %s2835 = smul.addr %s2834, 10
      %s2836 = smul.addr %s2835, 4
      %s2837 = scalar_lea.vmem %s8, %s2836
      %p2838 = scmp.lt.s32.totalorder %s21, 1
      %s2839 = scalar_select %p2838, %s21, 1
      %s2840 = smul.addr %s2839, 8
      %s2841 = scalar_lea.vmem %s9, %s2840
      // Predicated region
      $region49: #{basic_block_forward.4} parent=47 // pred_check
        %p2842 = pneg %p196
      $region50: #{basic_block_forward.4} parent=47 // pred_check_branch
        %2844 = sbr.rel (%p2842) target = $region52
      $region51: #{basic_block_forward.4} parent=47 // pred_region
        _
      $region52: #{basic_block_forward.4} parent=47 // pred_fallthru
        _
      // Predicated region
      $region53: #{basic_block_forward.4} parent=47 // pred_check
        %p2845 = pneg %p222
      $region54: #{basic_block_forward.4} parent=47 // pred_check_branch
        %2847 = sbr.rel (%p2845) target = $region56
      $region55: #{basic_block_forward.4} parent=47 // pred_region
        _
      $region56: #{basic_block_forward.4} parent=47 // pred_fallthru
        _
      // Predicated region
      $region57: #{basic_block_forward.4} parent=47 // pred_check
        %p2848 = pneg %p248
      $region58: #{basic_block_forward.4} parent=47 // pred_check_branch
        %2850 = sbr.rel (%p2848) target = $region60
      $region59: #{basic_block_forward.4} parent=47 // pred_region
        _
      $region60: #{basic_block_forward.4} parent=47 // pred_fallthru
        _
    $region48: #{basic_block_forward.4} parent=5 // pred_fallthru
      _
    %p2851 = scmp.le.s32.totalorder 2, %s16
    // Predicated region
    $region61: #{basic_block_forward.4} parent=5 // pred_check
      %p2852 = pneg %p2851
    $region62: #{basic_block_forward.4} parent=5 // pred_check_branch
      %2854 = sbr.rel (%p2852) target = $region64
    $region63: #{basic_block_forward.4} parent=5 // pred_region
      %s2855 = ssub.s32 %s16, 2
      // Predicated region
      $region65: #{basic_block_forward.4} parent=63 // pred_check
        %p2856 = pneg %p202
      $region66: #{basic_block_forward.4} parent=63 // pred_check_branch
        %2858 = sbr.rel (%p2856) target = $region68
      $region67: #{basic_block_forward.4} parent=63 // pred_region
        %p2859 = scmp.lt.s32.totalorder %s22, 1
        %s2860 = scalar_select %p2859, %s22, 1
        %s2861 = smul.addr %s2860, 10
        %s2862 = smul.addr %s2861, 4
        %s2863 = scalar_lea.vmem %s7, %s2862
      $region68: #{basic_block_forward.4} parent=63 // pred_fallthru
        _
      // Predicated region
      $region69: #{basic_block_forward.4} parent=63 // pred_check
        %p2864 = pneg %p228
      $region70: #{basic_block_forward.4} parent=63 // pred_check_branch
        %2866 = sbr.rel (%p2864) target = $region72
      $region71: #{basic_block_forward.4} parent=63 // pred_region
        %p2867 = scmp.lt.s32.totalorder %s22, 1
        %s2868 = scalar_select %p2867, %s22, 1
        %s2869 = smul.addr %s2868, 10
        %s2870 = smul.addr %s2869, 4
        %s2871 = scalar_lea.vmem %s8, %s2870
      $region72: #{basic_block_forward.4} parent=63 // pred_fallthru
        _
      // Predicated region
      $region73: #{basic_block_forward.4} parent=63 // pred_check
        %p2872 = pneg %p254
      $region74: #{basic_block_forward.4} parent=63 // pred_check_branch
        %2874 = sbr.rel (%p2872) target = $region76
      $region75: #{basic_block_forward.4} parent=63 // pred_region
        %p2875 = scmp.lt.s32.totalorder %s22, 1
        %s2876 = scalar_select %p2875, %s22, 1
        %s2877 = smul.addr %s2876, 8
        %s2878 = scalar_lea.vmem %s9, %s2877
      $region76: #{basic_block_forward.4} parent=63 // pred_fallthru
        _
    $region64: #{basic_block_forward.4} parent=5 // pred_fallthru
      _
  $region6: #{basic_block_forward.4} parent=0 // loop_footer
    %s20 = sadd.s32 1, %s16
  $region7: #{basic_block_forward.4} parent=0 // loop_footer_branch
    %15 = sbr.rel target = $region3
  $region8: #{basic_block_forward.4} parent=0 // loop_exit
    _

</llo_original>
